<compile_context>
chip_gen: v6e
topology: v6e:2x2x1
jax: 0.10.0
libtpu: 0.0.40
codegen_flags: <defaults>
</compile_context>

<pallas_src>
import jax
import jax.numpy as jnp
from jax.experimental import pallas as pl
from jax.experimental.pallas import tpu as pltpu

LATENT_DIM = 100   # input_dim (latent_dim in the reference script)
OUTPUT_DIM = 784   # MNIST generator output (28*28)
HIDDEN = (256, 512, 1024)

LANE = 128


def _round_up(x, m):
    return ((x + m - 1) // m) * m


def _cdiv(a, b):
    return -(-a // b)


# --------------------------------------------------------------------------
# Kernel
# --------------------------------------------------------------------------
def generator_kernel(x_ref,
                     w1_ref, b1_ref,
                     w2_ref, b2_ref,
                     w3_ref, b3_ref,
                     w4_ref, b4_ref,
                     o_ref):
    def layer(h_bf16, w_ref, b_ref):
        # bf16 MXU matmul with f32 accumulation; bias-add in f32.
        acc = jnp.dot(h_bf16, w_ref[...], preferred_element_type=jnp.float32)
        return acc + b_ref[...]

    def leaky_relu(h_f32):
        # nn.LeakyReLU(0.2), computed in f32 before the bf16 recast.
        return jnp.where(h_f32 > 0, h_f32, 0.2 * h_f32)

    h = layer(x_ref[...], w1_ref, b1_ref)
    h = leaky_relu(h).astype(jnp.bfloat16)
    h = layer(h, w2_ref, b2_ref)
    h = leaky_relu(h).astype(jnp.bfloat16)
    h = layer(h, w3_ref, b3_ref)
    h = leaky_relu(h).astype(jnp.bfloat16)
    h = layer(h, w4_ref, b4_ref)
    o_ref[...] = jnp.tanh(h).astype(o_ref.dtype)   # Tanh epilogue in f32


# --------------------------------------------------------------------------
# One-time parameter preparation (hoisted out of the forward pass)
# --------------------------------------------------------------------------
def prepare_params(params):
    """Cast weights to bf16, biases to f32, zero-pad w1's K dim to a lane
    multiple.  Call ONCE (or whenever the weights change) and reuse the result
    across forward calls — this keeps the per-call HBM traffic down to the
    kernel's own reads/writes."""
    (w1, b1), (w2, b2), (w3, b3), (w4, b4) = params
    in_dim = w1.shape[0]
    k_pad = _round_up(in_dim, LANE)      # 100 -> 128, zero rows are math-neutral

    w1p = jnp.zeros((k_pad, w1.shape[1]), jnp.bfloat16)
    w1p = w1p.at[:in_dim, :].set(w1.astype(jnp.bfloat16))

    return (
        w1p, b1.astype(jnp.float32),
        w2.astype(jnp.bfloat16), b2.astype(jnp.float32),
        w3.astype(jnp.bfloat16), b3.astype(jnp.float32),
        w4.astype(jnp.bfloat16), b4.astype(jnp.float32),
    )


# --------------------------------------------------------------------------
# Batch-tile heuristic (per TPU generation)
# --------------------------------------------------------------------------
def _pick_batch_tile(batch):
    try:
        kind = jax.devices()[0].device_kind.lower()
    except Exception:
        kind = ""

    is_v7 = ("v7" in kind) or ("7x" in kind)
    if "v5" in kind:
        tb_max = 128                       # 4x128^2 MXU: M=128 already fills it
    elif "v6" in kind:
        tb_max = 512 if batch >= 1024 else 256
    else:                                  # v7x or unknown
        tb_max = 256

    # v7x has 2 TensorCores per chip: make sure the "parallel" batch axis has
    # at least 2 grid steps once there is enough work to amortize the per-TC
    # weight fetch.
    min_blocks = 2 if (is_v7 and batch >= 64) else 1

    n_blocks = max(min_blocks, _cdiv(batch, tb_max))
    # Multiple of 16 (bf16 packs 16 rows per sublane) and sized so padding
    # waste stays below one 16-row sliver per block.
    tb = max(16, _round_up(_cdiv(batch, n_blocks), 16))
    return tb


# --------------------------------------------------------------------------
# Forward pass
# --------------------------------------------------------------------------
def generator_forward(x, prepped, out_dtype=jnp.float32):
    """x: (batch, input_dim) f32.  prepped: output of prepare_params."""
    w1p, b1f, w2b, b2f, w3b, b3f, w4b, b4f = prepped
    batch, in_dim = x.shape
    k_pad = w1p.shape[0]
    out_dim = w4b.shape[1]

    tb = _pick_batch_tile(batch)
    b_pad = _round_up(batch, tb)
    n_blocks = b_pad // tb

    # Only per-call prep left: cast/pad the (small) latent input to bf16.
    xp = jnp.zeros((b_pad, k_pad), jnp.bfloat16)
    xp = xp.at[:batch, :in_dim].set(x.astype(jnp.bfloat16))

    const = lambda i: (0, 0)   # weights/biases: VMEM-resident across batch tiles

    # Advisory cost hint so XLA schedules neighbours around the custom call.
    h1, h2, h3 = HIDDEN
    flops = 2 * b_pad * (k_pad * h1 + h1 * h2 + h2 * h3 + h3 * out_dim)
    weight_bytes = sum(int(a.size) * a.dtype.itemsize
                       for a in (w1p, b1f, w2b, b2f, w3b, b3f, w4b, b4f))
    bytes_accessed = (weight_bytes
                      + int(xp.size) * 2
                      + b_pad * out_dim * jnp.dtype(out_dtype).itemsize)
    cost = pl.CostEstimate(flops=flops,
                           transcendentals=b_pad * out_dim,
                           bytes_accessed=int(bytes_accessed))

    out = pl.pallas_call(
        generator_kernel,
        out_shape=jax.ShapeDtypeStruct((b_pad, out_dim), out_dtype),
        grid_spec=pltpu.PrefetchScalarGridSpec(
            num_scalar_prefetch=0,
            grid=(n_blocks,),
            in_specs=[
                pl.BlockSpec((tb, k_pad), lambda i: (i, 0)),   # x tile
                pl.BlockSpec(w1p.shape, const), pl.BlockSpec(b1f.shape, const),
                pl.BlockSpec(w2b.shape, const), pl.BlockSpec(b2f.shape, const),
                pl.BlockSpec(w3b.shape, const), pl.BlockSpec(b3f.shape, const),
                pl.BlockSpec(w4b.shape, const), pl.BlockSpec(b4f.shape, const),
            ],
            # Full 784-wide last dim (== array dim): kernel stores the final
            # layout directly, no padded columns to re-slice afterwards.
            out_specs=pl.BlockSpec((tb, out_dim), lambda i: (i, 0)),
        ),
        compiler_params=pltpu.CompilerParams(
            dimension_semantics=("parallel",),   # v7x: 2 TCs split the batch
            vmem_limit_bytes=32 << 20,           # footprint ~6-10 MiB; safe on v7x
        ),
        cost_estimate=cost,
    )(xp, w1p, b1f, w2b, b2f, w3b, b3f, w4b, b4f)

    if b_pad != batch:
        out = out[:batch]   # contiguous row slice only (padded rows are garbage)
    return out


# --------------------------------------------------------------------------
# Init + references
# --------------------------------------------------------------------------
def init_params(key, input_dim, output_dim):
    """Deterministic PyTorch-style init: U(-1/sqrt(fan_in), 1/sqrt(fan_in))."""
    dims = [input_dim, *HIDDEN, output_dim]
    params = []
    for i in range(len(dims) - 1):
        fan_in, fan_out = dims[i], dims[i + 1]
        key, kw, kb = jax.random.split(key, 3)
        bound = 1.0 / jnp.sqrt(jnp.float32(fan_in))
        w = jax.random.uniform(kw, (fan_in, fan_out), jnp.float32, -bound, bound)
        b = jax.random.uniform(kb, (1, fan_out), jnp.float32, -bound, bound)
        params.append((w, b))
    return params


def generator_ref(x, params):
    """Pure-JAX reference using the same bf16 weight/activation casts + f32 accum."""
    h = x.astype(jnp.bfloat16)
    for i, (w, b) in enumerate(params):
        acc = jnp.dot(h, w.astype(jnp.bfloat16),
                      preferred_element_type=jnp.float32) + b.astype(jnp.float32)
        if i < len(params) - 1:
            h = jnp.where(acc > 0, acc, 0.2 * acc).astype(jnp.bfloat16)
        else:
            h = jnp.tanh(acc)
    return h


if __name__ == "__main__":
    key = jax.random.PRNGKey(0)
    key, k_params, k_x = jax.random.split(key, 3)

    params = init_params(k_params, LATENT_DIM, OUTPUT_DIM)
    prepped = prepare_params(params)          # one-time cast/pad, reused per call

    # self.input_activation: latent noise, small batch
    batch = 8
    x = jax.random.normal(k_x, (batch, LATENT_DIM), jnp.float32)

    out = generator_forward(x, prepped)
    out = jax.block_until_ready(out)

    ref = generator_ref(x, params)
    assert out.shape == (batch, OUTPUT_DIM)
    assert jnp.allclose(out, ref, atol=2e-2, rtol=2e-2), "mismatch vs reference"

    # sanity: fp32 reference should also be close (bf16 weight rounding only)
    fp32_ref = x
    for i, (w, b) in enumerate(params):
        fp32_ref = fp32_ref @ w + b
        fp32_ref = (jnp.where(fp32_ref > 0, fp32_ref, 0.2 * fp32_ref)
                    if i < len(params) - 1 else jnp.tanh(fp32_ref))
    assert jnp.max(jnp.abs(out - fp32_ref)) < 5e-2

    print("KERNEL_OK")
</pallas_src>

<mosaic_0001>
module attributes {stable_mosaic.version = 11 : i64} {
  func.func @generator_kernel(%arg0: i32, %arg1: memref<16x128xbf16, #tpu.memory_space<vmem>>, %arg2: memref<128x256xbf16, #tpu.memory_space<vmem>>, %arg3: memref<1x256xf32, #tpu.memory_space<vmem>>, %arg4: memref<256x512xbf16, #tpu.memory_space<vmem>>, %arg5: memref<1x512xf32, #tpu.memory_space<vmem>>, %arg6: memref<512x1024xbf16, #tpu.memory_space<vmem>>, %arg7: memref<1x1024xf32, #tpu.memory_space<vmem>>, %arg8: memref<1024x784xbf16, #tpu.memory_space<vmem>>, %arg9: memref<1x784xf32, #tpu.memory_space<vmem>>, %arg10: memref<16x784xf32, #tpu.memory_space<vmem>>) attributes {dimension_semantics = [#tpu.dimension_semantics<parallel>], iteration_bounds = array<i64: 1>, scalar_prefetch = 0 : i64, scratch_operands = 0 : i64, tpu.core_type = #tpu.core_type<tc>, window_params = [{transform_indices = @transform_0, window_bounds = array<i64: 16, 128>}, {pipeline_mode = #tpu.pipeline_mode<synchronous>, transform_indices = @transform_1, window_bounds = array<i64: 128, 256>}, {pipeline_mode = #tpu.pipeline_mode<synchronous>, transform_indices = @transform_2, window_bounds = array<i64: 1, 256>}, {pipeline_mode = #tpu.pipeline_mode<synchronous>, transform_indices = @transform_3, window_bounds = array<i64: 256, 512>}, {pipeline_mode = #tpu.pipeline_mode<synchronous>, transform_indices = @transform_4, window_bounds = array<i64: 1, 512>}, {pipeline_mode = #tpu.pipeline_mode<synchronous>, transform_indices = @transform_5, window_bounds = array<i64: 512, 1024>}, {pipeline_mode = #tpu.pipeline_mode<synchronous>, transform_indices = @transform_6, window_bounds = array<i64: 1, 1024>}, {pipeline_mode = #tpu.pipeline_mode<synchronous>, transform_indices = @transform_7, window_bounds = array<i64: 1024, 784>}, {pipeline_mode = #tpu.pipeline_mode<synchronous>, transform_indices = @transform_8, window_bounds = array<i64: 1, 784>}, {transform_indices = @transform_9, window_bounds = array<i64: 16, 784>}]} {
    %c0 = arith.constant 0 : index
    %c0_0 = arith.constant 0 : index
    %0 = vector.load %arg1[%c0, %c0_0] : memref<16x128xbf16, #tpu.memory_space<vmem>>, vector<16x128xbf16>
    %c0_1 = arith.constant 0 : index
    %c0_2 = arith.constant 0 : index
    %1 = vector.load %arg2[%c0_1, %c0_2] : memref<128x256xbf16, #tpu.memory_space<vmem>>, vector<128x256xbf16>
    %cst = arith.constant dense<0.000000e+00> : vector<16x256xf32>
    %2 = tpu.matmul %0, %1, %cst {dimension_numbers = #tpu.dot_dimension_numbers<[1], [0], [0], [1], [0, 0, 1, 1], [], []>} : vector<16x128xbf16>, vector<128x256xbf16>, vector<16x256xf32> -> vector<16x256xf32>
    %c0_3 = arith.constant 0 : index
    %c0_4 = arith.constant 0 : index
    %3 = vector.load %arg3[%c0_3, %c0_4] : memref<1x256xf32, #tpu.memory_space<vmem>>, vector<1x256xf32>
    %4 = vector.broadcast %3 : vector<1x256xf32> to vector<16x256xf32>
    %5 = arith.addf %2, %4 : vector<16x256xf32>
    %cst_5 = arith.constant 0.000000e+00 : f32
    %6 = vector.broadcast %cst_5 : f32 to vector<16x256xf32>
    %7 = arith.cmpf ogt, %5, %6 : vector<16x256xf32>
    %cst_6 = arith.constant 2.000000e-01 : f32
    %8 = vector.broadcast %cst_6 : f32 to vector<16x256xf32>
    %9 = arith.mulf %8, %5 : vector<16x256xf32>
    %10 = arith.select %7, %5, %9 : vector<16x256xi1>, vector<16x256xf32>
    %11 = arith.truncf %10 : vector<16x256xf32> to vector<16x256xbf16>
    %c0_7 = arith.constant 0 : index
    %c0_8 = arith.constant 0 : index
    %12 = vector.load %arg4[%c0_7, %c0_8] : memref<256x512xbf16, #tpu.memory_space<vmem>>, vector<256x512xbf16>
    %cst_9 = arith.constant dense<0.000000e+00> : vector<16x512xf32>
    %13 = tpu.matmul %11, %12, %cst_9 {dimension_numbers = #tpu.dot_dimension_numbers<[1], [0], [0], [1], [0, 0, 1, 1], [], []>} : vector<16x256xbf16>, vector<256x512xbf16>, vector<16x512xf32> -> vector<16x512xf32>
    %c0_10 = arith.constant 0 : index
    %c0_11 = arith.constant 0 : index
    %14 = vector.load %arg5[%c0_10, %c0_11] : memref<1x512xf32, #tpu.memory_space<vmem>>, vector<1x512xf32>
    %15 = vector.broadcast %14 : vector<1x512xf32> to vector<16x512xf32>
    %16 = arith.addf %13, %15 : vector<16x512xf32>
    %cst_12 = arith.constant 0.000000e+00 : f32
    %17 = vector.broadcast %cst_12 : f32 to vector<16x512xf32>
    %18 = arith.cmpf ogt, %16, %17 : vector<16x512xf32>
    %cst_13 = arith.constant 2.000000e-01 : f32
    %19 = vector.broadcast %cst_13 : f32 to vector<16x512xf32>
    %20 = arith.mulf %19, %16 : vector<16x512xf32>
    %21 = arith.select %18, %16, %20 : vector<16x512xi1>, vector<16x512xf32>
    %22 = arith.truncf %21 : vector<16x512xf32> to vector<16x512xbf16>
    %c0_14 = arith.constant 0 : index
    %c0_15 = arith.constant 0 : index
    %23 = vector.load %arg6[%c0_14, %c0_15] : memref<512x1024xbf16, #tpu.memory_space<vmem>>, vector<512x1024xbf16>
    %cst_16 = arith.constant dense<0.000000e+00> : vector<16x1024xf32>
    %24 = tpu.matmul %22, %23, %cst_16 {dimension_numbers = #tpu.dot_dimension_numbers<[1], [0], [0], [1], [0, 0, 1, 1], [], []>} : vector<16x512xbf16>, vector<512x1024xbf16>, vector<16x1024xf32> -> vector<16x1024xf32>
    %c0_17 = arith.constant 0 : index
    %c0_18 = arith.constant 0 : index
    %25 = vector.load %arg7[%c0_17, %c0_18] : memref<1x1024xf32, #tpu.memory_space<vmem>>, vector<1x1024xf32>
    %26 = vector.broadcast %25 : vector<1x1024xf32> to vector<16x1024xf32>
    %27 = arith.addf %24, %26 : vector<16x1024xf32>
    %cst_19 = arith.constant 0.000000e+00 : f32
    %28 = vector.broadcast %cst_19 : f32 to vector<16x1024xf32>
    %29 = arith.cmpf ogt, %27, %28 : vector<16x1024xf32>
    %cst_20 = arith.constant 2.000000e-01 : f32
    %30 = vector.broadcast %cst_20 : f32 to vector<16x1024xf32>
    %31 = arith.mulf %30, %27 : vector<16x1024xf32>
    %32 = arith.select %29, %27, %31 : vector<16x1024xi1>, vector<16x1024xf32>
    %33 = arith.truncf %32 : vector<16x1024xf32> to vector<16x1024xbf16>
    %c0_21 = arith.constant 0 : index
    %c0_22 = arith.constant 0 : index
    %34 = vector.load %arg8[%c0_21, %c0_22] : memref<1024x784xbf16, #tpu.memory_space<vmem>>, vector<1024x784xbf16>
    %cst_23 = arith.constant dense<0.000000e+00> : vector<16x784xf32>
    %35 = tpu.matmul %33, %34, %cst_23 {dimension_numbers = #tpu.dot_dimension_numbers<[1], [0], [0], [1], [0, 0, 1, 1], [], []>} : vector<16x1024xbf16>, vector<1024x784xbf16>, vector<16x784xf32> -> vector<16x784xf32>
    %c0_24 = arith.constant 0 : index
    %c0_25 = arith.constant 0 : index
    %36 = vector.load %arg9[%c0_24, %c0_25] : memref<1x784xf32, #tpu.memory_space<vmem>>, vector<1x784xf32>
    %37 = vector.broadcast %36 : vector<1x784xf32> to vector<16x784xf32>
    %38 = arith.addf %35, %37 : vector<16x784xf32>
    %39 = math.tanh %38 : vector<16x784xf32>
    %c0_26 = arith.constant 0 : index
    %c0_27 = arith.constant 0 : index
    %40 = vector.load %arg10[%c0_26, %c0_27] : memref<16x784xf32, #tpu.memory_space<vmem>>, vector<16x784xf32>
    tpu.vector_store %arg10[%c0_26, %c0_27], %39 {strides = array<i32>} : memref<16x784xf32, #tpu.memory_space<vmem>>, vector<16x784xf32>,
    return
  }
  func.func @transform_0(%arg0: i32) -> (i32, i32) {
    %c0_i32 = arith.constant 0 : i32
    %c0_i32_0 = arith.constant 0 : i32
    return %arg0, %c0_i32 : i32, i32
  }
  func.func @transform_1(%arg0: i32) -> (i32, i32) {
    %c0_i32 = arith.constant 0 : i32
    %c0_i32_0 = arith.constant 0 : i32
    %c0_i32_1 = arith.constant 0 : i32
    return %c0_i32, %c0_i32_0 : i32, i32
  }
  func.func @transform_2(%arg0: i32) -> (i32, i32) {
    %c0_i32 = arith.constant 0 : i32
    %c0_i32_0 = arith.constant 0 : i32
    %c0_i32_1 = arith.constant 0 : i32
    return %c0_i32, %c0_i32_0 : i32, i32
  }
  func.func @transform_3(%arg0: i32) -> (i32, i32) {
    %c0_i32 = arith.constant 0 : i32
    %c0_i32_0 = arith.constant 0 : i32
    %c0_i32_1 = arith.constant 0 : i32
    return %c0_i32, %c0_i32_0 : i32, i32
  }
  func.func @transform_4(%arg0: i32) -> (i32, i32) {
    %c0_i32 = arith.constant 0 : i32
    %c0_i32_0 = arith.constant 0 : i32
    %c0_i32_1 = arith.constant 0 : i32
    return %c0_i32, %c0_i32_0 : i32, i32
  }
  func.func @transform_5(%arg0: i32) -> (i32, i32) {
    %c0_i32 = arith.constant 0 : i32
    %c0_i32_0 = arith.constant 0 : i32
    %c0_i32_1 = arith.constant 0 : i32
    return %c0_i32, %c0_i32_0 : i32, i32
  }
  func.func @transform_6(%arg0: i32) -> (i32, i32) {
    %c0_i32 = arith.constant 0 : i32
    %c0_i32_0 = arith.constant 0 : i32
    %c0_i32_1 = arith.constant 0 : i32
    return %c0_i32, %c0_i32_0 : i32, i32
  }
  func.func @transform_7(%arg0: i32) -> (i32, i32) {
    %c0_i32 = arith.constant 0 : i32
    %c0_i32_0 = arith.constant 0 : i32
    %c0_i32_1 = arith.constant 0 : i32
    return %c0_i32, %c0_i32_0 : i32, i32
  }
  func.func @transform_8(%arg0: i32) -> (i32, i32) {
    %c0_i32 = arith.constant 0 : i32
    %c0_i32_0 = arith.constant 0 : i32
    %c0_i32_1 = arith.constant 0 : i32
    return %c0_i32, %c0_i32_0 : i32, i32
  }
  func.func @transform_9(%arg0: i32) -> (i32, i32) {
    %c0_i32 = arith.constant 0 : i32
    %c0_i32_0 = arith.constant 0 : i32
    return %arg0, %c0_i32 : i32, i32
  }
}

</mosaic_0001>

<llo_original>
// kernel: tpu_custom_call.1
$region0: #{tpu_custom_call.1}
  #allocation0 [shape = 'u32[]', space=smem, size = 0x4, offset = 0x4, fixed_abs, tag = 'smem constant byte address 0x4 - core index']
  #allocation1 [shape = 'u32[144,128]{1,0:T(1,128)}', space=vmem, size = 0x12000, scoped, tag = 'internal scratch']
  %s0 = inlined_call_operand.vmem [shape: bf16[16,128], index: 0, kind: input, shape index: {}]
  %s1 = inlined_call_operand.vmem [shape: bf16[128,256], index: 1, kind: input, shape index: {}]
  %s2 = inlined_call_operand.vmem [shape: f32[1,256], index: 2, kind: input, shape index: {}]
  %s3 = inlined_call_operand.vmem [shape: bf16[256,512], index: 3, kind: input, shape index: {}]
  %s4 = inlined_call_operand.vmem [shape: f32[1,512], index: 4, kind: input, shape index: {}]
  %s5 = inlined_call_operand.vmem [shape: bf16[512,1024], index: 5, kind: input, shape index: {}]
  %s6 = inlined_call_operand.vmem [shape: f32[1,1024], index: 6, kind: input, shape index: {}]
  %s7 = inlined_call_operand.vmem [shape: bf16[1024,784], index: 7, kind: input, shape index: {}]
  %s8 = inlined_call_operand.vmem [shape: f32[1,784], index: 8, kind: input, shape index: {}]
  %s9 = inlined_call_operand.hbm [shape: f32[16,784], index: 9, kind: output, shape index: {}]
  %s10 = sld [smem:[#allocation0]]
  $region46: #{tpu_custom_call.1} parent=0
    _
  %s12 = ssub.s32 1, %s10
  %s13 = scalar_select 0, %s12, %s10
  $region1: #{tpu_custom_call.1} parent=0
    #allocation2 [shape = 'u8[57344]{0}', space=vmem, size = 0xe000, scoped, tag = 'output window, operand 0, single buffered']
    #allocation3 [shape = 's32[1]{0}', space=sflag, size = 0x4, scoped, tag = 'scoped memory for tpu_custom_call.1']
    %14 = vsyncpa [#allocation3], 0
    // Predicated region
    $region2: #{tpu_custom_call.1} parent=1 // pred_check
      _
    $region3: #{tpu_custom_call.1} parent=1 // pred_check_branch
      %16 = sbr.rel (0) target = $region5
    $region4: #{tpu_custom_call.1} parent=1 // pred_region
      _
    $region5: #{tpu_custom_call.1} parent=1 // pred_fallthru
      _
    // Predicated region
    $region6: #{tpu_custom_call.1} parent=1 // pred_check
      _
    $region7: #{tpu_custom_call.1} parent=1 // pred_check_branch
      %18 = sbr.rel (0) target = $region9
    $region8: #{tpu_custom_call.1} parent=1 // pred_region
      _
    $region9: #{tpu_custom_call.1} parent=1 // pred_fallthru
      _
    // Predicated region
    $region10: #{tpu_custom_call.1} parent=1 // pred_check
      _
    $region11: #{tpu_custom_call.1} parent=1 // pred_check_branch
      %20 = sbr.rel (0) target = $region13
    $region12: #{tpu_custom_call.1} parent=1 // pred_region
      _
    $region13: #{tpu_custom_call.1} parent=1 // pred_fallthru
      _
    // Predicated region
    $region14: #{tpu_custom_call.1} parent=1 // pred_check
      _
    $region15: #{tpu_custom_call.1} parent=1 // pred_check_branch
      %22 = sbr.rel (0) target = $region17
    $region16: #{tpu_custom_call.1} parent=1 // pred_region
      _
    $region17: #{tpu_custom_call.1} parent=1 // pred_fallthru
      _
    // Predicated region
    $region18: #{tpu_custom_call.1} parent=1 // pred_check
      _
    $region19: #{tpu_custom_call.1} parent=1 // pred_check_branch
      %24 = sbr.rel (0) target = $region21
    $region20: #{tpu_custom_call.1} parent=1 // pred_region
      _
    $region21: #{tpu_custom_call.1} parent=1 // pred_fallthru
      _
    // Predicated region
    $region22: #{tpu_custom_call.1} parent=1 // pred_check
      _
    $region23: #{tpu_custom_call.1} parent=1 // pred_check_branch
      %26 = sbr.rel (0) target = $region25
    $region24: #{tpu_custom_call.1} parent=1 // pred_region
      _
    $region25: #{tpu_custom_call.1} parent=1 // pred_fallthru
      _
    // Predicated region
    $region26: #{tpu_custom_call.1} parent=1 // pred_check
      _
    $region27: #{tpu_custom_call.1} parent=1 // pred_check_branch
      %28 = sbr.rel (0) target = $region29
    $region28: #{tpu_custom_call.1} parent=1 // pred_region
      _
    $region29: #{tpu_custom_call.1} parent=1 // pred_fallthru
      _
    // Predicated region
    $region30: #{tpu_custom_call.1} parent=1 // pred_check
      _
    $region31: #{tpu_custom_call.1} parent=1 // pred_check_branch
      %30 = sbr.rel (0) target = $region33
    $region32: #{tpu_custom_call.1} parent=1 // pred_region
      _
    $region33: #{tpu_custom_call.1} parent=1 // pred_fallthru
      _
    // Predicated region
    $region34: #{tpu_custom_call.1} parent=1 // pred_check
      _
    $region35: #{tpu_custom_call.1} parent=1 // pred_check_branch
      %32 = sbr.rel (0) target = $region37
    $region36: #{tpu_custom_call.1} parent=1 // pred_region
      _
    $region37: #{tpu_custom_call.1} parent=1 // pred_fallthru
      _
    %v34 = vld [vmem:[%s0] sm:$0xf]
    %v35 = vld [vmem:[%s0 + $0x4] sm:$0xf]
    %v36 = vld [vmem:[%s1] sm:$0xff]
    %v37 = vld [vmem:[%s1 + $0x8] sm:$0xff]
    %v38 = vld [vmem:[%s1 + $0x10] sm:$0xff]
    %v39 = vld [vmem:[%s1 + $0x18] sm:$0xff]
    %v40 = vld [vmem:[%s1 + $0x20] sm:$0xff]
    %v41 = vld [vmem:[%s1 + $0x28] sm:$0xff]
    %v42 = vld [vmem:[%s1 + $0x30] sm:$0xff]
    %v43 = vld [vmem:[%s1 + $0x38] sm:$0xff]
    %v44 = vld [vmem:[%s1 + $0x40] sm:$0xff]
    %v45 = vld [vmem:[%s1 + $0x48] sm:$0xff]
    %v46 = vld [vmem:[%s1 + $0x50] sm:$0xff]
    %v47 = vld [vmem:[%s1 + $0x58] sm:$0xff]
    %v48 = vld [vmem:[%s1 + $0x60] sm:$0xff]
    %v49 = vld [vmem:[%s1 + $0x68] sm:$0xff]
    %v50 = vld [vmem:[%s1 + $0x70] sm:$0xff]
    %v51 = vld [vmem:[%s1 + $0x78] sm:$0xff]
    %v52 = vld [vmem:[%s2] sm:$0x3]
    %v54 = vlaneseq
    %v55 = vshrl.u32 %v54, 7
    %v56 = vsub.s32 0, %v55
    %v57 = vrot.slane %v52, %v56
    %v58 = vlaneseq
    %v59 = vshrl.u32 %v58, 7
    %v60 = vsub.s32 1, %v59
    %v61 = vrot.slane %v52, %v60
    %v66 = vunpack.c.l.b16 %v34
    %v67 = vunpack.c.l.b16 %v35
    %v68 = vpack.c.b16 %v67, %v66
    %v86 = vunpack.c.l.b16 %v36
    %v87 = vunpack.c.h.b16 %v36
    %v88 = vunpack.c.l.b16 %v37
    %v89 = vunpack.c.h.b16 %v37
    %v90 = vunpack.c.l.b16 %v38
    %v91 = vunpack.c.h.b16 %v38
    %v92 = vunpack.c.l.b16 %v39
    %v93 = vunpack.c.h.b16 %v39
    %v94 = vunpack.c.l.b16 %v40
    %v95 = vunpack.c.h.b16 %v40
    %v96 = vunpack.c.l.b16 %v41
    %v97 = vunpack.c.h.b16 %v41
    %v98 = vunpack.c.l.b16 %v42
    %v99 = vunpack.c.h.b16 %v42
    %v100 = vunpack.c.l.b16 %v43
    %v101 = vunpack.c.h.b16 %v43
    %v102 = vunpack.c.l.b16 %v44
    %v103 = vunpack.c.h.b16 %v44
    %v104 = vunpack.c.l.b16 %v45
    %v105 = vunpack.c.h.b16 %v45
    %v106 = vunpack.c.l.b16 %v46
    %v107 = vunpack.c.h.b16 %v46
    %v108 = vunpack.c.l.b16 %v47
    %v109 = vunpack.c.h.b16 %v47
    %v110 = vunpack.c.l.b16 %v48
    %v111 = vunpack.c.h.b16 %v48
    %v112 = vunpack.c.l.b16 %v49
    %v113 = vunpack.c.h.b16 %v49
    %v114 = vunpack.c.l.b16 %v50
    %v115 = vunpack.c.h.b16 %v50
    %v116 = vunpack.c.l.b16 %v51
    %v117 = vunpack.c.h.b16 %v51
    %v118 = vpack.c.b16 %v88, %v86
    %v119 = vpack.c.b16 %v89, %v87
    %v120 = vpack.c.b16 %v92, %v90
    %v121 = vpack.c.b16 %v93, %v91
    %v122 = vpack.c.b16 %v96, %v94
    %v123 = vpack.c.b16 %v97, %v95
    %v124 = vpack.c.b16 %v100, %v98
    %v125 = vpack.c.b16 %v101, %v99
    %v126 = vpack.c.b16 %v104, %v102
    %v127 = vpack.c.b16 %v105, %v103
    %v128 = vpack.c.b16 %v108, %v106
    %v129 = vpack.c.b16 %v109, %v107
    %v130 = vpack.c.b16 %v112, %v110
    %v131 = vpack.c.b16 %v113, %v111
    %v132 = vpack.c.b16 %v116, %v114
    %v133 = vpack.c.b16 %v117, %v115
    %150 = vmatprep.subr.bf16.mxu0 %v133
    %151 = vmatpush1.bf16.msra.mxu0 %v132
    %152 = vmatprep.subr.bf16.mxu0 %v131
    %153 = vmatpush1.bf16.msra.mxu0 %v130
    %154 = vmatprep.subr.bf16.mxu0 %v129
    %155 = vmatpush1.bf16.msra.mxu0 %v128
    %156 = vmatprep.subr.bf16.mxu0 %v127
    %157 = vmatpush1.bf16.msra.mxu0 %v126
    %158 = vmatprep.subr.bf16.mxu0 %v125
    %159 = vmatpush1.bf16.msra.mxu0 %v124
    %160 = vmatprep.subr.bf16.mxu0 %v123
    %161 = vmatpush1.bf16.msra.mxu0 %v122
    %162 = vmatprep.subr.bf16.mxu0 %v121
    %163 = vmatpush1.bf16.msra.mxu0 %v120
    %164 = vmatprep.subr.bf16.mxu0 %v119
    %165 = vmatpush1.bf16.msra.mxu0 %v118
    %166 = vmatprep.subr.bf16.mxu0 0
    %167 = vmatpush2.bf16.msra.mxu0 0
    %168 = vmatprep.subr.bf16.mxu0 0
    %169 = vmatpush2.bf16.msra.mxu0 0
    %170 = vmatprep.subr.bf16.mxu0 0
    %171 = vmatpush2.bf16.msra.mxu0 0
    %172 = vmatprep.subr.bf16.mxu0 0
    %173 = vmatpush2.bf16.msra.mxu0 0
    %174 = vmatprep.subr.bf16.mxu0 0
    %175 = vmatpush2.bf16.msra.mxu0 0
    %176 = vmatprep.subr.bf16.mxu0 0
    %177 = vmatpush2.bf16.msra.mxu0 0
    %178 = vmatprep.subr.bf16.mxu0 0
    %179 = vmatpush2.bf16.msra.mxu0 0
    %180 = vmatprep.subr.bf16.mxu0 0
    %181 = vmatpush2.bf16.msra.mxu0 0
    %182 = vmatprep.mubr.bf16.mxu0 0
    %183 = vmatmul.mubr.bf16.gmra.mxu0 %v68
    %v184 = vpop.f32.mrf.mxu0
    %v185 = vadd.f32 %v57, %v184
    %v186 = vpop.f32.mrf.mxu0
    %v187 = vadd.f32 %v61, %v186
    %v188 = vpop.f32.mrf.mxu0
    %v189 = vadd.f32 %v57, %v188
    %v190 = vpop.f32.mrf.mxu0
    %v191 = vadd.f32 %v61, %v190
    %192 = vdwg.mxu0
    %vm193 = vcmp.gt.f32.partialorder %v185, 0.0
    %vm194 = vcmp.gt.f32.partialorder %v187, 0.0
    %vm195 = vcmp.gt.f32.partialorder %v189, 0.0
    %vm196 = vcmp.gt.f32.partialorder %v191, 0.0
    %v197 = vmul.f32 %v185, 0.2
    %v198 = vmul.f32 %v187, 0.2
    %v199 = vmul.f32 %v189, 0.2
    %v200 = vmul.f32 %v191, 0.2
    %v201 = vsel %vm193, %v185, %v197
    %v202 = vsel %vm194, %v187, %v198
    %v203 = vsel %vm195, %v189, %v199
    %v204 = vsel %vm196, %v191, %v200
    %v205 = vpack.c.bf16 %v203, %v201
    %v206 = vpack.c.bf16 %v204, %v202
    %v207 = vld [vmem:[%s3] sm:$0xff]
    %v208 = vld [vmem:[%s3 + $0x8] sm:$0xff]
    %v209 = vld [vmem:[%s3 + $0x10] sm:$0xff]
    %v210 = vld [vmem:[%s3 + $0x18] sm:$0xff]
    %v211 = vld [vmem:[%s3 + $0x20] sm:$0xff]
    %v212 = vld [vmem:[%s3 + $0x28] sm:$0xff]
    %v213 = vld [vmem:[%s3 + $0x30] sm:$0xff]
    %v214 = vld [vmem:[%s3 + $0x38] sm:$0xff]
    %v215 = vld [vmem:[%s3 + $0x40] sm:$0xff]
    %v216 = vld [vmem:[%s3 + $0x48] sm:$0xff]
    %v217 = vld [vmem:[%s3 + $0x50] sm:$0xff]
    %v218 = vld [vmem:[%s3 + $0x58] sm:$0xff]
    %v219 = vld [vmem:[%s3 + $0x60] sm:$0xff]
    %v220 = vld [vmem:[%s3 + $0x68] sm:$0xff]
    %v221 = vld [vmem:[%s3 + $0x70] sm:$0xff]
    %v222 = vld [vmem:[%s3 + $0x78] sm:$0xff]
    %v223 = vld [vmem:[%s3 + $0x80] sm:$0xff]
    %v224 = vld [vmem:[%s3 + $0x88] sm:$0xff]
    %v225 = vld [vmem:[%s3 + $0x90] sm:$0xff]
    %v226 = vld [vmem:[%s3 + $0x98] sm:$0xff]
    %v227 = vld [vmem:[%s3 + $0xa0] sm:$0xff]
    %v228 = vld [vmem:[%s3 + $0xa8] sm:$0xff]
    %v229 = vld [vmem:[%s3 + $0xb0] sm:$0xff]
    %v230 = vld [vmem:[%s3 + $0xb8] sm:$0xff]
    %v231 = vld [vmem:[%s3 + $0xc0] sm:$0xff]
    %v232 = vld [vmem:[%s3 + $0xc8] sm:$0xff]
    %v233 = vld [vmem:[%s3 + $0xd0] sm:$0xff]
    %v234 = vld [vmem:[%s3 + $0xd8] sm:$0xff]
    %v235 = vld [vmem:[%s3 + $0xe0] sm:$0xff]
    %v236 = vld [vmem:[%s3 + $0xe8] sm:$0xff]
    %v237 = vld [vmem:[%s3 + $0xf0] sm:$0xff]
    %v238 = vld [vmem:[%s3 + $0xf8] sm:$0xff]
    %v239 = vld [vmem:[%s3 + $0x100] sm:$0xff]
    %v240 = vld [vmem:[%s3 + $0x108] sm:$0xff]
    %v241 = vld [vmem:[%s3 + $0x110] sm:$0xff]
    %v242 = vld [vmem:[%s3 + $0x118] sm:$0xff]
    %v243 = vld [vmem:[%s3 + $0x120] sm:$0xff]
    %v244 = vld [vmem:[%s3 + $0x128] sm:$0xff]
    %v245 = vld [vmem:[%s3 + $0x130] sm:$0xff]
    %v246 = vld [vmem:[%s3 + $0x138] sm:$0xff]
    %v247 = vld [vmem:[%s3 + $0x140] sm:$0xff]
    %v248 = vld [vmem:[%s3 + $0x148] sm:$0xff]
    %v249 = vld [vmem:[%s3 + $0x150] sm:$0xff]
    %v250 = vld [vmem:[%s3 + $0x158] sm:$0xff]
    %v251 = vld [vmem:[%s3 + $0x160] sm:$0xff]
    %v252 = vld [vmem:[%s3 + $0x168] sm:$0xff]
    %v253 = vld [vmem:[%s3 + $0x170] sm:$0xff]
    %v254 = vld [vmem:[%s3 + $0x178] sm:$0xff]
    %v255 = vld [vmem:[%s3 + $0x180] sm:$0xff]
    %v256 = vld [vmem:[%s3 + $0x188] sm:$0xff]
    %v257 = vld [vmem:[%s3 + $0x190] sm:$0xff]
    %v258 = vld [vmem:[%s3 + $0x198] sm:$0xff]
    %v259 = vld [vmem:[%s3 + $0x1a0] sm:$0xff]
    %v260 = vld [vmem:[%s3 + $0x1a8] sm:$0xff]
    %v261 = vld [vmem:[%s3 + $0x1b0] sm:$0xff]
    %v262 = vld [vmem:[%s3 + $0x1b8] sm:$0xff]
    %v263 = vld [vmem:[%s3 + $0x1c0] sm:$0xff]
    %v264 = vld [vmem:[%s3 + $0x1c8] sm:$0xff]
    %v265 = vld [vmem:[%s3 + $0x1d0] sm:$0xff]
    %v266 = vld [vmem:[%s3 + $0x1d8] sm:$0xff]
    %v267 = vld [vmem:[%s3 + $0x1e0] sm:$0xff]
    %v268 = vld [vmem:[%s3 + $0x1e8] sm:$0xff]
    %v269 = vld [vmem:[%s3 + $0x1f0] sm:$0xff]
    %v270 = vld [vmem:[%s3 + $0x1f8] sm:$0xff]
    %v271 = vld [vmem:[%s4] sm:$0xf]
    %v273 = vlaneseq
    %v274 = vshrl.u32 %v273, 7
    %v275 = vsub.s32 0, %v274
    %v276 = vrot.slane %v271, %v275
    %v277 = vlaneseq
    %v278 = vshrl.u32 %v277, 7
    %v279 = vsub.s32 1, %v278
    %v280 = vrot.slane %v271, %v279
    %v281 = vlaneseq
    %v282 = vshrl.u32 %v281, 7
    %v283 = vsub.s32 2, %v282
    %v284 = vrot.slane %v271, %v283
    %v285 = vlaneseq
    %v286 = vshrl.u32 %v285, 7
    %v287 = vsub.s32 3, %v286
    %v288 = vrot.slane %v271, %v287
    %v357 = vunpack.c.l.b16 %v207
    %v358 = vunpack.c.h.b16 %v207
    %v359 = vunpack.c.l.b16 %v208
    %v360 = vunpack.c.h.b16 %v208
    %v361 = vunpack.c.l.b16 %v209
    %v362 = vunpack.c.h.b16 %v209
    %v363 = vunpack.c.l.b16 %v210
    %v364 = vunpack.c.h.b16 %v210
    %v365 = vunpack.c.l.b16 %v211
    %v366 = vunpack.c.h.b16 %v211
    %v367 = vunpack.c.l.b16 %v212
    %v368 = vunpack.c.h.b16 %v212
    %v369 = vunpack.c.l.b16 %v213
    %v370 = vunpack.c.h.b16 %v213
    %v371 = vunpack.c.l.b16 %v214
    %v372 = vunpack.c.h.b16 %v214
    %v373 = vunpack.c.l.b16 %v215
    %v374 = vunpack.c.h.b16 %v215
    %v375 = vunpack.c.l.b16 %v216
    %v376 = vunpack.c.h.b16 %v216
    %v377 = vunpack.c.l.b16 %v217
    %v378 = vunpack.c.h.b16 %v217
    %v379 = vunpack.c.l.b16 %v218
    %v380 = vunpack.c.h.b16 %v218
    %v381 = vunpack.c.l.b16 %v219
    %v382 = vunpack.c.h.b16 %v219
    %v383 = vunpack.c.l.b16 %v220
    %v384 = vunpack.c.h.b16 %v220
    %v385 = vunpack.c.l.b16 %v221
    %v386 = vunpack.c.h.b16 %v221
    %v387 = vunpack.c.l.b16 %v222
    %v388 = vunpack.c.h.b16 %v222
    %v389 = vunpack.c.l.b16 %v223
    %v390 = vunpack.c.h.b16 %v223
    %v391 = vunpack.c.l.b16 %v224
    %v392 = vunpack.c.h.b16 %v224
    %v393 = vunpack.c.l.b16 %v225
    %v394 = vunpack.c.h.b16 %v225
    %v395 = vunpack.c.l.b16 %v226
    %v396 = vunpack.c.h.b16 %v226
    %v397 = vunpack.c.l.b16 %v227
    %v398 = vunpack.c.h.b16 %v227
    %v399 = vunpack.c.l.b16 %v228
    %v400 = vunpack.c.h.b16 %v228
    %v401 = vunpack.c.l.b16 %v229
    %v402 = vunpack.c.h.b16 %v229
    %v403 = vunpack.c.l.b16 %v230
    %v404 = vunpack.c.h.b16 %v230
    %v405 = vunpack.c.l.b16 %v231
    %v406 = vunpack.c.h.b16 %v231
    %v407 = vunpack.c.l.b16 %v232
    %v408 = vunpack.c.h.b16 %v232
    %v409 = vunpack.c.l.b16 %v233
    %v410 = vunpack.c.h.b16 %v233
    %v411 = vunpack.c.l.b16 %v234
    %v412 = vunpack.c.h.b16 %v234
    %v413 = vunpack.c.l.b16 %v235
    %v414 = vunpack.c.h.b16 %v235
    %v415 = vunpack.c.l.b16 %v236
    %v416 = vunpack.c.h.b16 %v236
    %v417 = vunpack.c.l.b16 %v237
    %v418 = vunpack.c.h.b16 %v237
    %v419 = vunpack.c.l.b16 %v238
    %v420 = vunpack.c.h.b16 %v238
    %v421 = vunpack.c.l.b16 %v239
    %v422 = vunpack.c.h.b16 %v239
    %v423 = vunpack.c.l.b16 %v240
    %v424 = vunpack.c.h.b16 %v240
    %v425 = vunpack.c.l.b16 %v241
    %v426 = vunpack.c.h.b16 %v241
    %v427 = vunpack.c.l.b16 %v242
    %v428 = vunpack.c.h.b16 %v242
    %v429 = vunpack.c.l.b16 %v243
    %v430 = vunpack.c.h.b16 %v243
    %v431 = vunpack.c.l.b16 %v244
    %v432 = vunpack.c.h.b16 %v244
    %v433 = vunpack.c.l.b16 %v245
    %v434 = vunpack.c.h.b16 %v245
    %v435 = vunpack.c.l.b16 %v246
    %v436 = vunpack.c.h.b16 %v246
    %v437 = vunpack.c.l.b16 %v247
    %v438 = vunpack.c.h.b16 %v247
    %v439 = vunpack.c.l.b16 %v248
    %v440 = vunpack.c.h.b16 %v248
    %v441 = vunpack.c.l.b16 %v249
    %v442 = vunpack.c.h.b16 %v249
    %v443 = vunpack.c.l.b16 %v250
    %v444 = vunpack.c.h.b16 %v250
    %v445 = vunpack.c.l.b16 %v251
    %v446 = vunpack.c.h.b16 %v251
    %v447 = vunpack.c.l.b16 %v252
    %v448 = vunpack.c.h.b16 %v252
    %v449 = vunpack.c.l.b16 %v253
    %v450 = vunpack.c.h.b16 %v253
    %v451 = vunpack.c.l.b16 %v254
    %v452 = vunpack.c.h.b16 %v254
    %v453 = vunpack.c.l.b16 %v255
    %v454 = vunpack.c.h.b16 %v255
    %v455 = vunpack.c.l.b16 %v256
    %v456 = vunpack.c.h.b16 %v256
    %v457 = vunpack.c.l.b16 %v257
    %v458 = vunpack.c.h.b16 %v257
    %v459 = vunpack.c.l.b16 %v258
    %v460 = vunpack.c.h.b16 %v258
    %v461 = vunpack.c.l.b16 %v259
    %v462 = vunpack.c.h.b16 %v259
    %v463 = vunpack.c.l.b16 %v260
    %v464 = vunpack.c.h.b16 %v260
    %v465 = vunpack.c.l.b16 %v261
    %v466 = vunpack.c.h.b16 %v261
    %v467 = vunpack.c.l.b16 %v262
    %v468 = vunpack.c.h.b16 %v262
    %v469 = vunpack.c.l.b16 %v263
    %v470 = vunpack.c.h.b16 %v263
    %v471 = vunpack.c.l.b16 %v264
    %v472 = vunpack.c.h.b16 %v264
    %v473 = vunpack.c.l.b16 %v265
    %v474 = vunpack.c.h.b16 %v265
    %v475 = vunpack.c.l.b16 %v266
    %v476 = vunpack.c.h.b16 %v266
    %v477 = vunpack.c.l.b16 %v267
    %v478 = vunpack.c.h.b16 %v267
    %v479 = vunpack.c.l.b16 %v268
    %v480 = vunpack.c.h.b16 %v268
    %v481 = vunpack.c.l.b16 %v269
    %v482 = vunpack.c.h.b16 %v269
    %v483 = vunpack.c.l.b16 %v270
    %v484 = vunpack.c.h.b16 %v270
    %v485 = vpack.c.b16 %v361, %v357
    %v486 = vpack.c.b16 %v362, %v358
    %v487 = vpack.c.b16 %v363, %v359
    %v488 = vpack.c.b16 %v364, %v360
    %v489 = vpack.c.b16 %v369, %v365
    %v490 = vpack.c.b16 %v370, %v366
    %v491 = vpack.c.b16 %v371, %v367
    %v492 = vpack.c.b16 %v372, %v368
    %v493 = vpack.c.b16 %v377, %v373
    %v494 = vpack.c.b16 %v378, %v374
    %v495 = vpack.c.b16 %v379, %v375
    %v496 = vpack.c.b16 %v380, %v376
    %v497 = vpack.c.b16 %v385, %v381
    %v498 = vpack.c.b16 %v386, %v382
    %v499 = vpack.c.b16 %v387, %v383
    %v500 = vpack.c.b16 %v388, %v384
    %v501 = vpack.c.b16 %v393, %v389
    %v502 = vpack.c.b16 %v394, %v390
    %v503 = vpack.c.b16 %v395, %v391
    %v504 = vpack.c.b16 %v396, %v392
    %v505 = vpack.c.b16 %v401, %v397
    %v506 = vpack.c.b16 %v402, %v398
    %v507 = vpack.c.b16 %v403, %v399
    %v508 = vpack.c.b16 %v404, %v400
    %v509 = vpack.c.b16 %v409, %v405
    %v510 = vpack.c.b16 %v410, %v406
    %v511 = vpack.c.b16 %v411, %v407
    %v512 = vpack.c.b16 %v412, %v408
    %v513 = vpack.c.b16 %v417, %v413
    %v514 = vpack.c.b16 %v418, %v414
    %v515 = vpack.c.b16 %v419, %v415
    %v516 = vpack.c.b16 %v420, %v416
    %v517 = vpack.c.b16 %v425, %v421
    %v518 = vpack.c.b16 %v426, %v422
    %v519 = vpack.c.b16 %v427, %v423
    %v520 = vpack.c.b16 %v428, %v424
    %v521 = vpack.c.b16 %v433, %v429
    %v522 = vpack.c.b16 %v434, %v430
    %v523 = vpack.c.b16 %v435, %v431
    %v524 = vpack.c.b16 %v436, %v432
    %v525 = vpack.c.b16 %v441, %v437
    %v526 = vpack.c.b16 %v442, %v438
    %v527 = vpack.c.b16 %v443, %v439
    %v528 = vpack.c.b16 %v444, %v440
    %v529 = vpack.c.b16 %v449, %v445
    %v530 = vpack.c.b16 %v450, %v446
    %v531 = vpack.c.b16 %v451, %v447
    %v532 = vpack.c.b16 %v452, %v448
    %v533 = vpack.c.b16 %v457, %v453
    %v534 = vpack.c.b16 %v458, %v454
    %v535 = vpack.c.b16 %v459, %v455
    %v536 = vpack.c.b16 %v460, %v456
    %v537 = vpack.c.b16 %v465, %v461
    %v538 = vpack.c.b16 %v466, %v462
    %v539 = vpack.c.b16 %v467, %v463
    %v540 = vpack.c.b16 %v468, %v464
    %v541 = vpack.c.b16 %v473, %v469
    %v542 = vpack.c.b16 %v474, %v470
    %v543 = vpack.c.b16 %v475, %v471
    %v544 = vpack.c.b16 %v476, %v472
    %v545 = vpack.c.b16 %v481, %v477
    %v546 = vpack.c.b16 %v482, %v478
    %v547 = vpack.c.b16 %v483, %v479
    %v548 = vpack.c.b16 %v484, %v480
    %613 = vmatprep.subr.bf16.mxu0 %v514
    %614 = vmatpush1.bf16.msra.mxu0 %v513
    %615 = vmatprep.subr.bf16.mxu0 %v510
    %616 = vmatpush1.bf16.msra.mxu0 %v509
    %617 = vmatprep.subr.bf16.mxu0 %v506
    %618 = vmatpush1.bf16.msra.mxu0 %v505
    %619 = vmatprep.subr.bf16.mxu0 %v502
    %620 = vmatpush1.bf16.msra.mxu0 %v501
    %621 = vmatprep.subr.bf16.mxu0 %v498
    %622 = vmatpush1.bf16.msra.mxu0 %v497
    %623 = vmatprep.subr.bf16.mxu0 %v494
    %624 = vmatpush1.bf16.msra.mxu0 %v493
    %625 = vmatprep.subr.bf16.mxu0 %v490
    %626 = vmatpush1.bf16.msra.mxu0 %v489
    %627 = vmatprep.subr.bf16.mxu0 %v486
    %628 = vmatpush1.bf16.msra.mxu0 %v485
    %629 = vmatprep.subr.bf16.mxu0 %v546
    %630 = vmatpush2.bf16.msra.mxu0 %v545
    %631 = vmatprep.subr.bf16.mxu0 %v542
    %632 = vmatpush2.bf16.msra.mxu0 %v541
    %633 = vmatprep.subr.bf16.mxu0 %v538
    %634 = vmatpush2.bf16.msra.mxu0 %v537
    %635 = vmatprep.subr.bf16.mxu0 %v534
    %636 = vmatpush2.bf16.msra.mxu0 %v533
    %637 = vmatprep.subr.bf16.mxu0 %v530
    %638 = vmatpush2.bf16.msra.mxu0 %v529
    %639 = vmatprep.subr.bf16.mxu0 %v526
    %640 = vmatpush2.bf16.msra.mxu0 %v525
    %641 = vmatprep.subr.bf16.mxu0 %v522
    %642 = vmatpush2.bf16.msra.mxu0 %v521
    %643 = vmatprep.subr.bf16.mxu0 %v518
    %644 = vmatpush2.bf16.msra.mxu0 %v517
    %645 = vmatprep.mubr.bf16.mxu0 %v206
    %646 = vmatmul.mubr.bf16.gmra.mxu0 %v205
    %v647 = vpop.f32.mrf.mxu0
    %v648 = vadd.f32 %v276, %v647
    %v649 = vpop.f32.mrf.mxu0
    %v650 = vadd.f32 %v280, %v649
    %v651 = vpop.f32.mrf.mxu0
    %v652 = vadd.f32 %v276, %v651
    %v653 = vpop.f32.mrf.mxu0
    %v654 = vadd.f32 %v280, %v653
    %655 = vdwg.mxu0
    %656 = vmatprep.subr.bf16.mxu0 %v516
    %657 = vmatpush1.bf16.msra.mxu0 %v515
    %658 = vmatprep.subr.bf16.mxu0 %v512
    %659 = vmatpush1.bf16.msra.mxu0 %v511
    %660 = vmatprep.subr.bf16.mxu0 %v508
    %661 = vmatpush1.bf16.msra.mxu0 %v507
    %662 = vmatprep.subr.bf16.mxu0 %v504
    %663 = vmatpush1.bf16.msra.mxu0 %v503
    %664 = vmatprep.subr.bf16.mxu0 %v500
    %665 = vmatpush1.bf16.msra.mxu0 %v499
    %666 = vmatprep.subr.bf16.mxu0 %v496
    %667 = vmatpush1.bf16.msra.mxu0 %v495
    %668 = vmatprep.subr.bf16.mxu0 %v492
    %669 = vmatpush1.bf16.msra.mxu0 %v491
    %670 = vmatprep.subr.bf16.mxu0 %v488
    %671 = vmatpush1.bf16.msra.mxu0 %v487
    %672 = vmatprep.subr.bf16.mxu0 %v548
    %673 = vmatpush2.bf16.msra.mxu0 %v547
    %674 = vmatprep.subr.bf16.mxu0 %v544
    %675 = vmatpush2.bf16.msra.mxu0 %v543
    %676 = vmatprep.subr.bf16.mxu0 %v540
    %677 = vmatpush2.bf16.msra.mxu0 %v539
    %678 = vmatprep.subr.bf16.mxu0 %v536
    %679 = vmatpush2.bf16.msra.mxu0 %v535
    %680 = vmatprep.subr.bf16.mxu0 %v532
    %681 = vmatpush2.bf16.msra.mxu0 %v531
    %682 = vmatprep.subr.bf16.mxu0 %v528
    %683 = vmatpush2.bf16.msra.mxu0 %v527
    %684 = vmatprep.subr.bf16.mxu0 %v524
    %685 = vmatpush2.bf16.msra.mxu0 %v523
    %686 = vmatprep.subr.bf16.mxu0 %v520
    %687 = vmatpush2.bf16.msra.mxu0 %v519
    %688 = vmatprep.mubr.bf16.mxu0 %v206
    %689 = vmatmul.mubr.bf16.gmra.mxu0 %v205
    %v690 = vpop.f32.mrf.mxu0
    %v691 = vadd.f32 %v284, %v690
    %v692 = vpop.f32.mrf.mxu0
    %v693 = vadd.f32 %v288, %v692
    %v694 = vpop.f32.mrf.mxu0
    %v695 = vadd.f32 %v284, %v694
    %v696 = vpop.f32.mrf.mxu0
    %v697 = vadd.f32 %v288, %v696
    %698 = vdwg.mxu0
    %vm699 = vcmp.gt.f32.partialorder %v648, 0.0
    %vm700 = vcmp.gt.f32.partialorder %v650, 0.0
    %vm701 = vcmp.gt.f32.partialorder %v691, 0.0
    %vm702 = vcmp.gt.f32.partialorder %v693, 0.0
    %vm703 = vcmp.gt.f32.partialorder %v652, 0.0
    %vm704 = vcmp.gt.f32.partialorder %v654, 0.0
    %vm705 = vcmp.gt.f32.partialorder %v695, 0.0
    %vm706 = vcmp.gt.f32.partialorder %v697, 0.0
    %v707 = vmul.f32 %v648, 0.2
    %v708 = vmul.f32 %v650, 0.2
    %v709 = vmul.f32 %v691, 0.2
    %v710 = vmul.f32 %v693, 0.2
    %v711 = vmul.f32 %v652, 0.2
    %v712 = vmul.f32 %v654, 0.2
    %v713 = vmul.f32 %v695, 0.2
    %v714 = vmul.f32 %v697, 0.2
    %v715 = vsel %vm699, %v648, %v707
    %v716 = vsel %vm700, %v650, %v708
    %v717 = vsel %vm701, %v691, %v709
    %v718 = vsel %vm702, %v693, %v710
    %v719 = vsel %vm703, %v652, %v711
    %v720 = vsel %vm704, %v654, %v712
    %v721 = vsel %vm705, %v695, %v713
    %v722 = vsel %vm706, %v697, %v714
    %v723 = vpack.c.bf16 %v719, %v715
    %v724 = vpack.c.bf16 %v720, %v716
    %v725 = vpack.c.bf16 %v721, %v717
    %v726 = vpack.c.bf16 %v722, %v718
    %v727 = vld [vmem:[%s5] sm:$0xff]
    %v728 = vld [vmem:[%s5 + $0x8] sm:$0xff]
    %v729 = vld [vmem:[%s5 + $0x10] sm:$0xff]
    %v730 = vld [vmem:[%s5 + $0x18] sm:$0xff]
    %v731 = vld [vmem:[%s5 + $0x20] sm:$0xff]
    %v732 = vld [vmem:[%s5 + $0x28] sm:$0xff]
    %v733 = vld [vmem:[%s5 + $0x30] sm:$0xff]
    %v734 = vld [vmem:[%s5 + $0x38] sm:$0xff]
    %v735 = vld [vmem:[%s5 + $0x40] sm:$0xff]
    %v736 = vld [vmem:[%s5 + $0x48] sm:$0xff]
    %v737 = vld [vmem:[%s5 + $0x50] sm:$0xff]
    %v738 = vld [vmem:[%s5 + $0x58] sm:$0xff]
    %v739 = vld [vmem:[%s5 + $0x60] sm:$0xff]
    %v740 = vld [vmem:[%s5 + $0x68] sm:$0xff]
    %v741 = vld [vmem:[%s5 + $0x70] sm:$0xff]
    %v742 = vld [vmem:[%s5 + $0x78] sm:$0xff]
    %v743 = vld [vmem:[%s5 + $0x80] sm:$0xff]
    %v744 = vld [vmem:[%s5 + $0x88] sm:$0xff]
    %v745 = vld [vmem:[%s5 + $0x90] sm:$0xff]
    %v746 = vld [vmem:[%s5 + $0x98] sm:$0xff]
    %v747 = vld [vmem:[%s5 + $0xa0] sm:$0xff]
    %v748 = vld [vmem:[%s5 + $0xa8] sm:$0xff]
    %v749 = vld [vmem:[%s5 + $0xb0] sm:$0xff]
    %v750 = vld [vmem:[%s5 + $0xb8] sm:$0xff]
    %v751 = vld [vmem:[%s5 + $0xc0] sm:$0xff]
    %v752 = vld [vmem:[%s5 + $0xc8] sm:$0xff]
    %v753 = vld [vmem:[%s5 + $0xd0] sm:$0xff]
    %v754 = vld [vmem:[%s5 + $0xd8] sm:$0xff]
    %v755 = vld [vmem:[%s5 + $0xe0] sm:$0xff]
    %v756 = vld [vmem:[%s5 + $0xe8] sm:$0xff]
    %v757 = vld [vmem:[%s5 + $0xf0] sm:$0xff]
    %v758 = vld [vmem:[%s5 + $0xf8] sm:$0xff]
    %v759 = vld [vmem:[%s5 + $0x100] sm:$0xff]
    %v760 = vld [vmem:[%s5 + $0x108] sm:$0xff]
    %v761 = vld [vmem:[%s5 + $0x110] sm:$0xff]
    %v762 = vld [vmem:[%s5 + $0x118] sm:$0xff]
    %v763 = vld [vmem:[%s5 + $0x120] sm:$0xff]
    %v764 = vld [vmem:[%s5 + $0x128] sm:$0xff]
    %v765 = vld [vmem:[%s5 + $0x130] sm:$0xff]
    %v766 = vld [vmem:[%s5 + $0x138] sm:$0xff]
    %v767 = vld [vmem:[%s5 + $0x140] sm:$0xff]
    %v768 = vld [vmem:[%s5 + $0x148] sm:$0xff]
    %v769 = vld [vmem:[%s5 + $0x150] sm:$0xff]
    %v770 = vld [vmem:[%s5 + $0x158] sm:$0xff]
    %v771 = vld [vmem:[%s5 + $0x160] sm:$0xff]
    %v772 = vld [vmem:[%s5 + $0x168] sm:$0xff]
    %v773 = vld [vmem:[%s5 + $0x170] sm:$0xff]
    %v774 = vld [vmem:[%s5 + $0x178] sm:$0xff]
    %v775 = vld [vmem:[%s5 + $0x180] sm:$0xff]
    %v776 = vld [vmem:[%s5 + $0x188] sm:$0xff]
    %v777 = vld [vmem:[%s5 + $0x190] sm:$0xff]
    %v778 = vld [vmem:[%s5 + $0x198] sm:$0xff]
    %v779 = vld [vmem:[%s5 + $0x1a0] sm:$0xff]
    %v780 = vld [vmem:[%s5 + $0x1a8] sm:$0xff]
    %v781 = vld [vmem:[%s5 + $0x1b0] sm:$0xff]
    %v782 = vld [vmem:[%s5 + $0x1b8] sm:$0xff]
    %v783 = vld [vmem:[%s5 + $0x1c0] sm:$0xff]
    %v784 = vld [vmem:[%s5 + $0x1c8] sm:$0xff]
    %v785 = vld [vmem:[%s5 + $0x1d0] sm:$0xff]
    %v786 = vld [vmem:[%s5 + $0x1d8] sm:$0xff]
    %v787 = vld [vmem:[%s5 + $0x1e0] sm:$0xff]
    %v788 = vld [vmem:[%s5 + $0x1e8] sm:$0xff]
    %v789 = vld [vmem:[%s5 + $0x1f0] sm:$0xff]
    %v790 = vld [vmem:[%s5 + $0x1f8] sm:$0xff]
    %v791 = vld [vmem:[%s5 + $0x200] sm:$0xff]
    %v792 = vld [vmem:[%s5 + $0x208] sm:$0xff]
    %v793 = vld [vmem:[%s5 + $0x210] sm:$0xff]
    %v794 = vld [vmem:[%s5 + $0x218] sm:$0xff]
    %v795 = vld [vmem:[%s5 + $0x220] sm:$0xff]
    %v796 = vld [vmem:[%s5 + $0x228] sm:$0xff]
    %v797 = vld [vmem:[%s5 + $0x230] sm:$0xff]
    %v798 = vld [vmem:[%s5 + $0x238] sm:$0xff]
    %v799 = vld [vmem:[%s5 + $0x240] sm:$0xff]
    %v800 = vld [vmem:[%s5 + $0x248] sm:$0xff]
    %v801 = vld [vmem:[%s5 + $0x250] sm:$0xff]
    %v802 = vld [vmem:[%s5 + $0x258] sm:$0xff]
    %v803 = vld [vmem:[%s5 + $0x260] sm:$0xff]
    %v804 = vld [vmem:[%s5 + $0x268] sm:$0xff]
    %v805 = vld [vmem:[%s5 + $0x270] sm:$0xff]
    %v806 = vld [vmem:[%s5 + $0x278] sm:$0xff]
    %v807 = vld [vmem:[%s5 + $0x280] sm:$0xff]
    %v808 = vld [vmem:[%s5 + $0x288] sm:$0xff]
    %v809 = vld [vmem:[%s5 + $0x290] sm:$0xff]
    %v810 = vld [vmem:[%s5 + $0x298] sm:$0xff]
    %v811 = vld [vmem:[%s5 + $0x2a0] sm:$0xff]
    %v812 = vld [vmem:[%s5 + $0x2a8] sm:$0xff]
    %v813 = vld [vmem:[%s5 + $0x2b0] sm:$0xff]
    %v814 = vld [vmem:[%s5 + $0x2b8] sm:$0xff]
    %v815 = vld [vmem:[%s5 + $0x2c0] sm:$0xff]
    %v816 = vld [vmem:[%s5 + $0x2c8] sm:$0xff]
    %v817 = vld [vmem:[%s5 + $0x2d0] sm:$0xff]
    %v818 = vld [vmem:[%s5 + $0x2d8] sm:$0xff]
    %v819 = vld [vmem:[%s5 + $0x2e0] sm:$0xff]
    %v820 = vld [vmem:[%s5 + $0x2e8] sm:$0xff]
    %v821 = vld [vmem:[%s5 + $0x2f0] sm:$0xff]
    %v822 = vld [vmem:[%s5 + $0x2f8] sm:$0xff]
    %v823 = vld [vmem:[%s5 + $0x300] sm:$0xff]
    %v824 = vld [vmem:[%s5 + $0x308] sm:$0xff]
    %v825 = vld [vmem:[%s5 + $0x310] sm:$0xff]
    %v826 = vld [vmem:[%s5 + $0x318] sm:$0xff]
    %v827 = vld [vmem:[%s5 + $0x320] sm:$0xff]
    %v828 = vld [vmem:[%s5 + $0x328] sm:$0xff]
    %v829 = vld [vmem:[%s5 + $0x330] sm:$0xff]
    %v830 = vld [vmem:[%s5 + $0x338] sm:$0xff]
    %v831 = vld [vmem:[%s5 + $0x340] sm:$0xff]
    %v832 = vld [vmem:[%s5 + $0x348] sm:$0xff]
    %v833 = vld [vmem:[%s5 + $0x350] sm:$0xff]
    %v834 = vld [vmem:[%s5 + $0x358] sm:$0xff]
    %v835 = vld [vmem:[%s5 + $0x360] sm:$0xff]
    %v836 = vld [vmem:[%s5 + $0x368] sm:$0xff]
    %v837 = vld [vmem:[%s5 + $0x370] sm:$0xff]
    %v838 = vld [vmem:[%s5 + $0x378] sm:$0xff]
    %v839 = vld [vmem:[%s5 + $0x380] sm:$0xff]
    %v840 = vld [vmem:[%s5 + $0x388] sm:$0xff]
    %v841 = vld [vmem:[%s5 + $0x390] sm:$0xff]
    %v842 = vld [vmem:[%s5 + $0x398] sm:$0xff]
    %v843 = vld [vmem:[%s5 + $0x3a0] sm:$0xff]
    %v844 = vld [vmem:[%s5 + $0x3a8] sm:$0xff]
    %v845 = vld [vmem:[%s5 + $0x3b0] sm:$0xff]
    %v846 = vld [vmem:[%s5 + $0x3b8] sm:$0xff]
    %v847 = vld [vmem:[%s5 + $0x3c0] sm:$0xff]
    %v848 = vld [vmem:[%s5 + $0x3c8] sm:$0xff]
    %v849 = vld [vmem:[%s5 + $0x3d0] sm:$0xff]
    %v850 = vld [vmem:[%s5 + $0x3d8] sm:$0xff]
    %v851 = vld [vmem:[%s5 + $0x3e0] sm:$0xff]
    %v852 = vld [vmem:[%s5 + $0x3e8] sm:$0xff]
    %v853 = vld [vmem:[%s5 + $0x3f0] sm:$0xff]
    %v854 = vld [vmem:[%s5 + $0x3f8] sm:$0xff]
    %v855 = vld [vmem:[%s5 + $0x400] sm:$0xff]
    %v856 = vld [vmem:[%s5 + $0x408] sm:$0xff]
    %v857 = vld [vmem:[%s5 + $0x410] sm:$0xff]
    %v858 = vld [vmem:[%s5 + $0x418] sm:$0xff]
    %v859 = vld [vmem:[%s5 + $0x420] sm:$0xff]
    %v860 = vld [vmem:[%s5 + $0x428] sm:$0xff]
    %v861 = vld [vmem:[%s5 + $0x430] sm:$0xff]
    %v862 = vld [vmem:[%s5 + $0x438] sm:$0xff]
    %v863 = vld [vmem:[%s5 + $0x440] sm:$0xff]
    %v864 = vld [vmem:[%s5 + $0x448] sm:$0xff]
    %v865 = vld [vmem:[%s5 + $0x450] sm:$0xff]
    %v866 = vld [vmem:[%s5 + $0x458] sm:$0xff]
    %v867 = vld [vmem:[%s5 + $0x460] sm:$0xff]
    %v868 = vld [vmem:[%s5 + $0x468] sm:$0xff]
    %v869 = vld [vmem:[%s5 + $0x470] sm:$0xff]
    %v870 = vld [vmem:[%s5 + $0x478] sm:$0xff]
    %v871 = vld [vmem:[%s5 + $0x480] sm:$0xff]
    %v872 = vld [vmem:[%s5 + $0x488] sm:$0xff]
    %v873 = vld [vmem:[%s5 + $0x490] sm:$0xff]
    %v874 = vld [vmem:[%s5 + $0x498] sm:$0xff]
    %v875 = vld [vmem:[%s5 + $0x4a0] sm:$0xff]
    %v876 = vld [vmem:[%s5 + $0x4a8] sm:$0xff]
    %v877 = vld [vmem:[%s5 + $0x4b0] sm:$0xff]
    %v878 = vld [vmem:[%s5 + $0x4b8] sm:$0xff]
    %v879 = vld [vmem:[%s5 + $0x4c0] sm:$0xff]
    %v880 = vld [vmem:[%s5 + $0x4c8] sm:$0xff]
    %v881 = vld [vmem:[%s5 + $0x4d0] sm:$0xff]
    %v882 = vld [vmem:[%s5 + $0x4d8] sm:$0xff]
    %v883 = vld [vmem:[%s5 + $0x4e0] sm:$0xff]
    %v884 = vld [vmem:[%s5 + $0x4e8] sm:$0xff]
    %v885 = vld [vmem:[%s5 + $0x4f0] sm:$0xff]
    %v886 = vld [vmem:[%s5 + $0x4f8] sm:$0xff]
    %v887 = vld [vmem:[%s5 + $0x500] sm:$0xff]
    %v888 = vld [vmem:[%s5 + $0x508] sm:$0xff]
    %v889 = vld [vmem:[%s5 + $0x510] sm:$0xff]
    %v890 = vld [vmem:[%s5 + $0x518] sm:$0xff]
    %v891 = vld [vmem:[%s5 + $0x520] sm:$0xff]
    %v892 = vld [vmem:[%s5 + $0x528] sm:$0xff]
    %v893 = vld [vmem:[%s5 + $0x530] sm:$0xff]
    %v894 = vld [vmem:[%s5 + $0x538] sm:$0xff]
    %v895 = vld [vmem:[%s5 + $0x540] sm:$0xff]
    %v896 = vld [vmem:[%s5 + $0x548] sm:$0xff]
    %v897 = vld [vmem:[%s5 + $0x550] sm:$0xff]
    %v898 = vld [vmem:[%s5 + $0x558] sm:$0xff]
    %v899 = vld [vmem:[%s5 + $0x560] sm:$0xff]
    %v900 = vld [vmem:[%s5 + $0x568] sm:$0xff]
    %v901 = vld [vmem:[%s5 + $0x570] sm:$0xff]
    %v902 = vld [vmem:[%s5 + $0x578] sm:$0xff]
    %v903 = vld [vmem:[%s5 + $0x580] sm:$0xff]
    %v904 = vld [vmem:[%s5 + $0x588] sm:$0xff]
    %v905 = vld [vmem:[%s5 + $0x590] sm:$0xff]
    %v906 = vld [vmem:[%s5 + $0x598] sm:$0xff]
    %v907 = vld [vmem:[%s5 + $0x5a0] sm:$0xff]
    %v908 = vld [vmem:[%s5 + $0x5a8] sm:$0xff]
    %v909 = vld [vmem:[%s5 + $0x5b0] sm:$0xff]
    %v910 = vld [vmem:[%s5 + $0x5b8] sm:$0xff]
    %v911 = vld [vmem:[%s5 + $0x5c0] sm:$0xff]
    %v912 = vld [vmem:[%s5 + $0x5c8] sm:$0xff]
    %v913 = vld [vmem:[%s5 + $0x5d0] sm:$0xff]
    %v914 = vld [vmem:[%s5 + $0x5d8] sm:$0xff]
    %v915 = vld [vmem:[%s5 + $0x5e0] sm:$0xff]
    %v916 = vld [vmem:[%s5 + $0x5e8] sm:$0xff]
    %v917 = vld [vmem:[%s5 + $0x5f0] sm:$0xff]
    %v918 = vld [vmem:[%s5 + $0x5f8] sm:$0xff]
    %v919 = vld [vmem:[%s5 + $0x600] sm:$0xff]
    %v920 = vld [vmem:[%s5 + $0x608] sm:$0xff]
    %v921 = vld [vmem:[%s5 + $0x610] sm:$0xff]
    %v922 = vld [vmem:[%s5 + $0x618] sm:$0xff]
    %v923 = vld [vmem:[%s5 + $0x620] sm:$0xff]
    %v924 = vld [vmem:[%s5 + $0x628] sm:$0xff]
    %v925 = vld [vmem:[%s5 + $0x630] sm:$0xff]
    %v926 = vld [vmem:[%s5 + $0x638] sm:$0xff]
    %v927 = vld [vmem:[%s5 + $0x640] sm:$0xff]
    %v928 = vld [vmem:[%s5 + $0x648] sm:$0xff]
    %v929 = vld [vmem:[%s5 + $0x650] sm:$0xff]
    %v930 = vld [vmem:[%s5 + $0x658] sm:$0xff]
    %v931 = vld [vmem:[%s5 + $0x660] sm:$0xff]
    %v932 = vld [vmem:[%s5 + $0x668] sm:$0xff]
    %v933 = vld [vmem:[%s5 + $0x670] sm:$0xff]
    %v934 = vld [vmem:[%s5 + $0x678] sm:$0xff]
    %v935 = vld [vmem:[%s5 + $0x680] sm:$0xff]
    %v936 = vld [vmem:[%s5 + $0x688] sm:$0xff]
    %v937 = vld [vmem:[%s5 + $0x690] sm:$0xff]
    %v938 = vld [vmem:[%s5 + $0x698] sm:$0xff]
    %v939 = vld [vmem:[%s5 + $0x6a0] sm:$0xff]
    %v940 = vld [vmem:[%s5 + $0x6a8] sm:$0xff]
    %v941 = vld [vmem:[%s5 + $0x6b0] sm:$0xff]
    %v942 = vld [vmem:[%s5 + $0x6b8] sm:$0xff]
    %v943 = vld [vmem:[%s5 + $0x6c0] sm:$0xff]
    %v944 = vld [vmem:[%s5 + $0x6c8] sm:$0xff]
    %v945 = vld [vmem:[%s5 + $0x6d0] sm:$0xff]
    %v946 = vld [vmem:[%s5 + $0x6d8] sm:$0xff]
    %v947 = vld [vmem:[%s5 + $0x6e0] sm:$0xff]
    %v948 = vld [vmem:[%s5 + $0x6e8] sm:$0xff]
    %v949 = vld [vmem:[%s5 + $0x6f0] sm:$0xff]
    %v950 = vld [vmem:[%s5 + $0x6f8] sm:$0xff]
    %v951 = vld [vmem:[%s5 + $0x700] sm:$0xff]
    %v952 = vld [vmem:[%s5 + $0x708] sm:$0xff]
    %v953 = vld [vmem:[%s5 + $0x710] sm:$0xff]
    %v954 = vld [vmem:[%s5 + $0x718] sm:$0xff]
    %v955 = vld [vmem:[%s5 + $0x720] sm:$0xff]
    %v956 = vld [vmem:[%s5 + $0x728] sm:$0xff]
    %v957 = vld [vmem:[%s5 + $0x730] sm:$0xff]
    %v958 = vld [vmem:[%s5 + $0x738] sm:$0xff]
    %v959 = vld [vmem:[%s5 + $0x740] sm:$0xff]
    %v960 = vld [vmem:[%s5 + $0x748] sm:$0xff]
    %v961 = vld [vmem:[%s5 + $0x750] sm:$0xff]
    %v962 = vld [vmem:[%s5 + $0x758] sm:$0xff]
    %v963 = vld [vmem:[%s5 + $0x760] sm:$0xff]
    %v964 = vld [vmem:[%s5 + $0x768] sm:$0xff]
    %v965 = vld [vmem:[%s5 + $0x770] sm:$0xff]
    %v966 = vld [vmem:[%s5 + $0x778] sm:$0xff]
    %v967 = vld [vmem:[%s5 + $0x780] sm:$0xff]
    %v968 = vld [vmem:[%s5 + $0x788] sm:$0xff]
    %v969 = vld [vmem:[%s5 + $0x790] sm:$0xff]
    %v970 = vld [vmem:[%s5 + $0x798] sm:$0xff]
    %v971 = vld [vmem:[%s5 + $0x7a0] sm:$0xff]
    %v972 = vld [vmem:[%s5 + $0x7a8] sm:$0xff]
    %v973 = vld [vmem:[%s5 + $0x7b0] sm:$0xff]
    %v974 = vld [vmem:[%s5 + $0x7b8] sm:$0xff]
    %v975 = vld [vmem:[%s5 + $0x7c0] sm:$0xff]
    %v976 = vld [vmem:[%s5 + $0x7c8] sm:$0xff]
    %v977 = vld [vmem:[%s5 + $0x7d0] sm:$0xff]
    %v978 = vld [vmem:[%s5 + $0x7d8] sm:$0xff]
    %v979 = vld [vmem:[%s5 + $0x7e0] sm:$0xff]
    %v980 = vld [vmem:[%s5 + $0x7e8] sm:$0xff]
    %v981 = vld [vmem:[%s5 + $0x7f0] sm:$0xff]
    %v982 = vld [vmem:[%s5 + $0x7f8] sm:$0xff]
    %v983 = vld [vmem:[%s6] sm:$0xff]
    %v985 = vlaneseq
    %v986 = vshrl.u32 %v985, 7
    %v987 = vsub.s32 0, %v986
    %v988 = vrot.slane %v983, %v987
    %v989 = vlaneseq
    %v990 = vshrl.u32 %v989, 7
    %v991 = vsub.s32 1, %v990
    %v992 = vrot.slane %v983, %v991
    %v993 = vlaneseq
    %v994 = vshrl.u32 %v993, 7
    %v995 = vsub.s32 2, %v994
    %v996 = vrot.slane %v983, %v995
    %v997 = vlaneseq
    %v998 = vshrl.u32 %v997, 7
    %v999 = vsub.s32 3, %v998
    %v1000 = vrot.slane %v983, %v999
    %v1001 = vlaneseq
    %v1002 = vshrl.u32 %v1001, 7
    %v1003 = vsub.s32 4, %v1002
    %v1004 = vrot.slane %v983, %v1003
    %v1005 = vlaneseq
    %v1006 = vshrl.u32 %v1005, 7
    %v1007 = vsub.s32 5, %v1006
    %v1008 = vrot.slane %v983, %v1007
    %v1009 = vlaneseq
    %v1010 = vshrl.u32 %v1009, 7
    %v1011 = vsub.s32 6, %v1010
    %v1012 = vrot.slane %v983, %v1011
    %v1013 = vlaneseq
    %v1014 = vshrl.u32 %v1013, 7
    %v1015 = vsub.s32 7, %v1014
    %v1016 = vrot.slane %v983, %v1015
    %v1281 = vunpack.c.l.b16 %v727
    %v1282 = vunpack.c.h.b16 %v727
    %v1283 = vunpack.c.l.b16 %v728
    %v1284 = vunpack.c.h.b16 %v728
    %v1285 = vunpack.c.l.b16 %v729
    %v1286 = vunpack.c.h.b16 %v729
    %v1287 = vunpack.c.l.b16 %v730
    %v1288 = vunpack.c.h.b16 %v730
    %v1289 = vunpack.c.l.b16 %v731
    %v1290 = vunpack.c.h.b16 %v731
    %v1291 = vunpack.c.l.b16 %v732
    %v1292 = vunpack.c.h.b16 %v732
    %v1293 = vunpack.c.l.b16 %v733
    %v1294 = vunpack.c.h.b16 %v733
    %v1295 = vunpack.c.l.b16 %v734
    %v1296 = vunpack.c.h.b16 %v734
    %v1297 = vunpack.c.l.b16 %v735
    %v1298 = vunpack.c.h.b16 %v735
    %v1299 = vunpack.c.l.b16 %v736
    %v1300 = vunpack.c.h.b16 %v736
    %v1301 = vunpack.c.l.b16 %v737
    %v1302 = vunpack.c.h.b16 %v737
    %v1303 = vunpack.c.l.b16 %v738
    %v1304 = vunpack.c.h.b16 %v738
    %v1305 = vunpack.c.l.b16 %v739
    %v1306 = vunpack.c.h.b16 %v739
    %v1307 = vunpack.c.l.b16 %v740
    %v1308 = vunpack.c.h.b16 %v740
    %v1309 = vunpack.c.l.b16 %v741
    %v1310 = vunpack.c.h.b16 %v741
    %v1311 = vunpack.c.l.b16 %v742
    %v1312 = vunpack.c.h.b16 %v742
    %v1313 = vunpack.c.l.b16 %v743
    %v1314 = vunpack.c.h.b16 %v743
    %v1315 = vunpack.c.l.b16 %v744
    %v1316 = vunpack.c.h.b16 %v744
    %v1317 = vunpack.c.l.b16 %v745
    %v1318 = vunpack.c.h.b16 %v745
    %v1319 = vunpack.c.l.b16 %v746
    %v1320 = vunpack.c.h.b16 %v746
    %v1321 = vunpack.c.l.b16 %v747
    %v1322 = vunpack.c.h.b16 %v747
    %v1323 = vunpack.c.l.b16 %v748
    %v1324 = vunpack.c.h.b16 %v748
    %v1325 = vunpack.c.l.b16 %v749
    %v1326 = vunpack.c.h.b16 %v749
    %v1327 = vunpack.c.l.b16 %v750
    %v1328 = vunpack.c.h.b16 %v750
    %v1329 = vunpack.c.l.b16 %v751
    %v1330 = vunpack.c.h.b16 %v751
    %v1331 = vunpack.c.l.b16 %v752
    %v1332 = vunpack.c.h.b16 %v752
    %v1333 = vunpack.c.l.b16 %v753
    %v1334 = vunpack.c.h.b16 %v753
    %v1335 = vunpack.c.l.b16 %v754
    %v1336 = vunpack.c.h.b16 %v754
    %v1337 = vunpack.c.l.b16 %v755
    %v1338 = vunpack.c.h.b16 %v755
    %v1339 = vunpack.c.l.b16 %v756
    %v1340 = vunpack.c.h.b16 %v756
    %v1341 = vunpack.c.l.b16 %v757
    %v1342 = vunpack.c.h.b16 %v757
    %v1343 = vunpack.c.l.b16 %v758
    %v1344 = vunpack.c.h.b16 %v758
    %v1345 = vunpack.c.l.b16 %v759
    %v1346 = vunpack.c.h.b16 %v759
    %v1347 = vunpack.c.l.b16 %v760
    %v1348 = vunpack.c.h.b16 %v760
    %v1349 = vunpack.c.l.b16 %v761
    %v1350 = vunpack.c.h.b16 %v761
    %v1351 = vunpack.c.l.b16 %v762
    %v1352 = vunpack.c.h.b16 %v762
    %v1353 = vunpack.c.l.b16 %v763
    %v1354 = vunpack.c.h.b16 %v763
    %v1355 = vunpack.c.l.b16 %v764
    %v1356 = vunpack.c.h.b16 %v764
    %v1357 = vunpack.c.l.b16 %v765
    %v1358 = vunpack.c.h.b16 %v765
    %v1359 = vunpack.c.l.b16 %v766
    %v1360 = vunpack.c.h.b16 %v766
    %v1361 = vunpack.c.l.b16 %v767
    %v1362 = vunpack.c.h.b16 %v767
    %v1363 = vunpack.c.l.b16 %v768
    %v1364 = vunpack.c.h.b16 %v768
    %v1365 = vunpack.c.l.b16 %v769
    %v1366 = vunpack.c.h.b16 %v769
    %v1367 = vunpack.c.l.b16 %v770
    %v1368 = vunpack.c.h.b16 %v770
    %v1369 = vunpack.c.l.b16 %v771
    %v1370 = vunpack.c.h.b16 %v771
    %v1371 = vunpack.c.l.b16 %v772
    %v1372 = vunpack.c.h.b16 %v772
    %v1373 = vunpack.c.l.b16 %v773
    %v1374 = vunpack.c.h.b16 %v773
    %v1375 = vunpack.c.l.b16 %v774
    %v1376 = vunpack.c.h.b16 %v774
    %v1377 = vunpack.c.l.b16 %v775
    %v1378 = vunpack.c.h.b16 %v775
    %v1379 = vunpack.c.l.b16 %v776
    %v1380 = vunpack.c.h.b16 %v776
    %v1381 = vunpack.c.l.b16 %v777
    %v1382 = vunpack.c.h.b16 %v777
    %v1383 = vunpack.c.l.b16 %v778
    %v1384 = vunpack.c.h.b16 %v778
    %v1385 = vunpack.c.l.b16 %v779
    %v1386 = vunpack.c.h.b16 %v779
    %v1387 = vunpack.c.l.b16 %v780
    %v1388 = vunpack.c.h.b16 %v780
    %v1389 = vunpack.c.l.b16 %v781
    %v1390 = vunpack.c.h.b16 %v781
    %v1391 = vunpack.c.l.b16 %v782
    %v1392 = vunpack.c.h.b16 %v782
    %v1393 = vunpack.c.l.b16 %v783
    %v1394 = vunpack.c.h.b16 %v783
    %v1395 = vunpack.c.l.b16 %v784
    %v1396 = vunpack.c.h.b16 %v784
    %v1397 = vunpack.c.l.b16 %v785
    %v1398 = vunpack.c.h.b16 %v785
    %v1399 = vunpack.c.l.b16 %v786
    %v1400 = vunpack.c.h.b16 %v786
    %v1401 = vunpack.c.l.b16 %v787
    %v1402 = vunpack.c.h.b16 %v787
    %v1403 = vunpack.c.l.b16 %v788
    %v1404 = vunpack.c.h.b16 %v788
    %v1405 = vunpack.c.l.b16 %v789
    %v1406 = vunpack.c.h.b16 %v789
    %v1407 = vunpack.c.l.b16 %v790
    %v1408 = vunpack.c.h.b16 %v790
    %v1409 = vunpack.c.l.b16 %v791
    %v1410 = vunpack.c.h.b16 %v791
    %v1411 = vunpack.c.l.b16 %v792
    %v1412 = vunpack.c.h.b16 %v792
    %v1413 = vunpack.c.l.b16 %v793
    %v1414 = vunpack.c.h.b16 %v793
    %v1415 = vunpack.c.l.b16 %v794
    %v1416 = vunpack.c.h.b16 %v794
    %v1417 = vunpack.c.l.b16 %v795
    %v1418 = vunpack.c.h.b16 %v795
    %v1419 = vunpack.c.l.b16 %v796
    %v1420 = vunpack.c.h.b16 %v796
    %v1421 = vunpack.c.l.b16 %v797
    %v1422 = vunpack.c.h.b16 %v797
    %v1423 = vunpack.c.l.b16 %v798
    %v1424 = vunpack.c.h.b16 %v798
    %v1425 = vunpack.c.l.b16 %v799
    %v1426 = vunpack.c.h.b16 %v799
    %v1427 = vunpack.c.l.b16 %v800
    %v1428 = vunpack.c.h.b16 %v800
    %v1429 = vunpack.c.l.b16 %v801
    %v1430 = vunpack.c.h.b16 %v801
    %v1431 = vunpack.c.l.b16 %v802
    %v1432 = vunpack.c.h.b16 %v802
    %v1433 = vunpack.c.l.b16 %v803
    %v1434 = vunpack.c.h.b16 %v803
    %v1435 = vunpack.c.l.b16 %v804
    %v1436 = vunpack.c.h.b16 %v804
    %v1437 = vunpack.c.l.b16 %v805
    %v1438 = vunpack.c.h.b16 %v805
    %v1439 = vunpack.c.l.b16 %v806
    %v1440 = vunpack.c.h.b16 %v806
    %v1441 = vunpack.c.l.b16 %v807
    %v1442 = vunpack.c.h.b16 %v807
    %v1443 = vunpack.c.l.b16 %v808
    %v1444 = vunpack.c.h.b16 %v808
    %v1445 = vunpack.c.l.b16 %v809
    %v1446 = vunpack.c.h.b16 %v809
    %v1447 = vunpack.c.l.b16 %v810
    %v1448 = vunpack.c.h.b16 %v810
    %v1449 = vunpack.c.l.b16 %v811
    %v1450 = vunpack.c.h.b16 %v811
    %v1451 = vunpack.c.l.b16 %v812
    %v1452 = vunpack.c.h.b16 %v812
    %v1453 = vunpack.c.l.b16 %v813
    %v1454 = vunpack.c.h.b16 %v813
    %v1455 = vunpack.c.l.b16 %v814
    %v1456 = vunpack.c.h.b16 %v814
    %v1457 = vunpack.c.l.b16 %v815
    %v1458 = vunpack.c.h.b16 %v815
    %v1459 = vunpack.c.l.b16 %v816
    %v1460 = vunpack.c.h.b16 %v816
    %v1461 = vunpack.c.l.b16 %v817
    %v1462 = vunpack.c.h.b16 %v817
    %v1463 = vunpack.c.l.b16 %v818
    %v1464 = vunpack.c.h.b16 %v818
    %v1465 = vunpack.c.l.b16 %v819
    %v1466 = vunpack.c.h.b16 %v819
    %v1467 = vunpack.c.l.b16 %v820
    %v1468 = vunpack.c.h.b16 %v820
    %v1469 = vunpack.c.l.b16 %v821
    %v1470 = vunpack.c.h.b16 %v821
    %v1471 = vunpack.c.l.b16 %v822
    %v1472 = vunpack.c.h.b16 %v822
    %v1473 = vunpack.c.l.b16 %v823
    %v1474 = vunpack.c.h.b16 %v823
    %v1475 = vunpack.c.l.b16 %v824
    %v1476 = vunpack.c.h.b16 %v824
    %v1477 = vunpack.c.l.b16 %v825
    %v1478 = vunpack.c.h.b16 %v825
    %v1479 = vunpack.c.l.b16 %v826
    %v1480 = vunpack.c.h.b16 %v826
    %v1481 = vunpack.c.l.b16 %v827
    %v1482 = vunpack.c.h.b16 %v827
    %v1483 = vunpack.c.l.b16 %v828
    %v1484 = vunpack.c.h.b16 %v828
    %v1485 = vunpack.c.l.b16 %v829
    %v1486 = vunpack.c.h.b16 %v829
    %v1487 = vunpack.c.l.b16 %v830
    %v1488 = vunpack.c.h.b16 %v830
    %v1489 = vunpack.c.l.b16 %v831
    %v1490 = vunpack.c.h.b16 %v831
    %v1491 = vunpack.c.l.b16 %v832
    %v1492 = vunpack.c.h.b16 %v832
    %v1493 = vunpack.c.l.b16 %v833
    %v1494 = vunpack.c.h.b16 %v833
    %v1495 = vunpack.c.l.b16 %v834
    %v1496 = vunpack.c.h.b16 %v834
    %v1497 = vunpack.c.l.b16 %v835
    %v1498 = vunpack.c.h.b16 %v835
    %v1499 = vunpack.c.l.b16 %v836
    %v1500 = vunpack.c.h.b16 %v836
    %v1501 = vunpack.c.l.b16 %v837
    %v1502 = vunpack.c.h.b16 %v837
    %v1503 = vunpack.c.l.b16 %v838
    %v1504 = vunpack.c.h.b16 %v838
    %v1505 = vunpack.c.l.b16 %v839
    %v1506 = vunpack.c.h.b16 %v839
    %v1507 = vunpack.c.l.b16 %v840
    %v1508 = vunpack.c.h.b16 %v840
    %v1509 = vunpack.c.l.b16 %v841
    %v1510 = vunpack.c.h.b16 %v841
    %v1511 = vunpack.c.l.b16 %v842
    %v1512 = vunpack.c.h.b16 %v842
    %v1513 = vunpack.c.l.b16 %v843
    %v1514 = vunpack.c.h.b16 %v843
    %v1515 = vunpack.c.l.b16 %v844
    %v1516 = vunpack.c.h.b16 %v844
    %v1517 = vunpack.c.l.b16 %v845
    %v1518 = vunpack.c.h.b16 %v845
    %v1519 = vunpack.c.l.b16 %v846
    %v1520 = vunpack.c.h.b16 %v846
    %v1521 = vunpack.c.l.b16 %v847
    %v1522 = vunpack.c.h.b16 %v847
    %v1523 = vunpack.c.l.b16 %v848
    %v1524 = vunpack.c.h.b16 %v848
    %v1525 = vunpack.c.l.b16 %v849
    %v1526 = vunpack.c.h.b16 %v849
    %v1527 = vunpack.c.l.b16 %v850
    %v1528 = vunpack.c.h.b16 %v850
    %v1529 = vunpack.c.l.b16 %v851
    %v1530 = vunpack.c.h.b16 %v851
    %v1531 = vunpack.c.l.b16 %v852
    %v1532 = vunpack.c.h.b16 %v852
    %v1533 = vunpack.c.l.b16 %v853
    %v1534 = vunpack.c.h.b16 %v853
    %v1535 = vunpack.c.l.b16 %v854
    %v1536 = vunpack.c.h.b16 %v854
    %v1537 = vunpack.c.l.b16 %v855
    %v1538 = vunpack.c.h.b16 %v855
    %v1539 = vunpack.c.l.b16 %v856
    %v1540 = vunpack.c.h.b16 %v856
    %v1541 = vunpack.c.l.b16 %v857
    %v1542 = vunpack.c.h.b16 %v857
    %v1543 = vunpack.c.l.b16 %v858
    %v1544 = vunpack.c.h.b16 %v858
    %v1545 = vunpack.c.l.b16 %v859
    %v1546 = vunpack.c.h.b16 %v859
    %v1547 = vunpack.c.l.b16 %v860
    %v1548 = vunpack.c.h.b16 %v860
    %v1549 = vunpack.c.l.b16 %v861
    %v1550 = vunpack.c.h.b16 %v861
    %v1551 = vunpack.c.l.b16 %v862
    %v1552 = vunpack.c.h.b16 %v862
    %v1553 = vunpack.c.l.b16 %v863
    %v1554 = vunpack.c.h.b16 %v863
    %v1555 = vunpack.c.l.b16 %v864
    %v1556 = vunpack.c.h.b16 %v864
    %v1557 = vunpack.c.l.b16 %v865
    %v1558 = vunpack.c.h.b16 %v865
    %v1559 = vunpack.c.l.b16 %v866
    %v1560 = vunpack.c.h.b16 %v866
    %v1561 = vunpack.c.l.b16 %v867
    %v1562 = vunpack.c.h.b16 %v867
    %v1563 = vunpack.c.l.b16 %v868
    %v1564 = vunpack.c.h.b16 %v868
    %v1565 = vunpack.c.l.b16 %v869
    %v1566 = vunpack.c.h.b16 %v869
    %v1567 = vunpack.c.l.b16 %v870
    %v1568 = vunpack.c.h.b16 %v870
    %v1569 = vunpack.c.l.b16 %v871
    %v1570 = vunpack.c.h.b16 %v871
    %v1571 = vunpack.c.l.b16 %v872
    %v1572 = vunpack.c.h.b16 %v872
    %v1573 = vunpack.c.l.b16 %v873
    %v1574 = vunpack.c.h.b16 %v873
    %v1575 = vunpack.c.l.b16 %v874
    %v1576 = vunpack.c.h.b16 %v874
    %v1577 = vunpack.c.l.b16 %v875
    %v1578 = vunpack.c.h.b16 %v875
    %v1579 = vunpack.c.l.b16 %v876
    %v1580 = vunpack.c.h.b16 %v876
    %v1581 = vunpack.c.l.b16 %v877
    %v1582 = vunpack.c.h.b16 %v877
    %v1583 = vunpack.c.l.b16 %v878
    %v1584 = vunpack.c.h.b16 %v878
    %v1585 = vunpack.c.l.b16 %v879
    %v1586 = vunpack.c.h.b16 %v879
    %v1587 = vunpack.c.l.b16 %v880
    %v1588 = vunpack.c.h.b16 %v880
    %v1589 = vunpack.c.l.b16 %v881
    %v1590 = vunpack.c.h.b16 %v881
    %v1591 = vunpack.c.l.b16 %v882
    %v1592 = vunpack.c.h.b16 %v882
    %v1593 = vunpack.c.l.b16 %v883
    %v1594 = vunpack.c.h.b16 %v883
    %v1595 = vunpack.c.l.b16 %v884
    %v1596 = vunpack.c.h.b16 %v884
    %v1597 = vunpack.c.l.b16 %v885
    %v1598 = vunpack.c.h.b16 %v885
    %v1599 = vunpack.c.l.b16 %v886
    %v1600 = vunpack.c.h.b16 %v886
    %v1601 = vunpack.c.l.b16 %v887
    %v1602 = vunpack.c.h.b16 %v887
    %v1603 = vunpack.c.l.b16 %v888
    %v1604 = vunpack.c.h.b16 %v888
    %v1605 = vunpack.c.l.b16 %v889
    %v1606 = vunpack.c.h.b16 %v889
    %v1607 = vunpack.c.l.b16 %v890
    %v1608 = vunpack.c.h.b16 %v890
    %v1609 = vunpack.c.l.b16 %v891
    %v1610 = vunpack.c.h.b16 %v891
    %v1611 = vunpack.c.l.b16 %v892
    %v1612 = vunpack.c.h.b16 %v892
    %v1613 = vunpack.c.l.b16 %v893
    %v1614 = vunpack.c.h.b16 %v893
    %v1615 = vunpack.c.l.b16 %v894
    %v1616 = vunpack.c.h.b16 %v894
    %v1617 = vunpack.c.l.b16 %v895
    %v1618 = vunpack.c.h.b16 %v895
    %v1619 = vunpack.c.l.b16 %v896
    %v1620 = vunpack.c.h.b16 %v896
    %v1621 = vunpack.c.l.b16 %v897
    %v1622 = vunpack.c.h.b16 %v897
    %v1623 = vunpack.c.l.b16 %v898
    %v1624 = vunpack.c.h.b16 %v898
    %v1625 = vunpack.c.l.b16 %v899
    %v1626 = vunpack.c.h.b16 %v899
    %v1627 = vunpack.c.l.b16 %v900
    %v1628 = vunpack.c.h.b16 %v900
    %v1629 = vunpack.c.l.b16 %v901
    %v1630 = vunpack.c.h.b16 %v901
    %v1631 = vunpack.c.l.b16 %v902
    %v1632 = vunpack.c.h.b16 %v902
    %v1633 = vunpack.c.l.b16 %v903
    %v1634 = vunpack.c.h.b16 %v903
    %v1635 = vunpack.c.l.b16 %v904
    %v1636 = vunpack.c.h.b16 %v904
    %v1637 = vunpack.c.l.b16 %v905
    %v1638 = vunpack.c.h.b16 %v905
    %v1639 = vunpack.c.l.b16 %v906
    %v1640 = vunpack.c.h.b16 %v906
    %v1641 = vunpack.c.l.b16 %v907
    %v1642 = vunpack.c.h.b16 %v907
    %v1643 = vunpack.c.l.b16 %v908
    %v1644 = vunpack.c.h.b16 %v908
    %v1645 = vunpack.c.l.b16 %v909
    %v1646 = vunpack.c.h.b16 %v909
    %v1647 = vunpack.c.l.b16 %v910
    %v1648 = vunpack.c.h.b16 %v910
    %v1649 = vunpack.c.l.b16 %v911
    %v1650 = vunpack.c.h.b16 %v911
    %v1651 = vunpack.c.l.b16 %v912
    %v1652 = vunpack.c.h.b16 %v912
    %v1653 = vunpack.c.l.b16 %v913
    %v1654 = vunpack.c.h.b16 %v913
    %v1655 = vunpack.c.l.b16 %v914
    %v1656 = vunpack.c.h.b16 %v914
    %v1657 = vunpack.c.l.b16 %v915
    %v1658 = vunpack.c.h.b16 %v915
    %v1659 = vunpack.c.l.b16 %v916
    %v1660 = vunpack.c.h.b16 %v916
    %v1661 = vunpack.c.l.b16 %v917
    %v1662 = vunpack.c.h.b16 %v917
    %v1663 = vunpack.c.l.b16 %v918
    %v1664 = vunpack.c.h.b16 %v918
    %v1665 = vunpack.c.l.b16 %v919
    %v1666 = vunpack.c.h.b16 %v919
    %v1667 = vunpack.c.l.b16 %v920
    %v1668 = vunpack.c.h.b16 %v920
    %v1669 = vunpack.c.l.b16 %v921
    %v1670 = vunpack.c.h.b16 %v921
    %v1671 = vunpack.c.l.b16 %v922
    %v1672 = vunpack.c.h.b16 %v922
    %v1673 = vunpack.c.l.b16 %v923
    %v1674 = vunpack.c.h.b16 %v923
    %v1675 = vunpack.c.l.b16 %v924
    %v1676 = vunpack.c.h.b16 %v924
    %v1677 = vunpack.c.l.b16 %v925
    %v1678 = vunpack.c.h.b16 %v925
    %v1679 = vunpack.c.l.b16 %v926
    %v1680 = vunpack.c.h.b16 %v926
    %v1681 = vunpack.c.l.b16 %v927
    %v1682 = vunpack.c.h.b16 %v927
    %v1683 = vunpack.c.l.b16 %v928
    %v1684 = vunpack.c.h.b16 %v928
    %v1685 = vunpack.c.l.b16 %v929
    %v1686 = vunpack.c.h.b16 %v929
    %v1687 = vunpack.c.l.b16 %v930
    %v1688 = vunpack.c.h.b16 %v930
    %v1689 = vunpack.c.l.b16 %v931
    %v1690 = vunpack.c.h.b16 %v931
    %v1691 = vunpack.c.l.b16 %v932
    %v1692 = vunpack.c.h.b16 %v932
    %v1693 = vunpack.c.l.b16 %v933
    %v1694 = vunpack.c.h.b16 %v933
    %v1695 = vunpack.c.l.b16 %v934
    %v1696 = vunpack.c.h.b16 %v934
    %v1697 = vunpack.c.l.b16 %v935
    %v1698 = vunpack.c.h.b16 %v935
    %v1699 = vunpack.c.l.b16 %v936
    %v1700 = vunpack.c.h.b16 %v936
    %v1701 = vunpack.c.l.b16 %v937
    %v1702 = vunpack.c.h.b16 %v937
    %v1703 = vunpack.c.l.b16 %v938
    %v1704 = vunpack.c.h.b16 %v938
    %v1705 = vunpack.c.l.b16 %v939
    %v1706 = vunpack.c.h.b16 %v939
    %v1707 = vunpack.c.l.b16 %v940
    %v1708 = vunpack.c.h.b16 %v940
    %v1709 = vunpack.c.l.b16 %v941
    %v1710 = vunpack.c.h.b16 %v941
    %v1711 = vunpack.c.l.b16 %v942
    %v1712 = vunpack.c.h.b16 %v942
    %v1713 = vunpack.c.l.b16 %v943
    %v1714 = vunpack.c.h.b16 %v943
    %v1715 = vunpack.c.l.b16 %v944
    %v1716 = vunpack.c.h.b16 %v944
    %v1717 = vunpack.c.l.b16 %v945
    %v1718 = vunpack.c.h.b16 %v945
    %v1719 = vunpack.c.l.b16 %v946
    %v1720 = vunpack.c.h.b16 %v946
    %v1721 = vunpack.c.l.b16 %v947
    %v1722 = vunpack.c.h.b16 %v947
    %v1723 = vunpack.c.l.b16 %v948
    %v1724 = vunpack.c.h.b16 %v948
    %v1725 = vunpack.c.l.b16 %v949
    %v1726 = vunpack.c.h.b16 %v949
    %v1727 = vunpack.c.l.b16 %v950
    %v1728 = vunpack.c.h.b16 %v950
    %v1729 = vunpack.c.l.b16 %v951
    %v1730 = vunpack.c.h.b16 %v951
    %v1731 = vunpack.c.l.b16 %v952
    %v1732 = vunpack.c.h.b16 %v952
    %v1733 = vunpack.c.l.b16 %v953
    %v1734 = vunpack.c.h.b16 %v953
    %v1735 = vunpack.c.l.b16 %v954
    %v1736 = vunpack.c.h.b16 %v954
    %v1737 = vunpack.c.l.b16 %v955
    %v1738 = vunpack.c.h.b16 %v955
    %v1739 = vunpack.c.l.b16 %v956
    %v1740 = vunpack.c.h.b16 %v956
    %v1741 = vunpack.c.l.b16 %v957
    %v1742 = vunpack.c.h.b16 %v957
    %v1743 = vunpack.c.l.b16 %v958
    %v1744 = vunpack.c.h.b16 %v958
    %v1745 = vunpack.c.l.b16 %v959
    %v1746 = vunpack.c.h.b16 %v959
    %v1747 = vunpack.c.l.b16 %v960
    %v1748 = vunpack.c.h.b16 %v960
    %v1749 = vunpack.c.l.b16 %v961
    %v1750 = vunpack.c.h.b16 %v961
    %v1751 = vunpack.c.l.b16 %v962
    %v1752 = vunpack.c.h.b16 %v962
    %v1753 = vunpack.c.l.b16 %v963
    %v1754 = vunpack.c.h.b16 %v963
    %v1755 = vunpack.c.l.b16 %v964
    %v1756 = vunpack.c.h.b16 %v964
    %v1757 = vunpack.c.l.b16 %v965
    %v1758 = vunpack.c.h.b16 %v965
    %v1759 = vunpack.c.l.b16 %v966
    %v1760 = vunpack.c.h.b16 %v966
    %v1761 = vunpack.c.l.b16 %v967
    %v1762 = vunpack.c.h.b16 %v967
    %v1763 = vunpack.c.l.b16 %v968
    %v1764 = vunpack.c.h.b16 %v968
    %v1765 = vunpack.c.l.b16 %v969
    %v1766 = vunpack.c.h.b16 %v969
    %v1767 = vunpack.c.l.b16 %v970
    %v1768 = vunpack.c.h.b16 %v970
    %v1769 = vunpack.c.l.b16 %v971
    %v1770 = vunpack.c.h.b16 %v971
    %v1771 = vunpack.c.l.b16 %v972
    %v1772 = vunpack.c.h.b16 %v972
    %v1773 = vunpack.c.l.b16 %v973
    %v1774 = vunpack.c.h.b16 %v973
    %v1775 = vunpack.c.l.b16 %v974
    %v1776 = vunpack.c.h.b16 %v974
    %v1777 = vunpack.c.l.b16 %v975
    %v1778 = vunpack.c.h.b16 %v975
    %v1779 = vunpack.c.l.b16 %v976
    %v1780 = vunpack.c.h.b16 %v976
    %v1781 = vunpack.c.l.b16 %v977
    %v1782 = vunpack.c.h.b16 %v977
    %v1783 = vunpack.c.l.b16 %v978
    %v1784 = vunpack.c.h.b16 %v978
    %v1785 = vunpack.c.l.b16 %v979
    %v1786 = vunpack.c.h.b16 %v979
    %v1787 = vunpack.c.l.b16 %v980
    %v1788 = vunpack.c.h.b16 %v980
    %v1789 = vunpack.c.l.b16 %v981
    %v1790 = vunpack.c.h.b16 %v981
    %v1791 = vunpack.c.l.b16 %v982
    %v1792 = vunpack.c.h.b16 %v982
    %v1793 = vpack.c.b16 %v1289, %v1281
    %v1794 = vpack.c.b16 %v1290, %v1282
    %v1795 = vpack.c.b16 %v1291, %v1283
    %v1796 = vpack.c.b16 %v1292, %v1284
    %v1797 = vpack.c.b16 %v1293, %v1285
    %v1798 = vpack.c.b16 %v1294, %v1286
    %v1799 = vpack.c.b16 %v1295, %v1287
    %v1800 = vpack.c.b16 %v1296, %v1288
    %v1801 = vpack.c.b16 %v1305, %v1297
    %v1802 = vpack.c.b16 %v1306, %v1298
    %v1803 = vpack.c.b16 %v1307, %v1299
    %v1804 = vpack.c.b16 %v1308, %v1300
    %v1805 = vpack.c.b16 %v1309, %v1301
    %v1806 = vpack.c.b16 %v1310, %v1302
    %v1807 = vpack.c.b16 %v1311, %v1303
    %v1808 = vpack.c.b16 %v1312, %v1304
    %v1809 = vpack.c.b16 %v1321, %v1313
    %v1810 = vpack.c.b16 %v1322, %v1314
    %v1811 = vpack.c.b16 %v1323, %v1315
    %v1812 = vpack.c.b16 %v1324, %v1316
    %v1813 = vpack.c.b16 %v1325, %v1317
    %v1814 = vpack.c.b16 %v1326, %v1318
    %v1815 = vpack.c.b16 %v1327, %v1319
    %v1816 = vpack.c.b16 %v1328, %v1320
    %v1817 = vpack.c.b16 %v1337, %v1329
    %v1818 = vpack.c.b16 %v1338, %v1330
    %v1819 = vpack.c.b16 %v1339, %v1331
    %v1820 = vpack.c.b16 %v1340, %v1332
    %v1821 = vpack.c.b16 %v1341, %v1333
    %v1822 = vpack.c.b16 %v1342, %v1334
    %v1823 = vpack.c.b16 %v1343, %v1335
    %v1824 = vpack.c.b16 %v1344, %v1336
    %v1825 = vpack.c.b16 %v1353, %v1345
    %v1826 = vpack.c.b16 %v1354, %v1346
    %v1827 = vpack.c.b16 %v1355, %v1347
    %v1828 = vpack.c.b16 %v1356, %v1348
    %v1829 = vpack.c.b16 %v1357, %v1349
    %v1830 = vpack.c.b16 %v1358, %v1350
    %v1831 = vpack.c.b16 %v1359, %v1351
    %v1832 = vpack.c.b16 %v1360, %v1352
    %v1833 = vpack.c.b16 %v1369, %v1361
    %v1834 = vpack.c.b16 %v1370, %v1362
    %v1835 = vpack.c.b16 %v1371, %v1363
    %v1836 = vpack.c.b16 %v1372, %v1364
    %v1837 = vpack.c.b16 %v1373, %v1365
    %v1838 = vpack.c.b16 %v1374, %v1366
    %v1839 = vpack.c.b16 %v1375, %v1367
    %v1840 = vpack.c.b16 %v1376, %v1368
    %v1841 = vpack.c.b16 %v1385, %v1377
    %v1842 = vpack.c.b16 %v1386, %v1378
    %v1843 = vpack.c.b16 %v1387, %v1379
    %v1844 = vpack.c.b16 %v1388, %v1380
    %v1845 = vpack.c.b16 %v1389, %v1381
    %v1846 = vpack.c.b16 %v1390, %v1382
    %v1847 = vpack.c.b16 %v1391, %v1383
    %v1848 = vpack.c.b16 %v1392, %v1384
    %v1849 = vpack.c.b16 %v1401, %v1393
    %v1850 = vpack.c.b16 %v1402, %v1394
    %v1851 = vpack.c.b16 %v1403, %v1395
    %v1852 = vpack.c.b16 %v1404, %v1396
    %v1853 = vpack.c.b16 %v1405, %v1397
    %v1854 = vpack.c.b16 %v1406, %v1398
    %v1855 = vpack.c.b16 %v1407, %v1399
    %v1856 = vpack.c.b16 %v1408, %v1400
    %v1857 = vpack.c.b16 %v1417, %v1409
    %v1858 = vpack.c.b16 %v1418, %v1410
    %v1859 = vpack.c.b16 %v1419, %v1411
    %v1860 = vpack.c.b16 %v1420, %v1412
    %v1861 = vpack.c.b16 %v1421, %v1413
    %v1862 = vpack.c.b16 %v1422, %v1414
    %v1863 = vpack.c.b16 %v1423, %v1415
    %v1864 = vpack.c.b16 %v1424, %v1416
    %v1865 = vpack.c.b16 %v1433, %v1425
    %v1866 = vpack.c.b16 %v1434, %v1426
    %v1867 = vpack.c.b16 %v1435, %v1427
    %v1868 = vpack.c.b16 %v1436, %v1428
    %v1869 = vpack.c.b16 %v1437, %v1429
    %v1870 = vpack.c.b16 %v1438, %v1430
    %v1871 = vpack.c.b16 %v1439, %v1431
    %v1872 = vpack.c.b16 %v1440, %v1432
    %v1873 = vpack.c.b16 %v1449, %v1441
    %v1874 = vpack.c.b16 %v1450, %v1442
    %v1875 = vpack.c.b16 %v1451, %v1443
    %v1876 = vpack.c.b16 %v1452, %v1444
    %v1877 = vpack.c.b16 %v1453, %v1445
    %v1878 = vpack.c.b16 %v1454, %v1446
    %v1879 = vpack.c.b16 %v1455, %v1447
    %v1880 = vpack.c.b16 %v1456, %v1448
    %v1881 = vpack.c.b16 %v1465, %v1457
    %v1882 = vpack.c.b16 %v1466, %v1458
    %v1883 = vpack.c.b16 %v1467, %v1459
    %v1884 = vpack.c.b16 %v1468, %v1460
    %v1885 = vpack.c.b16 %v1469, %v1461
    %v1886 = vpack.c.b16 %v1470, %v1462
    %v1887 = vpack.c.b16 %v1471, %v1463
    %v1888 = vpack.c.b16 %v1472, %v1464
    %v1889 = vpack.c.b16 %v1481, %v1473
    %v1890 = vpack.c.b16 %v1482, %v1474
    %v1891 = vpack.c.b16 %v1483, %v1475
    %v1892 = vpack.c.b16 %v1484, %v1476
    %v1893 = vpack.c.b16 %v1485, %v1477
    %v1894 = vpack.c.b16 %v1486, %v1478
    %v1895 = vpack.c.b16 %v1487, %v1479
    %v1896 = vpack.c.b16 %v1488, %v1480
    %v1897 = vpack.c.b16 %v1497, %v1489
    %v1898 = vpack.c.b16 %v1498, %v1490
    %v1899 = vpack.c.b16 %v1499, %v1491
    %v1900 = vpack.c.b16 %v1500, %v1492
    %v1901 = vpack.c.b16 %v1501, %v1493
    %v1902 = vpack.c.b16 %v1502, %v1494
    %v1903 = vpack.c.b16 %v1503, %v1495
    %v1904 = vpack.c.b16 %v1504, %v1496
    %v1905 = vpack.c.b16 %v1513, %v1505
    %v1906 = vpack.c.b16 %v1514, %v1506
    %v1907 = vpack.c.b16 %v1515, %v1507
    %v1908 = vpack.c.b16 %v1516, %v1508
    %v1909 = vpack.c.b16 %v1517, %v1509
    %v1910 = vpack.c.b16 %v1518, %v1510
    %v1911 = vpack.c.b16 %v1519, %v1511
    %v1912 = vpack.c.b16 %v1520, %v1512
    %v1913 = vpack.c.b16 %v1529, %v1521
    %v1914 = vpack.c.b16 %v1530, %v1522
    %v1915 = vpack.c.b16 %v1531, %v1523
    %v1916 = vpack.c.b16 %v1532, %v1524
    %v1917 = vpack.c.b16 %v1533, %v1525
    %v1918 = vpack.c.b16 %v1534, %v1526
    %v1919 = vpack.c.b16 %v1535, %v1527
    %v1920 = vpack.c.b16 %v1536, %v1528
    %v1921 = vpack.c.b16 %v1545, %v1537
    %v1922 = vpack.c.b16 %v1546, %v1538
    %v1923 = vpack.c.b16 %v1547, %v1539
    %v1924 = vpack.c.b16 %v1548, %v1540
    %v1925 = vpack.c.b16 %v1549, %v1541
    %v1926 = vpack.c.b16 %v1550, %v1542
    %v1927 = vpack.c.b16 %v1551, %v1543
    %v1928 = vpack.c.b16 %v1552, %v1544
    %v1929 = vpack.c.b16 %v1561, %v1553
    %v1930 = vpack.c.b16 %v1562, %v1554
    %v1931 = vpack.c.b16 %v1563, %v1555
    %v1932 = vpack.c.b16 %v1564, %v1556
    %v1933 = vpack.c.b16 %v1565, %v1557
    %v1934 = vpack.c.b16 %v1566, %v1558
    %v1935 = vpack.c.b16 %v1567, %v1559
    %v1936 = vpack.c.b16 %v1568, %v1560
    %v1937 = vpack.c.b16 %v1577, %v1569
    %v1938 = vpack.c.b16 %v1578, %v1570
    %v1939 = vpack.c.b16 %v1579, %v1571
    %v1940 = vpack.c.b16 %v1580, %v1572
    %v1941 = vpack.c.b16 %v1581, %v1573
    %v1942 = vpack.c.b16 %v1582, %v1574
    %v1943 = vpack.c.b16 %v1583, %v1575
    %v1944 = vpack.c.b16 %v1584, %v1576
    %v1945 = vpack.c.b16 %v1593, %v1585
    %v1946 = vpack.c.b16 %v1594, %v1586
    %v1947 = vpack.c.b16 %v1595, %v1587
    %v1948 = vpack.c.b16 %v1596, %v1588
    %v1949 = vpack.c.b16 %v1597, %v1589
    %v1950 = vpack.c.b16 %v1598, %v1590
    %v1951 = vpack.c.b16 %v1599, %v1591
    %v1952 = vpack.c.b16 %v1600, %v1592
    %v1953 = vpack.c.b16 %v1609, %v1601
    %v1954 = vpack.c.b16 %v1610, %v1602
    %v1955 = vpack.c.b16 %v1611, %v1603
    %v1956 = vpack.c.b16 %v1612, %v1604
    %v1957 = vpack.c.b16 %v1613, %v1605
    %v1958 = vpack.c.b16 %v1614, %v1606
    %v1959 = vpack.c.b16 %v1615, %v1607
    %v1960 = vpack.c.b16 %v1616, %v1608
    %v1961 = vpack.c.b16 %v1625, %v1617
    %v1962 = vpack.c.b16 %v1626, %v1618
    %v1963 = vpack.c.b16 %v1627, %v1619
    %v1964 = vpack.c.b16 %v1628, %v1620
    %v1965 = vpack.c.b16 %v1629, %v1621
    %v1966 = vpack.c.b16 %v1630, %v1622
    %v1967 = vpack.c.b16 %v1631, %v1623
    %v1968 = vpack.c.b16 %v1632, %v1624
    %v1969 = vpack.c.b16 %v1641, %v1633
    %v1970 = vpack.c.b16 %v1642, %v1634
    %v1971 = vpack.c.b16 %v1643, %v1635
    %v1972 = vpack.c.b16 %v1644, %v1636
    %v1973 = vpack.c.b16 %v1645, %v1637
    %v1974 = vpack.c.b16 %v1646, %v1638
    %v1975 = vpack.c.b16 %v1647, %v1639
    %v1976 = vpack.c.b16 %v1648, %v1640
    %v1977 = vpack.c.b16 %v1657, %v1649
    %v1978 = vpack.c.b16 %v1658, %v1650
    %v1979 = vpack.c.b16 %v1659, %v1651
    %v1980 = vpack.c.b16 %v1660, %v1652
    %v1981 = vpack.c.b16 %v1661, %v1653
    %v1982 = vpack.c.b16 %v1662, %v1654
    %v1983 = vpack.c.b16 %v1663, %v1655
    %v1984 = vpack.c.b16 %v1664, %v1656
    %v1985 = vpack.c.b16 %v1673, %v1665
    %v1986 = vpack.c.b16 %v1674, %v1666
    %v1987 = vpack.c.b16 %v1675, %v1667
    %v1988 = vpack.c.b16 %v1676, %v1668
    %v1989 = vpack.c.b16 %v1677, %v1669
    %v1990 = vpack.c.b16 %v1678, %v1670
    %v1991 = vpack.c.b16 %v1679, %v1671
    %v1992 = vpack.c.b16 %v1680, %v1672
    %v1993 = vpack.c.b16 %v1689, %v1681
    %v1994 = vpack.c.b16 %v1690, %v1682
    %v1995 = vpack.c.b16 %v1691, %v1683
    %v1996 = vpack.c.b16 %v1692, %v1684
    %v1997 = vpack.c.b16 %v1693, %v1685
    %v1998 = vpack.c.b16 %v1694, %v1686
    %v1999 = vpack.c.b16 %v1695, %v1687
    %v2000 = vpack.c.b16 %v1696, %v1688
    %v2001 = vpack.c.b16 %v1705, %v1697
    %v2002 = vpack.c.b16 %v1706, %v1698
    %v2003 = vpack.c.b16 %v1707, %v1699
    %v2004 = vpack.c.b16 %v1708, %v1700
    %v2005 = vpack.c.b16 %v1709, %v1701
    %v2006 = vpack.c.b16 %v1710, %v1702
    %v2007 = vpack.c.b16 %v1711, %v1703
    %v2008 = vpack.c.b16 %v1712, %v1704
    %v2009 = vpack.c.b16 %v1721, %v1713
    %v2010 = vpack.c.b16 %v1722, %v1714
    %v2011 = vpack.c.b16 %v1723, %v1715
    %v2012 = vpack.c.b16 %v1724, %v1716
    %v2013 = vpack.c.b16 %v1725, %v1717
    %v2014 = vpack.c.b16 %v1726, %v1718
    %v2015 = vpack.c.b16 %v1727, %v1719
    %v2016 = vpack.c.b16 %v1728, %v1720
    %v2017 = vpack.c.b16 %v1737, %v1729
    %v2018 = vpack.c.b16 %v1738, %v1730
    %v2019 = vpack.c.b16 %v1739, %v1731
    %v2020 = vpack.c.b16 %v1740, %v1732
    %v2021 = vpack.c.b16 %v1741, %v1733
    %v2022 = vpack.c.b16 %v1742, %v1734
    %v2023 = vpack.c.b16 %v1743, %v1735
    %v2024 = vpack.c.b16 %v1744, %v1736
    %v2025 = vpack.c.b16 %v1753, %v1745
    %v2026 = vpack.c.b16 %v1754, %v1746
    %v2027 = vpack.c.b16 %v1755, %v1747
    %v2028 = vpack.c.b16 %v1756, %v1748
    %v2029 = vpack.c.b16 %v1757, %v1749
    %v2030 = vpack.c.b16 %v1758, %v1750
    %v2031 = vpack.c.b16 %v1759, %v1751
    %v2032 = vpack.c.b16 %v1760, %v1752
    %v2033 = vpack.c.b16 %v1769, %v1761
    %v2034 = vpack.c.b16 %v1770, %v1762
    %v2035 = vpack.c.b16 %v1771, %v1763
    %v2036 = vpack.c.b16 %v1772, %v1764
    %v2037 = vpack.c.b16 %v1773, %v1765
    %v2038 = vpack.c.b16 %v1774, %v1766
    %v2039 = vpack.c.b16 %v1775, %v1767
    %v2040 = vpack.c.b16 %v1776, %v1768
    %v2041 = vpack.c.b16 %v1785, %v1777
    %v2042 = vpack.c.b16 %v1786, %v1778
    %v2043 = vpack.c.b16 %v1787, %v1779
    %v2044 = vpack.c.b16 %v1788, %v1780
    %v2045 = vpack.c.b16 %v1789, %v1781
    %v2046 = vpack.c.b16 %v1790, %v1782
    %v2047 = vpack.c.b16 %v1791, %v1783
    %v2048 = vpack.c.b16 %v1792, %v1784
    %2305 = vmatprep.subr.bf16.mxu0 %v1850
    %2306 = vmatpush1.bf16.msra.mxu0 %v1849
    %2307 = vmatprep.subr.bf16.mxu0 %v1842
    %2308 = vmatpush1.bf16.msra.mxu0 %v1841
    %2309 = vmatprep.subr.bf16.mxu0 %v1834
    %2310 = vmatpush1.bf16.msra.mxu0 %v1833
    %2311 = vmatprep.subr.bf16.mxu0 %v1826
    %2312 = vmatpush1.bf16.msra.mxu0 %v1825
    %2313 = vmatprep.subr.bf16.mxu0 %v1818
    %2314 = vmatpush1.bf16.msra.mxu0 %v1817
    %2315 = vmatprep.subr.bf16.mxu0 %v1810
    %2316 = vmatpush1.bf16.msra.mxu0 %v1809
    %2317 = vmatprep.subr.bf16.mxu0 %v1802
    %2318 = vmatpush1.bf16.msra.mxu0 %v1801
    %2319 = vmatprep.subr.bf16.mxu0 %v1794
    %2320 = vmatpush1.bf16.msra.mxu0 %v1793
    %2321 = vmatprep.subr.bf16.mxu0 %v1914
    %2322 = vmatpush2.bf16.msra.mxu0 %v1913
    %2323 = vmatprep.subr.bf16.mxu0 %v1906
    %2324 = vmatpush2.bf16.msra.mxu0 %v1905
    %2325 = vmatprep.subr.bf16.mxu0 %v1898
    %2326 = vmatpush2.bf16.msra.mxu0 %v1897
    %2327 = vmatprep.subr.bf16.mxu0 %v1890
    %2328 = vmatpush2.bf16.msra.mxu0 %v1889
    %2329 = vmatprep.subr.bf16.mxu0 %v1882
    %2330 = vmatpush2.bf16.msra.mxu0 %v1881
    %2331 = vmatprep.subr.bf16.mxu0 %v1874
    %2332 = vmatpush2.bf16.msra.mxu0 %v1873
    %2333 = vmatprep.subr.bf16.mxu0 %v1866
    %2334 = vmatpush2.bf16.msra.mxu0 %v1865
    %2335 = vmatprep.subr.bf16.mxu0 %v1858
    %2336 = vmatpush2.bf16.msra.mxu0 %v1857
    %2337 = vmatprep.mubr.bf16.mxu0 %v724
    %2338 = vmatmul.mubr.bf16.gmra.mxu0 %v723
    %v2339 = vpop.f32.mrf.mxu0
    %v2340 = vadd.f32 %v988, %v2339
    %v2341 = vpop.f32.mrf.mxu0
    %v2342 = vadd.f32 %v992, %v2341
    %v2343 = vpop.f32.mrf.mxu0
    %v2344 = vadd.f32 %v988, %v2343
    %v2345 = vpop.f32.mrf.mxu0
    %v2346 = vadd.f32 %v992, %v2345
    %2347 = vdwg.mxu0
    %2348 = vmatprep.subr.bf16.mxu0 %v1978
    %2349 = vmatpush1.bf16.msra.mxu0 %v1977
    %2350 = vmatprep.subr.bf16.mxu0 %v1970
    %2351 = vmatpush1.bf16.msra.mxu0 %v1969
    %2352 = vmatprep.subr.bf16.mxu0 %v1962
    %2353 = vmatpush1.bf16.msra.mxu0 %v1961
    %2354 = vmatprep.subr.bf16.mxu0 %v1954
    %2355 = vmatpush1.bf16.msra.mxu0 %v1953
    %2356 = vmatprep.subr.bf16.mxu0 %v1946
    %2357 = vmatpush1.bf16.msra.mxu0 %v1945
    %2358 = vmatprep.subr.bf16.mxu0 %v1938
    %2359 = vmatpush1.bf16.msra.mxu0 %v1937
    %2360 = vmatprep.subr.bf16.mxu0 %v1930
    %2361 = vmatpush1.bf16.msra.mxu0 %v1929
    %2362 = vmatprep.subr.bf16.mxu0 %v1922
    %2363 = vmatpush1.bf16.msra.mxu0 %v1921
    %2364 = vmatprep.subr.bf16.mxu0 %v2042
    %2365 = vmatpush2.bf16.msra.mxu0 %v2041
    %2366 = vmatprep.subr.bf16.mxu0 %v2034
    %2367 = vmatpush2.bf16.msra.mxu0 %v2033
    %2368 = vmatprep.subr.bf16.mxu0 %v2026
    %2369 = vmatpush2.bf16.msra.mxu0 %v2025
    %2370 = vmatprep.subr.bf16.mxu0 %v2018
    %2371 = vmatpush2.bf16.msra.mxu0 %v2017
    %2372 = vmatprep.subr.bf16.mxu0 %v2010
    %2373 = vmatpush2.bf16.msra.mxu0 %v2009
    %2374 = vmatprep.subr.bf16.mxu0 %v2002
    %2375 = vmatpush2.bf16.msra.mxu0 %v2001
    %2376 = vmatprep.subr.bf16.mxu0 %v1994
    %2377 = vmatpush2.bf16.msra.mxu0 %v1993
    %2378 = vmatprep.subr.bf16.mxu0 %v1986
    %2379 = vmatpush2.bf16.msra.mxu0 %v1985
    %2380 = vmatprep.mubr.bf16.mxu0 %v726
    %2381 = vmatmul.mubr.bf16.gmra.mxu0 %v725
    %v2382 = vpop.f32.mrf.mxu0
    %v2383 = vadd.f32 %v2340, %v2382
    %v2384 = vpop.f32.mrf.mxu0
    %v2385 = vadd.f32 %v2342, %v2384
    %v2386 = vpop.f32.mrf.mxu0
    %v2387 = vadd.f32 %v2344, %v2386
    %v2388 = vpop.f32.mrf.mxu0
    %v2389 = vadd.f32 %v2346, %v2388
    %2390 = vdwg.mxu0
    %2391 = vmatprep.subr.bf16.mxu0 %v1852
    %2392 = vmatpush1.bf16.msra.mxu0 %v1851
    %2393 = vmatprep.subr.bf16.mxu0 %v1844
    %2394 = vmatpush1.bf16.msra.mxu0 %v1843
    %2395 = vmatprep.subr.bf16.mxu0 %v1836
    %2396 = vmatpush1.bf16.msra.mxu0 %v1835
    %2397 = vmatprep.subr.bf16.mxu0 %v1828
    %2398 = vmatpush1.bf16.msra.mxu0 %v1827
    %2399 = vmatprep.subr.bf16.mxu0 %v1820
    %2400 = vmatpush1.bf16.msra.mxu0 %v1819
    %2401 = vmatprep.subr.bf16.mxu0 %v1812
    %2402 = vmatpush1.bf16.msra.mxu0 %v1811
    %2403 = vmatprep.subr.bf16.mxu0 %v1804
    %2404 = vmatpush1.bf16.msra.mxu0 %v1803
    %2405 = vmatprep.subr.bf16.mxu0 %v1796
    %2406 = vmatpush1.bf16.msra.mxu0 %v1795
    %2407 = vmatprep.subr.bf16.mxu0 %v1916
    %2408 = vmatpush2.bf16.msra.mxu0 %v1915
    %2409 = vmatprep.subr.bf16.mxu0 %v1908
    %2410 = vmatpush2.bf16.msra.mxu0 %v1907
    %2411 = vmatprep.subr.bf16.mxu0 %v1900
    %2412 = vmatpush2.bf16.msra.mxu0 %v1899
    %2413 = vmatprep.subr.bf16.mxu0 %v1892
    %2414 = vmatpush2.bf16.msra.mxu0 %v1891
    %2415 = vmatprep.subr.bf16.mxu0 %v1884
    %2416 = vmatpush2.bf16.msra.mxu0 %v1883
    %2417 = vmatprep.subr.bf16.mxu0 %v1876
    %2418 = vmatpush2.bf16.msra.mxu0 %v1875
    %2419 = vmatprep.subr.bf16.mxu0 %v1868
    %2420 = vmatpush2.bf16.msra.mxu0 %v1867
    %2421 = vmatprep.subr.bf16.mxu0 %v1860
    %2422 = vmatpush2.bf16.msra.mxu0 %v1859
    %2423 = vmatprep.mubr.bf16.mxu0 %v724
    %2424 = vmatmul.mubr.bf16.gmra.mxu0 %v723
    %v2425 = vpop.f32.mrf.mxu0
    %v2426 = vadd.f32 %v996, %v2425
    %v2427 = vpop.f32.mrf.mxu0
    %v2428 = vadd.f32 %v1000, %v2427
    %v2429 = vpop.f32.mrf.mxu0
    %v2430 = vadd.f32 %v996, %v2429
    %v2431 = vpop.f32.mrf.mxu0
    %v2432 = vadd.f32 %v1000, %v2431
    %2433 = vdwg.mxu0
    %2434 = vmatprep.subr.bf16.mxu0 %v1980
    %2435 = vmatpush1.bf16.msra.mxu0 %v1979
    %2436 = vmatprep.subr.bf16.mxu0 %v1972
    %2437 = vmatpush1.bf16.msra.mxu0 %v1971
    %2438 = vmatprep.subr.bf16.mxu0 %v1964
    %2439 = vmatpush1.bf16.msra.mxu0 %v1963
    %2440 = vmatprep.subr.bf16.mxu0 %v1956
    %2441 = vmatpush1.bf16.msra.mxu0 %v1955
    %2442 = vmatprep.subr.bf16.mxu0 %v1948
    %2443 = vmatpush1.bf16.msra.mxu0 %v1947
    %2444 = vmatprep.subr.bf16.mxu0 %v1940
    %2445 = vmatpush1.bf16.msra.mxu0 %v1939
    %2446 = vmatprep.subr.bf16.mxu0 %v1932
    %2447 = vmatpush1.bf16.msra.mxu0 %v1931
    %2448 = vmatprep.subr.bf16.mxu0 %v1924
    %2449 = vmatpush1.bf16.msra.mxu0 %v1923
    %2450 = vmatprep.subr.bf16.mxu0 %v2044
    %2451 = vmatpush2.bf16.msra.mxu0 %v2043
    %2452 = vmatprep.subr.bf16.mxu0 %v2036
    %2453 = vmatpush2.bf16.msra.mxu0 %v2035
    %2454 = vmatprep.subr.bf16.mxu0 %v2028
    %2455 = vmatpush2.bf16.msra.mxu0 %v2027
    %2456 = vmatprep.subr.bf16.mxu0 %v2020
    %2457 = vmatpush2.bf16.msra.mxu0 %v2019
    %2458 = vmatprep.subr.bf16.mxu0 %v2012
    %2459 = vmatpush2.bf16.msra.mxu0 %v2011
    %2460 = vmatprep.subr.bf16.mxu0 %v2004
    %2461 = vmatpush2.bf16.msra.mxu0 %v2003
    %2462 = vmatprep.subr.bf16.mxu0 %v1996
    %2463 = vmatpush2.bf16.msra.mxu0 %v1995
    %2464 = vmatprep.subr.bf16.mxu0 %v1988
    %2465 = vmatpush2.bf16.msra.mxu0 %v1987
    %2466 = vmatprep.mubr.bf16.mxu0 %v726
    %2467 = vmatmul.mubr.bf16.gmra.mxu0 %v725
    %v2468 = vpop.f32.mrf.mxu0
    %v2469 = vadd.f32 %v2426, %v2468
    %v2470 = vpop.f32.mrf.mxu0
    %v2471 = vadd.f32 %v2428, %v2470
    %v2472 = vpop.f32.mrf.mxu0
    %v2473 = vadd.f32 %v2430, %v2472
    %v2474 = vpop.f32.mrf.mxu0
    %v2475 = vadd.f32 %v2432, %v2474
    %2476 = vdwg.mxu0
    %2477 = vmatprep.subr.bf16.mxu0 %v1854
    %2478 = vmatpush1.bf16.msra.mxu0 %v1853
    %2479 = vmatprep.subr.bf16.mxu0 %v1846
    %2480 = vmatpush1.bf16.msra.mxu0 %v1845
    %2481 = vmatprep.subr.bf16.mxu0 %v1838
    %2482 = vmatpush1.bf16.msra.mxu0 %v1837
    %2483 = vmatprep.subr.bf16.mxu0 %v1830
    %2484 = vmatpush1.bf16.msra.mxu0 %v1829
    %2485 = vmatprep.subr.bf16.mxu0 %v1822
    %2486 = vmatpush1.bf16.msra.mxu0 %v1821
    %2487 = vmatprep.subr.bf16.mxu0 %v1814
    %2488 = vmatpush1.bf16.msra.mxu0 %v1813
    %2489 = vmatprep.subr.bf16.mxu0 %v1806
    %2490 = vmatpush1.bf16.msra.mxu0 %v1805
    %2491 = vmatprep.subr.bf16.mxu0 %v1798
    %2492 = vmatpush1.bf16.msra.mxu0 %v1797
    %2493 = vmatprep.subr.bf16.mxu0 %v1918
    %2494 = vmatpush2.bf16.msra.mxu0 %v1917
    %2495 = vmatprep.subr.bf16.mxu0 %v1910
    %2496 = vmatpush2.bf16.msra.mxu0 %v1909
    %2497 = vmatprep.subr.bf16.mxu0 %v1902
    %2498 = vmatpush2.bf16.msra.mxu0 %v1901
    %2499 = vmatprep.subr.bf16.mxu0 %v1894
    %2500 = vmatpush2.bf16.msra.mxu0 %v1893
    %2501 = vmatprep.subr.bf16.mxu0 %v1886
    %2502 = vmatpush2.bf16.msra.mxu0 %v1885
    %2503 = vmatprep.subr.bf16.mxu0 %v1878
    %2504 = vmatpush2.bf16.msra.mxu0 %v1877
    %2505 = vmatprep.subr.bf16.mxu0 %v1870
    %2506 = vmatpush2.bf16.msra.mxu0 %v1869
    %2507 = vmatprep.subr.bf16.mxu0 %v1862
    %2508 = vmatpush2.bf16.msra.mxu0 %v1861
    %2509 = vmatprep.mubr.bf16.mxu0 %v724
    %2510 = vmatmul.mubr.bf16.gmra.mxu0 %v723
    %v2511 = vpop.f32.mrf.mxu0
    %v2512 = vadd.f32 %v1004, %v2511
    %v2513 = vpop.f32.mrf.mxu0
    %v2514 = vadd.f32 %v1008, %v2513
    %v2515 = vpop.f32.mrf.mxu0
    %v2516 = vadd.f32 %v1004, %v2515
    %v2517 = vpop.f32.mrf.mxu0
    %v2518 = vadd.f32 %v1008, %v2517
    %2519 = vdwg.mxu0
    %2520 = vmatprep.subr.bf16.mxu0 %v1982
    %2521 = vmatpush1.bf16.msra.mxu0 %v1981
    %2522 = vmatprep.subr.bf16.mxu0 %v1974
    %2523 = vmatpush1.bf16.msra.mxu0 %v1973
    %2524 = vmatprep.subr.bf16.mxu0 %v1966
    %2525 = vmatpush1.bf16.msra.mxu0 %v1965
    %2526 = vmatprep.subr.bf16.mxu0 %v1958
    %2527 = vmatpush1.bf16.msra.mxu0 %v1957
    %2528 = vmatprep.subr.bf16.mxu0 %v1950
    %2529 = vmatpush1.bf16.msra.mxu0 %v1949
    %2530 = vmatprep.subr.bf16.mxu0 %v1942
    %2531 = vmatpush1.bf16.msra.mxu0 %v1941
    %2532 = vmatprep.subr.bf16.mxu0 %v1934
    %2533 = vmatpush1.bf16.msra.mxu0 %v1933
    %2534 = vmatprep.subr.bf16.mxu0 %v1926
    %2535 = vmatpush1.bf16.msra.mxu0 %v1925
    %2536 = vmatprep.subr.bf16.mxu0 %v2046
    %2537 = vmatpush2.bf16.msra.mxu0 %v2045
    %2538 = vmatprep.subr.bf16.mxu0 %v2038
    %2539 = vmatpush2.bf16.msra.mxu0 %v2037
    %2540 = vmatprep.subr.bf16.mxu0 %v2030
    %2541 = vmatpush2.bf16.msra.mxu0 %v2029
    %2542 = vmatprep.subr.bf16.mxu0 %v2022
    %2543 = vmatpush2.bf16.msra.mxu0 %v2021
    %2544 = vmatprep.subr.bf16.mxu0 %v2014
    %2545 = vmatpush2.bf16.msra.mxu0 %v2013
    %2546 = vmatprep.subr.bf16.mxu0 %v2006
    %2547 = vmatpush2.bf16.msra.mxu0 %v2005
    %2548 = vmatprep.subr.bf16.mxu0 %v1998
    %2549 = vmatpush2.bf16.msra.mxu0 %v1997
    %2550 = vmatprep.subr.bf16.mxu0 %v1990
    %2551 = vmatpush2.bf16.msra.mxu0 %v1989
    %2552 = vmatprep.mubr.bf16.mxu0 %v726
    %2553 = vmatmul.mubr.bf16.gmra.mxu0 %v725
    %v2554 = vpop.f32.mrf.mxu0
    %v2555 = vadd.f32 %v2512, %v2554
    %v2556 = vpop.f32.mrf.mxu0
    %v2557 = vadd.f32 %v2514, %v2556
    %v2558 = vpop.f32.mrf.mxu0
    %v2559 = vadd.f32 %v2516, %v2558
    %v2560 = vpop.f32.mrf.mxu0
    %v2561 = vadd.f32 %v2518, %v2560
    %2562 = vdwg.mxu0
    %2563 = vmatprep.subr.bf16.mxu0 %v1856
    %2564 = vmatpush1.bf16.msra.mxu0 %v1855
    %2565 = vmatprep.subr.bf16.mxu0 %v1848
    %2566 = vmatpush1.bf16.msra.mxu0 %v1847
    %2567 = vmatprep.subr.bf16.mxu0 %v1840
    %2568 = vmatpush1.bf16.msra.mxu0 %v1839
    %2569 = vmatprep.subr.bf16.mxu0 %v1832
    %2570 = vmatpush1.bf16.msra.mxu0 %v1831
    %2571 = vmatprep.subr.bf16.mxu0 %v1824
    %2572 = vmatpush1.bf16.msra.mxu0 %v1823
    %2573 = vmatprep.subr.bf16.mxu0 %v1816
    %2574 = vmatpush1.bf16.msra.mxu0 %v1815
    %2575 = vmatprep.subr.bf16.mxu0 %v1808
    %2576 = vmatpush1.bf16.msra.mxu0 %v1807
    %2577 = vmatprep.subr.bf16.mxu0 %v1800
    %2578 = vmatpush1.bf16.msra.mxu0 %v1799
    %2579 = vmatprep.subr.bf16.mxu0 %v1920
    %2580 = vmatpush2.bf16.msra.mxu0 %v1919
    %2581 = vmatprep.subr.bf16.mxu0 %v1912
    %2582 = vmatpush2.bf16.msra.mxu0 %v1911
    %2583 = vmatprep.subr.bf16.mxu0 %v1904
    %2584 = vmatpush2.bf16.msra.mxu0 %v1903
    %2585 = vmatprep.subr.bf16.mxu0 %v1896
    %2586 = vmatpush2.bf16.msra.mxu0 %v1895
    %2587 = vmatprep.subr.bf16.mxu0 %v1888
    %2588 = vmatpush2.bf16.msra.mxu0 %v1887
    %2589 = vmatprep.subr.bf16.mxu0 %v1880
    %2590 = vmatpush2.bf16.msra.mxu0 %v1879
    %2591 = vmatprep.subr.bf16.mxu0 %v1872
    %2592 = vmatpush2.bf16.msra.mxu0 %v1871
    %2593 = vmatprep.subr.bf16.mxu0 %v1864
    %2594 = vmatpush2.bf16.msra.mxu0 %v1863
    %2595 = vmatprep.mubr.bf16.mxu0 %v724
    %2596 = vmatmul.mubr.bf16.gmra.mxu0 %v723
    %v2597 = vpop.f32.mrf.mxu0
    %v2598 = vadd.f32 %v1012, %v2597
    %v2599 = vpop.f32.mrf.mxu0
    %v2600 = vadd.f32 %v1016, %v2599
    %v2601 = vpop.f32.mrf.mxu0
    %v2602 = vadd.f32 %v1012, %v2601
    %v2603 = vpop.f32.mrf.mxu0
    %v2604 = vadd.f32 %v1016, %v2603
    %2605 = vdwg.mxu0
    %2606 = vmatprep.subr.bf16.mxu0 %v1984
    %2607 = vmatpush1.bf16.msra.mxu0 %v1983
    %2608 = vmatprep.subr.bf16.mxu0 %v1976
    %2609 = vmatpush1.bf16.msra.mxu0 %v1975
    %2610 = vmatprep.subr.bf16.mxu0 %v1968
    %2611 = vmatpush1.bf16.msra.mxu0 %v1967
    %2612 = vmatprep.subr.bf16.mxu0 %v1960
    %2613 = vmatpush1.bf16.msra.mxu0 %v1959
    %2614 = vmatprep.subr.bf16.mxu0 %v1952
    %2615 = vmatpush1.bf16.msra.mxu0 %v1951
    %2616 = vmatprep.subr.bf16.mxu0 %v1944
    %2617 = vmatpush1.bf16.msra.mxu0 %v1943
    %2618 = vmatprep.subr.bf16.mxu0 %v1936
    %2619 = vmatpush1.bf16.msra.mxu0 %v1935
    %2620 = vmatprep.subr.bf16.mxu0 %v1928
    %2621 = vmatpush1.bf16.msra.mxu0 %v1927
    %2622 = vmatprep.subr.bf16.mxu0 %v2048
    %2623 = vmatpush2.bf16.msra.mxu0 %v2047
    %2624 = vmatprep.subr.bf16.mxu0 %v2040
    %2625 = vmatpush2.bf16.msra.mxu0 %v2039
    %2626 = vmatprep.subr.bf16.mxu0 %v2032
    %2627 = vmatpush2.bf16.msra.mxu0 %v2031
    %2628 = vmatprep.subr.bf16.mxu0 %v2024
    %2629 = vmatpush2.bf16.msra.mxu0 %v2023
    %2630 = vmatprep.subr.bf16.mxu0 %v2016
    %2631 = vmatpush2.bf16.msra.mxu0 %v2015
    %2632 = vmatprep.subr.bf16.mxu0 %v2008
    %2633 = vmatpush2.bf16.msra.mxu0 %v2007
    %2634 = vmatprep.subr.bf16.mxu0 %v2000
    %2635 = vmatpush2.bf16.msra.mxu0 %v1999
    %2636 = vmatprep.subr.bf16.mxu0 %v1992
    %2637 = vmatpush2.bf16.msra.mxu0 %v1991
    %2638 = vmatprep.mubr.bf16.mxu0 %v726
    %2639 = vmatmul.mubr.bf16.gmra.mxu0 %v725
    %v2640 = vpop.f32.mrf.mxu0
    %v2641 = vadd.f32 %v2598, %v2640
    %v2642 = vpop.f32.mrf.mxu0
    %v2643 = vadd.f32 %v2600, %v2642
    %v2644 = vpop.f32.mrf.mxu0
    %v2645 = vadd.f32 %v2602, %v2644
    %v2646 = vpop.f32.mrf.mxu0
    %v2647 = vadd.f32 %v2604, %v2646
    %2648 = vdwg.mxu0
    %vm2649 = vcmp.gt.f32.partialorder %v2383, 0.0
    %vm2650 = vcmp.gt.f32.partialorder %v2385, 0.0
    %vm2651 = vcmp.gt.f32.partialorder %v2469, 0.0
    %vm2652 = vcmp.gt.f32.partialorder %v2471, 0.0
    %vm2653 = vcmp.gt.f32.partialorder %v2555, 0.0
    %vm2654 = vcmp.gt.f32.partialorder %v2557, 0.0
    %vm2655 = vcmp.gt.f32.partialorder %v2641, 0.0
    %vm2656 = vcmp.gt.f32.partialorder %v2643, 0.0
    %vm2657 = vcmp.gt.f32.partialorder %v2387, 0.0
    %vm2658 = vcmp.gt.f32.partialorder %v2389, 0.0
    %vm2659 = vcmp.gt.f32.partialorder %v2473, 0.0
    %vm2660 = vcmp.gt.f32.partialorder %v2475, 0.0
    %vm2661 = vcmp.gt.f32.partialorder %v2559, 0.0
    %vm2662 = vcmp.gt.f32.partialorder %v2561, 0.0
    %vm2663 = vcmp.gt.f32.partialorder %v2645, 0.0
    %vm2664 = vcmp.gt.f32.partialorder %v2647, 0.0
    %v2665 = vmul.f32 %v2383, 0.2
    %v2666 = vmul.f32 %v2385, 0.2
    %v2667 = vmul.f32 %v2469, 0.2
    %v2668 = vmul.f32 %v2471, 0.2
    %v2669 = vmul.f32 %v2555, 0.2
    %v2670 = vmul.f32 %v2557, 0.2
    %v2671 = vmul.f32 %v2641, 0.2
    %v2672 = vmul.f32 %v2643, 0.2
    %v2673 = vmul.f32 %v2387, 0.2
    %v2674 = vmul.f32 %v2389, 0.2
    %v2675 = vmul.f32 %v2473, 0.2
    %v2676 = vmul.f32 %v2475, 0.2
    %v2677 = vmul.f32 %v2559, 0.2
    %v2678 = vmul.f32 %v2561, 0.2
    %v2679 = vmul.f32 %v2645, 0.2
    %v2680 = vmul.f32 %v2647, 0.2
    %v2681 = vsel %vm2649, %v2383, %v2665
    %v2682 = vsel %vm2650, %v2385, %v2666
    %v2683 = vsel %vm2651, %v2469, %v2667
    %v2684 = vsel %vm2652, %v2471, %v2668
    %v2685 = vsel %vm2653, %v2555, %v2669
    %v2686 = vsel %vm2654, %v2557, %v2670
    %v2687 = vsel %vm2655, %v2641, %v2671
    %v2688 = vsel %vm2656, %v2643, %v2672
    %v2689 = vsel %vm2657, %v2387, %v2673
    %v2690 = vsel %vm2658, %v2389, %v2674
    %v2691 = vsel %vm2659, %v2473, %v2675
    %v2692 = vsel %vm2660, %v2475, %v2676
    %v2693 = vsel %vm2661, %v2559, %v2677
    %v2694 = vsel %vm2662, %v2561, %v2678
    %v2695 = vsel %vm2663, %v2645, %v2679
    %v2696 = vsel %vm2664, %v2647, %v2680
    %v2697 = vpack.c.bf16 %v2689, %v2681
    %v2698 = vpack.c.bf16 %v2690, %v2682
    %v2699 = vpack.c.bf16 %v2691, %v2683
    %v2700 = vpack.c.bf16 %v2692, %v2684
    %v2701 = vpack.c.bf16 %v2693, %v2685
    %v2702 = vpack.c.bf16 %v2694, %v2686
    %v2703 = vpack.c.bf16 %v2695, %v2687
    %v2704 = vpack.c.bf16 %v2696, %v2688
    %v2705 = vld [vmem:[%s7] sm:$0xff]
    %v2706 = vld [vmem:[%s7 + $0x8] sm:$0xff]
    %v2707 = vld [vmem:[%s7 + $0x10] sm:$0xff]
    %v2708 = vld [vmem:[%s7 + $0x18] sm:$0xf]
    %v2709 = vld [vmem:[%s7 + $0x1c] sm:$0xff]
    %v2710 = vld [vmem:[%s7 + $0x24] sm:$0xff]
    %v2711 = vld [vmem:[%s7 + $0x2c] sm:$0xff]
    %v2712 = vld [vmem:[%s7 + $0x34] sm:$0xf]
    %v2713 = vld [vmem:[%s7 + $0x38] sm:$0xff]
    %v2714 = vld [vmem:[%s7 + $0x40] sm:$0xff]
    %v2715 = vld [vmem:[%s7 + $0x48] sm:$0xff]
    %v2716 = vld [vmem:[%s7 + $0x50] sm:$0xf]
    %v2717 = vld [vmem:[%s7 + $0x54] sm:$0xff]
    %v2718 = vld [vmem:[%s7 + $0x5c] sm:$0xff]
    %v2719 = vld [vmem:[%s7 + $0x64] sm:$0xff]
    %v2720 = vld [vmem:[%s7 + $0x6c] sm:$0xf]
    %v2721 = vld [vmem:[%s7 + $0x70] sm:$0xff]
    %v2722 = vld [vmem:[%s7 + $0x78] sm:$0xff]
    %v2723 = vld [vmem:[%s7 + $0x80] sm:$0xff]
    %v2724 = vld [vmem:[%s7 + $0x88] sm:$0xf]
    %v2725 = vld [vmem:[%s7 + $0x8c] sm:$0xff]
    %v2726 = vld [vmem:[%s7 + $0x94] sm:$0xff]
    %v2727 = vld [vmem:[%s7 + $0x9c] sm:$0xff]
    %v2728 = vld [vmem:[%s7 + $0xa4] sm:$0xf]
    %v2729 = vld [vmem:[%s7 + $0xa8] sm:$0xff]
    %v2730 = vld [vmem:[%s7 + $0xb0] sm:$0xff]
    %v2731 = vld [vmem:[%s7 + $0xb8] sm:$0xff]
    %v2732 = vld [vmem:[%s7 + $0xc0] sm:$0xf]
    %v2733 = vld [vmem:[%s7 + $0xc4] sm:$0xff]
    %v2734 = vld [vmem:[%s7 + $0xcc] sm:$0xff]
    %v2735 = vld [vmem:[%s7 + $0xd4] sm:$0xff]
    %v2736 = vld [vmem:[%s7 + $0xdc] sm:$0xf]
    %v2737 = vld [vmem:[%s7 + $0xe0] sm:$0xff]
    %v2738 = vld [vmem:[%s7 + $0xe8] sm:$0xff]
    %v2739 = vld [vmem:[%s7 + $0xf0] sm:$0xff]
    %v2740 = vld [vmem:[%s7 + $0xf8] sm:$0xf]
    %v2741 = vld [vmem:[%s7 + $0xfc] sm:$0xff]
    %v2742 = vld [vmem:[%s7 + $0x104] sm:$0xff]
    %v2743 = vld [vmem:[%s7 + $0x10c] sm:$0xff]
    %v2744 = vld [vmem:[%s7 + $0x114] sm:$0xf]
    %v2745 = vld [vmem:[%s7 + $0x118] sm:$0xff]
    %v2746 = vld [vmem:[%s7 + $0x120] sm:$0xff]
    %v2747 = vld [vmem:[%s7 + $0x128] sm:$0xff]
    %v2748 = vld [vmem:[%s7 + $0x130] sm:$0xf]
    %v2749 = vld [vmem:[%s7 + $0x134] sm:$0xff]
    %v2750 = vld [vmem:[%s7 + $0x13c] sm:$0xff]
    %v2751 = vld [vmem:[%s7 + $0x144] sm:$0xff]
    %v2752 = vld [vmem:[%s7 + $0x14c] sm:$0xf]
    %v2753 = vld [vmem:[%s7 + $0x150] sm:$0xff]
    %v2754 = vld [vmem:[%s7 + $0x158] sm:$0xff]
    %v2755 = vld [vmem:[%s7 + $0x160] sm:$0xff]
    %v2756 = vld [vmem:[%s7 + $0x168] sm:$0xf]
    %v2757 = vld [vmem:[%s7 + $0x16c] sm:$0xff]
    %v2758 = vld [vmem:[%s7 + $0x174] sm:$0xff]
    %v2759 = vld [vmem:[%s7 + $0x17c] sm:$0xff]
    %v2760 = vld [vmem:[%s7 + $0x184] sm:$0xf]
    %v2761 = vld [vmem:[%s7 + $0x188] sm:$0xff]
    %v2762 = vld [vmem:[%s7 + $0x190] sm:$0xff]
    %v2763 = vld [vmem:[%s7 + $0x198] sm:$0xff]
    %v2764 = vld [vmem:[%s7 + $0x1a0] sm:$0xf]
    %v2765 = vld [vmem:[%s7 + $0x1a4] sm:$0xff]
    %v2766 = vld [vmem:[%s7 + $0x1ac] sm:$0xff]
    %v2767 = vld [vmem:[%s7 + $0x1b4] sm:$0xff]
    %v2768 = vld [vmem:[%s7 + $0x1bc] sm:$0xf]
    %v2769 = vld [vmem:[%s7 + $0x1c0] sm:$0xff]
    %v2770 = vld [vmem:[%s7 + $0x1c8] sm:$0xff]
    %v2771 = vld [vmem:[%s7 + $0x1d0] sm:$0xff]
    %v2772 = vld [vmem:[%s7 + $0x1d8] sm:$0xf]
    %v2773 = vld [vmem:[%s7 + $0x1dc] sm:$0xff]
    %v2774 = vld [vmem:[%s7 + $0x1e4] sm:$0xff]
    %v2775 = vld [vmem:[%s7 + $0x1ec] sm:$0xff]
    %v2776 = vld [vmem:[%s7 + $0x1f4] sm:$0xf]
    %v2777 = vld [vmem:[%s7 + $0x1f8] sm:$0xff]
    %v2778 = vld [vmem:[%s7 + $0x200] sm:$0xff]
    %v2779 = vld [vmem:[%s7 + $0x208] sm:$0xff]
    %v2780 = vld [vmem:[%s7 + $0x210] sm:$0xf]
    %v2781 = vld [vmem:[%s7 + $0x214] sm:$0xff]
    %v2782 = vld [vmem:[%s7 + $0x21c] sm:$0xff]
    %v2783 = vld [vmem:[%s7 + $0x224] sm:$0xff]
    %v2784 = vld [vmem:[%s7 + $0x22c] sm:$0xf]
    %v2785 = vld [vmem:[%s7 + $0x230] sm:$0xff]
    %v2786 = vld [vmem:[%s7 + $0x238] sm:$0xff]
    %v2787 = vld [vmem:[%s7 + $0x240] sm:$0xff]
    %v2788 = vld [vmem:[%s7 + $0x248] sm:$0xf]
    %v2789 = vld [vmem:[%s7 + $0x24c] sm:$0xff]
    %v2790 = vld [vmem:[%s7 + $0x254] sm:$0xff]
    %v2791 = vld [vmem:[%s7 + $0x25c] sm:$0xff]
    %v2792 = vld [vmem:[%s7 + $0x264] sm:$0xf]
    %v2793 = vld [vmem:[%s7 + $0x268] sm:$0xff]
    %v2794 = vld [vmem:[%s7 + $0x270] sm:$0xff]
    %v2795 = vld [vmem:[%s7 + $0x278] sm:$0xff]
    %v2796 = vld [vmem:[%s7 + $0x280] sm:$0xf]
    %v2797 = vld [vmem:[%s7 + $0x284] sm:$0xff]
    %v2798 = vld [vmem:[%s7 + $0x28c] sm:$0xff]
    %v2799 = vld [vmem:[%s7 + $0x294] sm:$0xff]
    %v2800 = vld [vmem:[%s7 + $0x29c] sm:$0xf]
    %v2801 = vld [vmem:[%s7 + $0x2a0] sm:$0xff]
    %v2802 = vld [vmem:[%s7 + $0x2a8] sm:$0xff]
    %v2803 = vld [vmem:[%s7 + $0x2b0] sm:$0xff]
    %v2804 = vld [vmem:[%s7 + $0x2b8] sm:$0xf]
    %v2805 = vld [vmem:[%s7 + $0x2bc] sm:$0xff]
    %v2806 = vld [vmem:[%s7 + $0x2c4] sm:$0xff]
    %v2807 = vld [vmem:[%s7 + $0x2cc] sm:$0xff]
    %v2808 = vld [vmem:[%s7 + $0x2d4] sm:$0xf]
    %v2809 = vld [vmem:[%s7 + $0x2d8] sm:$0xff]
    %v2810 = vld [vmem:[%s7 + $0x2e0] sm:$0xff]
    %v2811 = vld [vmem:[%s7 + $0x2e8] sm:$0xff]
    %v2812 = vld [vmem:[%s7 + $0x2f0] sm:$0xf]
    %v2813 = vld [vmem:[%s7 + $0x2f4] sm:$0xff]
    %v2814 = vld [vmem:[%s7 + $0x2fc] sm:$0xff]
    %v2815 = vld [vmem:[%s7 + $0x304] sm:$0xff]
    %v2816 = vld [vmem:[%s7 + $0x30c] sm:$0xf]
    %v2817 = vld [vmem:[%s7 + $0x310] sm:$0xff]
    %v2818 = vld [vmem:[%s7 + $0x318] sm:$0xff]
    %v2819 = vld [vmem:[%s7 + $0x320] sm:$0xff]
    %v2820 = vld [vmem:[%s7 + $0x328] sm:$0xf]
    %v2821 = vld [vmem:[%s7 + $0x32c] sm:$0xff]
    %v2822 = vld [vmem:[%s7 + $0x334] sm:$0xff]
    %v2823 = vld [vmem:[%s7 + $0x33c] sm:$0xff]
    %v2824 = vld [vmem:[%s7 + $0x344] sm:$0xf]
    %v2825 = vld [vmem:[%s7 + $0x348] sm:$0xff]
    %v2826 = vld [vmem:[%s7 + $0x350] sm:$0xff]
    %v2827 = vld [vmem:[%s7 + $0x358] sm:$0xff]
    %v2828 = vld [vmem:[%s7 + $0x360] sm:$0xf]
    %v2829 = vld [vmem:[%s7 + $0x364] sm:$0xff]
    %v2830 = vld [vmem:[%s7 + $0x36c] sm:$0xff]
    %v2831 = vld [vmem:[%s7 + $0x374] sm:$0xff]
    %v2832 = vld [vmem:[%s7 + $0x37c] sm:$0xf]
    %v2833 = vld [vmem:[%s7 + $0x380] sm:$0xff]
    %v2834 = vld [vmem:[%s7 + $0x388] sm:$0xff]
    %v2835 = vld [vmem:[%s7 + $0x390] sm:$0xff]
    %v2836 = vld [vmem:[%s7 + $0x398] sm:$0xf]
    %v2837 = vld [vmem:[%s7 + $0x39c] sm:$0xff]
    %v2838 = vld [vmem:[%s7 + $0x3a4] sm:$0xff]
    %v2839 = vld [vmem:[%s7 + $0x3ac] sm:$0xff]
    %v2840 = vld [vmem:[%s7 + $0x3b4] sm:$0xf]
    %v2841 = vld [vmem:[%s7 + $0x3b8] sm:$0xff]
    %v2842 = vld [vmem:[%s7 + $0x3c0] sm:$0xff]
    %v2843 = vld [vmem:[%s7 + $0x3c8] sm:$0xff]
    %v2844 = vld [vmem:[%s7 + $0x3d0] sm:$0xf]
    %v2845 = vld [vmem:[%s7 + $0x3d4] sm:$0xff]
    %v2846 = vld [vmem:[%s7 + $0x3dc] sm:$0xff]
    %v2847 = vld [vmem:[%s7 + $0x3e4] sm:$0xff]
    %v2848 = vld [vmem:[%s7 + $0x3ec] sm:$0xf]
    %v2849 = vld [vmem:[%s7 + $0x3f0] sm:$0xff]
    %v2850 = vld [vmem:[%s7 + $0x3f8] sm:$0xff]
    %v2851 = vld [vmem:[%s7 + $0x400] sm:$0xff]
    %v2852 = vld [vmem:[%s7 + $0x408] sm:$0xf]
    %v2853 = vld [vmem:[%s7 + $0x40c] sm:$0xff]
    %v2854 = vld [vmem:[%s7 + $0x414] sm:$0xff]
    %v2855 = vld [vmem:[%s7 + $0x41c] sm:$0xff]
    %v2856 = vld [vmem:[%s7 + $0x424] sm:$0xf]
    %v2857 = vld [vmem:[%s7 + $0x428] sm:$0xff]
    %v2858 = vld [vmem:[%s7 + $0x430] sm:$0xff]
    %v2859 = vld [vmem:[%s7 + $0x438] sm:$0xff]
    %v2860 = vld [vmem:[%s7 + $0x440] sm:$0xf]
    %v2861 = vld [vmem:[%s7 + $0x444] sm:$0xff]
    %v2862 = vld [vmem:[%s7 + $0x44c] sm:$0xff]
    %v2863 = vld [vmem:[%s7 + $0x454] sm:$0xff]
    %v2864 = vld [vmem:[%s7 + $0x45c] sm:$0xf]
    %v2865 = vld [vmem:[%s7 + $0x460] sm:$0xff]
    %v2866 = vld [vmem:[%s7 + $0x468] sm:$0xff]
    %v2867 = vld [vmem:[%s7 + $0x470] sm:$0xff]
    %v2868 = vld [vmem:[%s7 + $0x478] sm:$0xf]
    %v2869 = vld [vmem:[%s7 + $0x47c] sm:$0xff]
    %v2870 = vld [vmem:[%s7 + $0x484] sm:$0xff]
    %v2871 = vld [vmem:[%s7 + $0x48c] sm:$0xff]
    %v2872 = vld [vmem:[%s7 + $0x494] sm:$0xf]
    %v2873 = vld [vmem:[%s7 + $0x498] sm:$0xff]
    %v2874 = vld [vmem:[%s7 + $0x4a0] sm:$0xff]
    %v2875 = vld [vmem:[%s7 + $0x4a8] sm:$0xff]
    %v2876 = vld [vmem:[%s7 + $0x4b0] sm:$0xf]
    %v2877 = vld [vmem:[%s7 + $0x4b4] sm:$0xff]
    %v2878 = vld [vmem:[%s7 + $0x4bc] sm:$0xff]
    %v2879 = vld [vmem:[%s7 + $0x4c4] sm:$0xff]
    %v2880 = vld [vmem:[%s7 + $0x4cc] sm:$0xf]
    %v2881 = vld [vmem:[%s7 + $0x4d0] sm:$0xff]
    %v2882 = vld [vmem:[%s7 + $0x4d8] sm:$0xff]
    %v2883 = vld [vmem:[%s7 + $0x4e0] sm:$0xff]
    %v2884 = vld [vmem:[%s7 + $0x4e8] sm:$0xf]
    %v2885 = vld [vmem:[%s7 + $0x4ec] sm:$0xff]
    %v2886 = vld [vmem:[%s7 + $0x4f4] sm:$0xff]
    %v2887 = vld [vmem:[%s7 + $0x4fc] sm:$0xff]
    %v2888 = vld [vmem:[%s7 + $0x504] sm:$0xf]
    %v2889 = vld [vmem:[%s7 + $0x508] sm:$0xff]
    %v2890 = vld [vmem:[%s7 + $0x510] sm:$0xff]
    %v2891 = vld [vmem:[%s7 + $0x518] sm:$0xff]
    %v2892 = vld [vmem:[%s7 + $0x520] sm:$0xf]
    %v2893 = vld [vmem:[%s7 + $0x524] sm:$0xff]
    %v2894 = vld [vmem:[%s7 + $0x52c] sm:$0xff]
    %v2895 = vld [vmem:[%s7 + $0x534] sm:$0xff]
    %v2896 = vld [vmem:[%s7 + $0x53c] sm:$0xf]
    %v2897 = vld [vmem:[%s7 + $0x540] sm:$0xff]
    %v2898 = vld [vmem:[%s7 + $0x548] sm:$0xff]
    %v2899 = vld [vmem:[%s7 + $0x550] sm:$0xff]
    %v2900 = vld [vmem:[%s7 + $0x558] sm:$0xf]
    %v2901 = vld [vmem:[%s7 + $0x55c] sm:$0xff]
    %v2902 = vld [vmem:[%s7 + $0x564] sm:$0xff]
    %v2903 = vld [vmem:[%s7 + $0x56c] sm:$0xff]
    %v2904 = vld [vmem:[%s7 + $0x574] sm:$0xf]
    %v2905 = vld [vmem:[%s7 + $0x578] sm:$0xff]
    %v2906 = vld [vmem:[%s7 + $0x580] sm:$0xff]
    %v2907 = vld [vmem:[%s7 + $0x588] sm:$0xff]
    %v2908 = vld [vmem:[%s7 + $0x590] sm:$0xf]
    %v2909 = vld [vmem:[%s7 + $0x594] sm:$0xff]
    %v2910 = vld [vmem:[%s7 + $0x59c] sm:$0xff]
    %v2911 = vld [vmem:[%s7 + $0x5a4] sm:$0xff]
    %v2912 = vld [vmem:[%s7 + $0x5ac] sm:$0xf]
    %v2913 = vld [vmem:[%s7 + $0x5b0] sm:$0xff]
    %v2914 = vld [vmem:[%s7 + $0x5b8] sm:$0xff]
    %v2915 = vld [vmem:[%s7 + $0x5c0] sm:$0xff]
    %v2916 = vld [vmem:[%s7 + $0x5c8] sm:$0xf]
    %v2917 = vld [vmem:[%s7 + $0x5cc] sm:$0xff]
    %v2918 = vld [vmem:[%s7 + $0x5d4] sm:$0xff]
    %v2919 = vld [vmem:[%s7 + $0x5dc] sm:$0xff]
    %v2920 = vld [vmem:[%s7 + $0x5e4] sm:$0xf]
    %v2921 = vld [vmem:[%s7 + $0x5e8] sm:$0xff]
    %v2922 = vld [vmem:[%s7 + $0x5f0] sm:$0xff]
    %v2923 = vld [vmem:[%s7 + $0x5f8] sm:$0xff]
    %v2924 = vld [vmem:[%s7 + $0x600] sm:$0xf]
    %v2925 = vld [vmem:[%s7 + $0x604] sm:$0xff]
    %v2926 = vld [vmem:[%s7 + $0x60c] sm:$0xff]
    %v2927 = vld [vmem:[%s7 + $0x614] sm:$0xff]
    %v2928 = vld [vmem:[%s7 + $0x61c] sm:$0xf]
    %v2929 = vld [vmem:[%s7 + $0x620] sm:$0xff]
    %v2930 = vld [vmem:[%s7 + $0x628] sm:$0xff]
    %v2931 = vld [vmem:[%s7 + $0x630] sm:$0xff]
    %v2932 = vld [vmem:[%s7 + $0x638] sm:$0xf]
    %v2933 = vld [vmem:[%s7 + $0x63c] sm:$0xff]
    %v2934 = vld [vmem:[%s7 + $0x644] sm:$0xff]
    %v2935 = vld [vmem:[%s7 + $0x64c] sm:$0xff]
    %v2936 = vld [vmem:[%s7 + $0x654] sm:$0xf]
    %v2937 = vld [vmem:[%s7 + $0x658] sm:$0xff]
    %v2938 = vld [vmem:[%s7 + $0x660] sm:$0xff]
    %v2939 = vld [vmem:[%s7 + $0x668] sm:$0xff]
    %v2940 = vld [vmem:[%s7 + $0x670] sm:$0xf]
    %v2941 = vld [vmem:[%s7 + $0x674] sm:$0xff]
    %v2942 = vld [vmem:[%s7 + $0x67c] sm:$0xff]
    %v2943 = vld [vmem:[%s7 + $0x684] sm:$0xff]
    %v2944 = vld [vmem:[%s7 + $0x68c] sm:$0xf]
    %v2945 = vld [vmem:[%s7 + $0x690] sm:$0xff]
    %v2946 = vld [vmem:[%s7 + $0x698] sm:$0xff]
    %v2947 = vld [vmem:[%s7 + $0x6a0] sm:$0xff]
    %v2948 = vld [vmem:[%s7 + $0x6a8] sm:$0xf]
    %v2949 = vld [vmem:[%s7 + $0x6ac] sm:$0xff]
    %v2950 = vld [vmem:[%s7 + $0x6b4] sm:$0xff]
    %v2951 = vld [vmem:[%s7 + $0x6bc] sm:$0xff]
    %v2952 = vld [vmem:[%s7 + $0x6c4] sm:$0xf]
    %v2953 = vld [vmem:[%s7 + $0x6c8] sm:$0xff]
    %v2954 = vld [vmem:[%s7 + $0x6d0] sm:$0xff]
    %v2955 = vld [vmem:[%s7 + $0x6d8] sm:$0xff]
    %v2956 = vld [vmem:[%s7 + $0x6e0] sm:$0xf]
    %v2957 = vld [vmem:[%s7 + $0x6e4] sm:$0xff]
    %v2958 = vld [vmem:[%s7 + $0x6ec] sm:$0xff]
    %v2959 = vld [vmem:[%s7 + $0x6f4] sm:$0xff]
    %v2960 = vld [vmem:[%s7 + $0x6fc] sm:$0xf]
    %v2961 = vld [vmem:[%s7 + $0x700] sm:$0xff]
    %v2962 = vld [vmem:[%s7 + $0x708] sm:$0xff]
    %v2963 = vld [vmem:[%s7 + $0x710] sm:$0xff]
    %v2964 = vld [vmem:[%s7 + $0x718] sm:$0xf]
    %v2965 = vld [vmem:[%s7 + $0x71c] sm:$0xff]
    %v2966 = vld [vmem:[%s7 + $0x724] sm:$0xff]
    %v2967 = vld [vmem:[%s7 + $0x72c] sm:$0xff]
    %v2968 = vld [vmem:[%s7 + $0x734] sm:$0xf]
    %v2969 = vld [vmem:[%s7 + $0x738] sm:$0xff]
    %v2970 = vld [vmem:[%s7 + $0x740] sm:$0xff]
    %v2971 = vld [vmem:[%s7 + $0x748] sm:$0xff]
    %v2972 = vld [vmem:[%s7 + $0x750] sm:$0xf]
    %v2973 = vld [vmem:[%s7 + $0x754] sm:$0xff]
    %v2974 = vld [vmem:[%s7 + $0x75c] sm:$0xff]
    %v2975 = vld [vmem:[%s7 + $0x764] sm:$0xff]
    %v2976 = vld [vmem:[%s7 + $0x76c] sm:$0xf]
    %v2977 = vld [vmem:[%s7 + $0x770] sm:$0xff]
    %v2978 = vld [vmem:[%s7 + $0x778] sm:$0xff]
    %v2979 = vld [vmem:[%s7 + $0x780] sm:$0xff]
    %v2980 = vld [vmem:[%s7 + $0x788] sm:$0xf]
    %v2981 = vld [vmem:[%s7 + $0x78c] sm:$0xff]
    %v2982 = vld [vmem:[%s7 + $0x794] sm:$0xff]
    %v2983 = vld [vmem:[%s7 + $0x79c] sm:$0xff]
    %v2984 = vld [vmem:[%s7 + $0x7a4] sm:$0xf]
    %v2985 = vld [vmem:[%s7 + $0x7a8] sm:$0xff]
    %v2986 = vld [vmem:[%s7 + $0x7b0] sm:$0xff]
    %v2987 = vld [vmem:[%s7 + $0x7b8] sm:$0xff]
    %v2988 = vld [vmem:[%s7 + $0x7c0] sm:$0xf]
    %v2989 = vld [vmem:[%s7 + $0x7c4] sm:$0xff]
    %v2990 = vld [vmem:[%s7 + $0x7cc] sm:$0xff]
    %v2991 = vld [vmem:[%s7 + $0x7d4] sm:$0xff]
    %v2992 = vld [vmem:[%s7 + $0x7dc] sm:$0xf]
    %v2993 = vld [vmem:[%s7 + $0x7e0] sm:$0xff]
    %v2994 = vld [vmem:[%s7 + $0x7e8] sm:$0xff]
    %v2995 = vld [vmem:[%s7 + $0x7f0] sm:$0xff]
    %v2996 = vld [vmem:[%s7 + $0x7f8] sm:$0xf]
    %v2997 = vld [vmem:[%s7 + $0x7fc] sm:$0xff]
    %v2998 = vld [vmem:[%s7 + $0x804] sm:$0xff]
    %v2999 = vld [vmem:[%s7 + $0x80c] sm:$0xff]
    %v3000 = vld [vmem:[%s7 + $0x814] sm:$0xf]
    %v3001 = vld [vmem:[%s7 + $0x818] sm:$0xff]
    %v3002 = vld [vmem:[%s7 + $0x820] sm:$0xff]
    %v3003 = vld [vmem:[%s7 + $0x828] sm:$0xff]
    %v3004 = vld [vmem:[%s7 + $0x830] sm:$0xf]
    %v3005 = vld [vmem:[%s7 + $0x834] sm:$0xff]
    %v3006 = vld [vmem:[%s7 + $0x83c] sm:$0xff]
    %v3007 = vld [vmem:[%s7 + $0x844] sm:$0xff]
    %v3008 = vld [vmem:[%s7 + $0x84c] sm:$0xf]
    %v3009 = vld [vmem:[%s7 + $0x850] sm:$0xff]
    %v3010 = vld [vmem:[%s7 + $0x858] sm:$0xff]
    %v3011 = vld [vmem:[%s7 + $0x860] sm:$0xff]
    %v3012 = vld [vmem:[%s7 + $0x868] sm:$0xf]
    %v3013 = vld [vmem:[%s7 + $0x86c] sm:$0xff]
    %v3014 = vld [vmem:[%s7 + $0x874] sm:$0xff]
    %v3015 = vld [vmem:[%s7 + $0x87c] sm:$0xff]
    %v3016 = vld [vmem:[%s7 + $0x884] sm:$0xf]
    %v3017 = vld [vmem:[%s7 + $0x888] sm:$0xff]
    %v3018 = vld [vmem:[%s7 + $0x890] sm:$0xff]
    %v3019 = vld [vmem:[%s7 + $0x898] sm:$0xff]
    %v3020 = vld [vmem:[%s7 + $0x8a0] sm:$0xf]
    %v3021 = vld [vmem:[%s7 + $0x8a4] sm:$0xff]
    %v3022 = vld [vmem:[%s7 + $0x8ac] sm:$0xff]
    %v3023 = vld [vmem:[%s7 + $0x8b4] sm:$0xff]
    %v3024 = vld [vmem:[%s7 + $0x8bc] sm:$0xf]
    %v3025 = vld [vmem:[%s7 + $0x8c0] sm:$0xff]
    %v3026 = vld [vmem:[%s7 + $0x8c8] sm:$0xff]
    %v3027 = vld [vmem:[%s7 + $0x8d0] sm:$0xff]
    %v3028 = vld [vmem:[%s7 + $0x8d8] sm:$0xf]
    %v3029 = vld [vmem:[%s7 + $0x8dc] sm:$0xff]
    %v3030 = vld [vmem:[%s7 + $0x8e4] sm:$0xff]
    %v3031 = vld [vmem:[%s7 + $0x8ec] sm:$0xff]
    %v3032 = vld [vmem:[%s7 + $0x8f4] sm:$0xf]
    %v3033 = vld [vmem:[%s7 + $0x8f8] sm:$0xff]
    %v3034 = vld [vmem:[%s7 + $0x900] sm:$0xff]
    %v3035 = vld [vmem:[%s7 + $0x908] sm:$0xff]
    %v3036 = vld [vmem:[%s7 + $0x910] sm:$0xf]
    %v3037 = vld [vmem:[%s7 + $0x914] sm:$0xff]
    %v3038 = vld [vmem:[%s7 + $0x91c] sm:$0xff]
    %v3039 = vld [vmem:[%s7 + $0x924] sm:$0xff]
    %v3040 = vld [vmem:[%s7 + $0x92c] sm:$0xf]
    %v3041 = vld [vmem:[%s7 + $0x930] sm:$0xff]
    %v3042 = vld [vmem:[%s7 + $0x938] sm:$0xff]
    %v3043 = vld [vmem:[%s7 + $0x940] sm:$0xff]
    %v3044 = vld [vmem:[%s7 + $0x948] sm:$0xf]
    %v3045 = vld [vmem:[%s7 + $0x94c] sm:$0xff]
    %v3046 = vld [vmem:[%s7 + $0x954] sm:$0xff]
    %v3047 = vld [vmem:[%s7 + $0x95c] sm:$0xff]
    %v3048 = vld [vmem:[%s7 + $0x964] sm:$0xf]
    %v3049 = vld [vmem:[%s7 + $0x968] sm:$0xff]
    %v3050 = vld [vmem:[%s7 + $0x970] sm:$0xff]
    %v3051 = vld [vmem:[%s7 + $0x978] sm:$0xff]
    %v3052 = vld [vmem:[%s7 + $0x980] sm:$0xf]
    %v3053 = vld [vmem:[%s7 + $0x984] sm:$0xff]
    %v3054 = vld [vmem:[%s7 + $0x98c] sm:$0xff]
    %v3055 = vld [vmem:[%s7 + $0x994] sm:$0xff]
    %v3056 = vld [vmem:[%s7 + $0x99c] sm:$0xf]
    %v3057 = vld [vmem:[%s7 + $0x9a0] sm:$0xff]
    %v3058 = vld [vmem:[%s7 + $0x9a8] sm:$0xff]
    %v3059 = vld [vmem:[%s7 + $0x9b0] sm:$0xff]
    %v3060 = vld [vmem:[%s7 + $0x9b8] sm:$0xf]
    %v3061 = vld [vmem:[%s7 + $0x9bc] sm:$0xff]
    %v3062 = vld [vmem:[%s7 + $0x9c4] sm:$0xff]
    %v3063 = vld [vmem:[%s7 + $0x9cc] sm:$0xff]
    %v3064 = vld [vmem:[%s7 + $0x9d4] sm:$0xf]
    %v3065 = vld [vmem:[%s7 + $0x9d8] sm:$0xff]
    %v3066 = vld [vmem:[%s7 + $0x9e0] sm:$0xff]
    %v3067 = vld [vmem:[%s7 + $0x9e8] sm:$0xff]
    %v3068 = vld [vmem:[%s7 + $0x9f0] sm:$0xf]
    %v3069 = vld [vmem:[%s7 + $0x9f4] sm:$0xff]
    %v3070 = vld [vmem:[%s7 + $0x9fc] sm:$0xff]
    %v3071 = vld [vmem:[%s7 + $0xa04] sm:$0xff]
    %v3072 = vld [vmem:[%s7 + $0xa0c] sm:$0xf]
    %v3073 = vld [vmem:[%s7 + $0xa10] sm:$0xff]
    %v3074 = vld [vmem:[%s7 + $0xa18] sm:$0xff]
    %v3075 = vld [vmem:[%s7 + $0xa20] sm:$0xff]
    %v3076 = vld [vmem:[%s7 + $0xa28] sm:$0xf]
    %v3077 = vld [vmem:[%s7 + $0xa2c] sm:$0xff]
    %v3078 = vld [vmem:[%s7 + $0xa34] sm:$0xff]
    %v3079 = vld [vmem:[%s7 + $0xa3c] sm:$0xff]
    %v3080 = vld [vmem:[%s7 + $0xa44] sm:$0xf]
    %v3081 = vld [vmem:[%s7 + $0xa48] sm:$0xff]
    %v3082 = vld [vmem:[%s7 + $0xa50] sm:$0xff]
    %v3083 = vld [vmem:[%s7 + $0xa58] sm:$0xff]
    %v3084 = vld [vmem:[%s7 + $0xa60] sm:$0xf]
    %v3085 = vld [vmem:[%s7 + $0xa64] sm:$0xff]
    %v3086 = vld [vmem:[%s7 + $0xa6c] sm:$0xff]
    %v3087 = vld [vmem:[%s7 + $0xa74] sm:$0xff]
    %v3088 = vld [vmem:[%s7 + $0xa7c] sm:$0xf]
    %v3089 = vld [vmem:[%s7 + $0xa80] sm:$0xff]
    %v3090 = vld [vmem:[%s7 + $0xa88] sm:$0xff]
    %v3091 = vld [vmem:[%s7 + $0xa90] sm:$0xff]
    %v3092 = vld [vmem:[%s7 + $0xa98] sm:$0xf]
    %v3093 = vld [vmem:[%s7 + $0xa9c] sm:$0xff]
    %v3094 = vld [vmem:[%s7 + $0xaa4] sm:$0xff]
    %v3095 = vld [vmem:[%s7 + $0xaac] sm:$0xff]
    %v3096 = vld [vmem:[%s7 + $0xab4] sm:$0xf]
    %v3097 = vld [vmem:[%s7 + $0xab8] sm:$0xff]
    %v3098 = vld [vmem:[%s7 + $0xac0] sm:$0xff]
    %v3099 = vld [vmem:[%s7 + $0xac8] sm:$0xff]
    %v3100 = vld [vmem:[%s7 + $0xad0] sm:$0xf]
    %v3101 = vld [vmem:[%s7 + $0xad4] sm:$0xff]
    %v3102 = vld [vmem:[%s7 + $0xadc] sm:$0xff]
    %v3103 = vld [vmem:[%s7 + $0xae4] sm:$0xff]
    %v3104 = vld [vmem:[%s7 + $0xaec] sm:$0xf]
    %v3105 = vld [vmem:[%s7 + $0xaf0] sm:$0xff]
    %v3106 = vld [vmem:[%s7 + $0xaf8] sm:$0xff]
    %v3107 = vld [vmem:[%s7 + $0xb00] sm:$0xff]
    %v3108 = vld [vmem:[%s7 + $0xb08] sm:$0xf]
    %v3109 = vld [vmem:[%s7 + $0xb0c] sm:$0xff]
    %v3110 = vld [vmem:[%s7 + $0xb14] sm:$0xff]
    %v3111 = vld [vmem:[%s7 + $0xb1c] sm:$0xff]
    %v3112 = vld [vmem:[%s7 + $0xb24] sm:$0xf]
    %v3113 = vld [vmem:[%s7 + $0xb28] sm:$0xff]
    %v3114 = vld [vmem:[%s7 + $0xb30] sm:$0xff]
    %v3115 = vld [vmem:[%s7 + $0xb38] sm:$0xff]
    %v3116 = vld [vmem:[%s7 + $0xb40] sm:$0xf]
    %v3117 = vld [vmem:[%s7 + $0xb44] sm:$0xff]
    %v3118 = vld [vmem:[%s7 + $0xb4c] sm:$0xff]
    %v3119 = vld [vmem:[%s7 + $0xb54] sm:$0xff]
    %v3120 = vld [vmem:[%s7 + $0xb5c] sm:$0xf]
    %v3121 = vld [vmem:[%s7 + $0xb60] sm:$0xff]
    %v3122 = vld [vmem:[%s7 + $0xb68] sm:$0xff]
    %v3123 = vld [vmem:[%s7 + $0xb70] sm:$0xff]
    %v3124 = vld [vmem:[%s7 + $0xb78] sm:$0xf]
    %v3125 = vld [vmem:[%s7 + $0xb7c] sm:$0xff]
    %v3126 = vld [vmem:[%s7 + $0xb84] sm:$0xff]
    %v3127 = vld [vmem:[%s7 + $0xb8c] sm:$0xff]
    %v3128 = vld [vmem:[%s7 + $0xb94] sm:$0xf]
    %v3129 = vld [vmem:[%s7 + $0xb98] sm:$0xff]
    %v3130 = vld [vmem:[%s7 + $0xba0] sm:$0xff]
    %v3131 = vld [vmem:[%s7 + $0xba8] sm:$0xff]
    %v3132 = vld [vmem:[%s7 + $0xbb0] sm:$0xf]
    %v3133 = vld [vmem:[%s7 + $0xbb4] sm:$0xff]
    %v3134 = vld [vmem:[%s7 + $0xbbc] sm:$0xff]
    %v3135 = vld [vmem:[%s7 + $0xbc4] sm:$0xff]
    %v3136 = vld [vmem:[%s7 + $0xbcc] sm:$0xf]
    %v3137 = vld [vmem:[%s7 + $0xbd0] sm:$0xff]
    %v3138 = vld [vmem:[%s7 + $0xbd8] sm:$0xff]
    %v3139 = vld [vmem:[%s7 + $0xbe0] sm:$0xff]
    %v3140 = vld [vmem:[%s7 + $0xbe8] sm:$0xf]
    %v3141 = vld [vmem:[%s7 + $0xbec] sm:$0xff]
    %v3142 = vld [vmem:[%s7 + $0xbf4] sm:$0xff]
    %v3143 = vld [vmem:[%s7 + $0xbfc] sm:$0xff]
    %v3144 = vld [vmem:[%s7 + $0xc04] sm:$0xf]
    %v3145 = vld [vmem:[%s7 + $0xc08] sm:$0xff]
    %v3146 = vld [vmem:[%s7 + $0xc10] sm:$0xff]
    %v3147 = vld [vmem:[%s7 + $0xc18] sm:$0xff]
    %v3148 = vld [vmem:[%s7 + $0xc20] sm:$0xf]
    %v3149 = vld [vmem:[%s7 + $0xc24] sm:$0xff]
    %v3150 = vld [vmem:[%s7 + $0xc2c] sm:$0xff]
    %v3151 = vld [vmem:[%s7 + $0xc34] sm:$0xff]
    %v3152 = vld [vmem:[%s7 + $0xc3c] sm:$0xf]
    %v3153 = vld [vmem:[%s7 + $0xc40] sm:$0xff]
    %v3154 = vld [vmem:[%s7 + $0xc48] sm:$0xff]
    %v3155 = vld [vmem:[%s7 + $0xc50] sm:$0xff]
    %v3156 = vld [vmem:[%s7 + $0xc58] sm:$0xf]
    %v3157 = vld [vmem:[%s7 + $0xc5c] sm:$0xff]
    %v3158 = vld [vmem:[%s7 + $0xc64] sm:$0xff]
    %v3159 = vld [vmem:[%s7 + $0xc6c] sm:$0xff]
    %v3160 = vld [vmem:[%s7 + $0xc74] sm:$0xf]
    %v3161 = vld [vmem:[%s7 + $0xc78] sm:$0xff]
    %v3162 = vld [vmem:[%s7 + $0xc80] sm:$0xff]
    %v3163 = vld [vmem:[%s7 + $0xc88] sm:$0xff]
    %v3164 = vld [vmem:[%s7 + $0xc90] sm:$0xf]
    %v3165 = vld [vmem:[%s7 + $0xc94] sm:$0xff]
    %v3166 = vld [vmem:[%s7 + $0xc9c] sm:$0xff]
    %v3167 = vld [vmem:[%s7 + $0xca4] sm:$0xff]
    %v3168 = vld [vmem:[%s7 + $0xcac] sm:$0xf]
    %v3169 = vld [vmem:[%s7 + $0xcb0] sm:$0xff]
    %v3170 = vld [vmem:[%s7 + $0xcb8] sm:$0xff]
    %v3171 = vld [vmem:[%s7 + $0xcc0] sm:$0xff]
    %v3172 = vld [vmem:[%s7 + $0xcc8] sm:$0xf]
    %v3173 = vld [vmem:[%s7 + $0xccc] sm:$0xff]
    %v3174 = vld [vmem:[%s7 + $0xcd4] sm:$0xff]
    %v3175 = vld [vmem:[%s7 + $0xcdc] sm:$0xff]
    %v3176 = vld [vmem:[%s7 + $0xce4] sm:$0xf]
    %v3177 = vld [vmem:[%s7 + $0xce8] sm:$0xff]
    %v3178 = vld [vmem:[%s7 + $0xcf0] sm:$0xff]
    %v3179 = vld [vmem:[%s7 + $0xcf8] sm:$0xff]
    %v3180 = vld [vmem:[%s7 + $0xd00] sm:$0xf]
    %v3181 = vld [vmem:[%s7 + $0xd04] sm:$0xff]
    %v3182 = vld [vmem:[%s7 + $0xd0c] sm:$0xff]
    %v3183 = vld [vmem:[%s7 + $0xd14] sm:$0xff]
    %v3184 = vld [vmem:[%s7 + $0xd1c] sm:$0xf]
    %v3185 = vld [vmem:[%s7 + $0xd20] sm:$0xff]
    %v3186 = vld [vmem:[%s7 + $0xd28] sm:$0xff]
    %v3187 = vld [vmem:[%s7 + $0xd30] sm:$0xff]
    %v3188 = vld [vmem:[%s7 + $0xd38] sm:$0xf]
    %v3189 = vld [vmem:[%s7 + $0xd3c] sm:$0xff]
    %v3190 = vld [vmem:[%s7 + $0xd44] sm:$0xff]
    %v3191 = vld [vmem:[%s7 + $0xd4c] sm:$0xff]
    %v3192 = vld [vmem:[%s7 + $0xd54] sm:$0xf]
    %v3193 = vld [vmem:[%s7 + $0xd58] sm:$0xff]
    %v3194 = vld [vmem:[%s7 + $0xd60] sm:$0xff]
    %v3195 = vld [vmem:[%s7 + $0xd68] sm:$0xff]
    %v3196 = vld [vmem:[%s7 + $0xd70] sm:$0xf]
    %v3197 = vld [vmem:[%s7 + $0xd74] sm:$0xff]
    %v3198 = vld [vmem:[%s7 + $0xd7c] sm:$0xff]
    %v3199 = vld [vmem:[%s7 + $0xd84] sm:$0xff]
    %v3200 = vld [vmem:[%s7 + $0xd8c] sm:$0xf]
    %v3201 = vld [vmem:[%s7 + $0xd90] sm:$0xff]
    %v3202 = vld [vmem:[%s7 + $0xd98] sm:$0xff]
    %v3203 = vld [vmem:[%s7 + $0xda0] sm:$0xff]
    %v3204 = vld [vmem:[%s7 + $0xda8] sm:$0xf]
    %v3205 = vld [vmem:[%s7 + $0xdac] sm:$0xff]
    %v3206 = vld [vmem:[%s7 + $0xdb4] sm:$0xff]
    %v3207 = vld [vmem:[%s7 + $0xdbc] sm:$0xff]
    %v3208 = vld [vmem:[%s7 + $0xdc4] sm:$0xf]
    %v3209 = vld [vmem:[%s7 + $0xdc8] sm:$0xff]
    %v3210 = vld [vmem:[%s7 + $0xdd0] sm:$0xff]
    %v3211 = vld [vmem:[%s7 + $0xdd8] sm:$0xff]
    %v3212 = vld [vmem:[%s7 + $0xde0] sm:$0xf]
    %v3213 = vld [vmem:[%s7 + $0xde4] sm:$0xff]
    %v3214 = vld [vmem:[%s7 + $0xdec] sm:$0xff]
    %v3215 = vld [vmem:[%s7 + $0xdf4] sm:$0xff]
    %v3216 = vld [vmem:[%s7 + $0xdfc] sm:$0xf]
    %v3217 = vld [vmem:[%s8] sm:$0x7f]
    %v3219 = vlaneseq
    %v3220 = vshrl.u32 %v3219, 7
    %v3221 = vsub.s32 0, %v3220
    %v3222 = vrot.slane %v3217, %v3221
    %v3223 = vlaneseq
    %v3224 = vshrl.u32 %v3223, 7
    %v3225 = vsub.s32 1, %v3224
    %v3226 = vrot.slane %v3217, %v3225
    %v3227 = vlaneseq
    %v3228 = vshrl.u32 %v3227, 7
    %v3229 = vsub.s32 2, %v3228
    %v3230 = vrot.slane %v3217, %v3229
    %v3231 = vlaneseq
    %v3232 = vshrl.u32 %v3231, 7
    %v3233 = vsub.s32 3, %v3232
    %v3234 = vrot.slane %v3217, %v3233
    %v3235 = vlaneseq
    %v3236 = vshrl.u32 %v3235, 7
    %v3237 = vsub.s32 4, %v3236
    %v3238 = vrot.slane %v3217, %v3237
    %v3239 = vlaneseq
    %v3240 = vshrl.u32 %v3239, 7
    %v3241 = vsub.s32 5, %v3240
    %v3242 = vrot.slane %v3217, %v3241
    %v3243 = vlaneseq
    %v3244 = vshrl.u32 %v3243, 7
    %v3245 = vsub.s32 6, %v3244
    %v3246 = vrot.slane %v3217, %v3245
    %v3766 = vunpack.c.l.b16 %v2705
    %v3767 = vunpack.c.h.b16 %v2705
    %v3768 = vunpack.c.l.b16 %v2706
    %v3769 = vunpack.c.h.b16 %v2706
    %v3770 = vunpack.c.l.b16 %v2707
    %v3771 = vunpack.c.h.b16 %v2707
    %v3772 = vunpack.c.l.b16 %v2708
    %v3773 = vunpack.c.l.b16 %v2709
    %v3774 = vunpack.c.h.b16 %v2709
    %v3775 = vunpack.c.l.b16 %v2710
    %v3776 = vunpack.c.h.b16 %v2710
    %v3777 = vunpack.c.l.b16 %v2711
    %v3778 = vunpack.c.h.b16 %v2711
    %v3779 = vunpack.c.l.b16 %v2712
    %v3780 = vunpack.c.l.b16 %v2713
    %v3781 = vunpack.c.h.b16 %v2713
    %v3782 = vunpack.c.l.b16 %v2714
    %v3783 = vunpack.c.h.b16 %v2714
    %v3784 = vunpack.c.l.b16 %v2715
    %v3785 = vunpack.c.h.b16 %v2715
    %v3786 = vunpack.c.l.b16 %v2716
    %v3787 = vunpack.c.l.b16 %v2717
    %v3788 = vunpack.c.h.b16 %v2717
    %v3789 = vunpack.c.l.b16 %v2718
    %v3790 = vunpack.c.h.b16 %v2718
    %v3791 = vunpack.c.l.b16 %v2719
    %v3792 = vunpack.c.h.b16 %v2719
    %v3793 = vunpack.c.l.b16 %v2720
    %v3794 = vunpack.c.l.b16 %v2721
    %v3795 = vunpack.c.h.b16 %v2721
    %v3796 = vunpack.c.l.b16 %v2722
    %v3797 = vunpack.c.h.b16 %v2722
    %v3798 = vunpack.c.l.b16 %v2723
    %v3799 = vunpack.c.h.b16 %v2723
    %v3800 = vunpack.c.l.b16 %v2724
    %v3801 = vunpack.c.l.b16 %v2725
    %v3802 = vunpack.c.h.b16 %v2725
    %v3803 = vunpack.c.l.b16 %v2726
    %v3804 = vunpack.c.h.b16 %v2726
    %v3805 = vunpack.c.l.b16 %v2727
    %v3806 = vunpack.c.h.b16 %v2727
    %v3807 = vunpack.c.l.b16 %v2728
    %v3808 = vunpack.c.l.b16 %v2729
    %v3809 = vunpack.c.h.b16 %v2729
    %v3810 = vunpack.c.l.b16 %v2730
    %v3811 = vunpack.c.h.b16 %v2730
    %v3812 = vunpack.c.l.b16 %v2731
    %v3813 = vunpack.c.h.b16 %v2731
    %v3814 = vunpack.c.l.b16 %v2732
    %v3815 = vunpack.c.l.b16 %v2733
    %v3816 = vunpack.c.h.b16 %v2733
    %v3817 = vunpack.c.l.b16 %v2734
    %v3818 = vunpack.c.h.b16 %v2734
    %v3819 = vunpack.c.l.b16 %v2735
    %v3820 = vunpack.c.h.b16 %v2735
    %v3821 = vunpack.c.l.b16 %v2736
    %v3822 = vunpack.c.l.b16 %v2737
    %v3823 = vunpack.c.h.b16 %v2737
    %v3824 = vunpack.c.l.b16 %v2738
    %v3825 = vunpack.c.h.b16 %v2738
    %v3826 = vunpack.c.l.b16 %v2739
    %v3827 = vunpack.c.h.b16 %v2739
    %v3828 = vunpack.c.l.b16 %v2740
    %v3829 = vunpack.c.l.b16 %v2741
    %v3830 = vunpack.c.h.b16 %v2741
    %v3831 = vunpack.c.l.b16 %v2742
    %v3832 = vunpack.c.h.b16 %v2742
    %v3833 = vunpack.c.l.b16 %v2743
    %v3834 = vunpack.c.h.b16 %v2743
    %v3835 = vunpack.c.l.b16 %v2744
    %v3836 = vunpack.c.l.b16 %v2745
    %v3837 = vunpack.c.h.b16 %v2745
    %v3838 = vunpack.c.l.b16 %v2746
    %v3839 = vunpack.c.h.b16 %v2746
    %v3840 = vunpack.c.l.b16 %v2747
    %v3841 = vunpack.c.h.b16 %v2747
    %v3842 = vunpack.c.l.b16 %v2748
    %v3843 = vunpack.c.l.b16 %v2749
    %v3844 = vunpack.c.h.b16 %v2749
    %v3845 = vunpack.c.l.b16 %v2750
    %v3846 = vunpack.c.h.b16 %v2750
    %v3847 = vunpack.c.l.b16 %v2751
    %v3848 = vunpack.c.h.b16 %v2751
    %v3849 = vunpack.c.l.b16 %v2752
    %v3850 = vunpack.c.l.b16 %v2753
    %v3851 = vunpack.c.h.b16 %v2753
    %v3852 = vunpack.c.l.b16 %v2754
    %v3853 = vunpack.c.h.b16 %v2754
    %v3854 = vunpack.c.l.b16 %v2755
    %v3855 = vunpack.c.h.b16 %v2755
    %v3856 = vunpack.c.l.b16 %v2756
    %v3857 = vunpack.c.l.b16 %v2757
    %v3858 = vunpack.c.h.b16 %v2757
    %v3859 = vunpack.c.l.b16 %v2758
    %v3860 = vunpack.c.h.b16 %v2758
    %v3861 = vunpack.c.l.b16 %v2759
    %v3862 = vunpack.c.h.b16 %v2759
    %v3863 = vunpack.c.l.b16 %v2760
    %v3864 = vunpack.c.l.b16 %v2761
    %v3865 = vunpack.c.h.b16 %v2761
    %v3866 = vunpack.c.l.b16 %v2762
    %v3867 = vunpack.c.h.b16 %v2762
    %v3868 = vunpack.c.l.b16 %v2763
    %v3869 = vunpack.c.h.b16 %v2763
    %v3870 = vunpack.c.l.b16 %v2764
    %v3871 = vunpack.c.l.b16 %v2765
    %v3872 = vunpack.c.h.b16 %v2765
    %v3873 = vunpack.c.l.b16 %v2766
    %v3874 = vunpack.c.h.b16 %v2766
    %v3875 = vunpack.c.l.b16 %v2767
    %v3876 = vunpack.c.h.b16 %v2767
    %v3877 = vunpack.c.l.b16 %v2768
    %v3878 = vunpack.c.l.b16 %v2769
    %v3879 = vunpack.c.h.b16 %v2769
    %v3880 = vunpack.c.l.b16 %v2770
    %v3881 = vunpack.c.h.b16 %v2770
    %v3882 = vunpack.c.l.b16 %v2771
    %v3883 = vunpack.c.h.b16 %v2771
    %v3884 = vunpack.c.l.b16 %v2772
    %v3885 = vunpack.c.l.b16 %v2773
    %v3886 = vunpack.c.h.b16 %v2773
    %v3887 = vunpack.c.l.b16 %v2774
    %v3888 = vunpack.c.h.b16 %v2774
    %v3889 = vunpack.c.l.b16 %v2775
    %v3890 = vunpack.c.h.b16 %v2775
    %v3891 = vunpack.c.l.b16 %v2776
    %v3892 = vunpack.c.l.b16 %v2777
    %v3893 = vunpack.c.h.b16 %v2777
    %v3894 = vunpack.c.l.b16 %v2778
    %v3895 = vunpack.c.h.b16 %v2778
    %v3896 = vunpack.c.l.b16 %v2779
    %v3897 = vunpack.c.h.b16 %v2779
    %v3898 = vunpack.c.l.b16 %v2780
    %v3899 = vunpack.c.l.b16 %v2781
    %v3900 = vunpack.c.h.b16 %v2781
    %v3901 = vunpack.c.l.b16 %v2782
    %v3902 = vunpack.c.h.b16 %v2782
    %v3903 = vunpack.c.l.b16 %v2783
    %v3904 = vunpack.c.h.b16 %v2783
    %v3905 = vunpack.c.l.b16 %v2784
    %v3906 = vunpack.c.l.b16 %v2785
    %v3907 = vunpack.c.h.b16 %v2785
    %v3908 = vunpack.c.l.b16 %v2786
    %v3909 = vunpack.c.h.b16 %v2786
    %v3910 = vunpack.c.l.b16 %v2787
    %v3911 = vunpack.c.h.b16 %v2787
    %v3912 = vunpack.c.l.b16 %v2788
    %v3913 = vunpack.c.l.b16 %v2789
    %v3914 = vunpack.c.h.b16 %v2789
    %v3915 = vunpack.c.l.b16 %v2790
    %v3916 = vunpack.c.h.b16 %v2790
    %v3917 = vunpack.c.l.b16 %v2791
    %v3918 = vunpack.c.h.b16 %v2791
    %v3919 = vunpack.c.l.b16 %v2792
    %v3920 = vunpack.c.l.b16 %v2793
    %v3921 = vunpack.c.h.b16 %v2793
    %v3922 = vunpack.c.l.b16 %v2794
    %v3923 = vunpack.c.h.b16 %v2794
    %v3924 = vunpack.c.l.b16 %v2795
    %v3925 = vunpack.c.h.b16 %v2795
    %v3926 = vunpack.c.l.b16 %v2796
    %v3927 = vunpack.c.l.b16 %v2797
    %v3928 = vunpack.c.h.b16 %v2797
    %v3929 = vunpack.c.l.b16 %v2798
    %v3930 = vunpack.c.h.b16 %v2798
    %v3931 = vunpack.c.l.b16 %v2799
    %v3932 = vunpack.c.h.b16 %v2799
    %v3933 = vunpack.c.l.b16 %v2800
    %v3934 = vunpack.c.l.b16 %v2801
    %v3935 = vunpack.c.h.b16 %v2801
    %v3936 = vunpack.c.l.b16 %v2802
    %v3937 = vunpack.c.h.b16 %v2802
    %v3938 = vunpack.c.l.b16 %v2803
    %v3939 = vunpack.c.h.b16 %v2803
    %v3940 = vunpack.c.l.b16 %v2804
    %v3941 = vunpack.c.l.b16 %v2805
    %v3942 = vunpack.c.h.b16 %v2805
    %v3943 = vunpack.c.l.b16 %v2806
    %v3944 = vunpack.c.h.b16 %v2806
    %v3945 = vunpack.c.l.b16 %v2807
    %v3946 = vunpack.c.h.b16 %v2807
    %v3947 = vunpack.c.l.b16 %v2808
    %v3948 = vunpack.c.l.b16 %v2809
    %v3949 = vunpack.c.h.b16 %v2809
    %v3950 = vunpack.c.l.b16 %v2810
    %v3951 = vunpack.c.h.b16 %v2810
    %v3952 = vunpack.c.l.b16 %v2811
    %v3953 = vunpack.c.h.b16 %v2811
    %v3954 = vunpack.c.l.b16 %v2812
    %v3955 = vunpack.c.l.b16 %v2813
    %v3956 = vunpack.c.h.b16 %v2813
    %v3957 = vunpack.c.l.b16 %v2814
    %v3958 = vunpack.c.h.b16 %v2814
    %v3959 = vunpack.c.l.b16 %v2815
    %v3960 = vunpack.c.h.b16 %v2815
    %v3961 = vunpack.c.l.b16 %v2816
    %v3962 = vunpack.c.l.b16 %v2817
    %v3963 = vunpack.c.h.b16 %v2817
    %v3964 = vunpack.c.l.b16 %v2818
    %v3965 = vunpack.c.h.b16 %v2818
    %v3966 = vunpack.c.l.b16 %v2819
    %v3967 = vunpack.c.h.b16 %v2819
    %v3968 = vunpack.c.l.b16 %v2820
    %v3969 = vunpack.c.l.b16 %v2821
    %v3970 = vunpack.c.h.b16 %v2821
    %v3971 = vunpack.c.l.b16 %v2822
    %v3972 = vunpack.c.h.b16 %v2822
    %v3973 = vunpack.c.l.b16 %v2823
    %v3974 = vunpack.c.h.b16 %v2823
    %v3975 = vunpack.c.l.b16 %v2824
    %v3976 = vunpack.c.l.b16 %v2825
    %v3977 = vunpack.c.h.b16 %v2825
    %v3978 = vunpack.c.l.b16 %v2826
    %v3979 = vunpack.c.h.b16 %v2826
    %v3980 = vunpack.c.l.b16 %v2827
    %v3981 = vunpack.c.h.b16 %v2827
    %v3982 = vunpack.c.l.b16 %v2828
    %v3983 = vunpack.c.l.b16 %v2829
    %v3984 = vunpack.c.h.b16 %v2829
    %v3985 = vunpack.c.l.b16 %v2830
    %v3986 = vunpack.c.h.b16 %v2830
    %v3987 = vunpack.c.l.b16 %v2831
    %v3988 = vunpack.c.h.b16 %v2831
    %v3989 = vunpack.c.l.b16 %v2832
    %v3990 = vunpack.c.l.b16 %v2833
    %v3991 = vunpack.c.h.b16 %v2833
    %v3992 = vunpack.c.l.b16 %v2834
    %v3993 = vunpack.c.h.b16 %v2834
    %v3994 = vunpack.c.l.b16 %v2835
    %v3995 = vunpack.c.h.b16 %v2835
    %v3996 = vunpack.c.l.b16 %v2836
    %v3997 = vunpack.c.l.b16 %v2837
    %v3998 = vunpack.c.h.b16 %v2837
    %v3999 = vunpack.c.l.b16 %v2838
    %v4000 = vunpack.c.h.b16 %v2838
    %v4001 = vunpack.c.l.b16 %v2839
    %v4002 = vunpack.c.h.b16 %v2839
    %v4003 = vunpack.c.l.b16 %v2840
    %v4004 = vunpack.c.l.b16 %v2841
    %v4005 = vunpack.c.h.b16 %v2841
    %v4006 = vunpack.c.l.b16 %v2842
    %v4007 = vunpack.c.h.b16 %v2842
    %v4008 = vunpack.c.l.b16 %v2843
    %v4009 = vunpack.c.h.b16 %v2843
    %v4010 = vunpack.c.l.b16 %v2844
    %v4011 = vunpack.c.l.b16 %v2845
    %v4012 = vunpack.c.h.b16 %v2845
    %v4013 = vunpack.c.l.b16 %v2846
    %v4014 = vunpack.c.h.b16 %v2846
    %v4015 = vunpack.c.l.b16 %v2847
    %v4016 = vunpack.c.h.b16 %v2847
    %v4017 = vunpack.c.l.b16 %v2848
    %v4018 = vunpack.c.l.b16 %v2849
    %v4019 = vunpack.c.h.b16 %v2849
    %v4020 = vunpack.c.l.b16 %v2850
    %v4021 = vunpack.c.h.b16 %v2850
    %v4022 = vunpack.c.l.b16 %v2851
    %v4023 = vunpack.c.h.b16 %v2851
    %v4024 = vunpack.c.l.b16 %v2852
    %v4025 = vunpack.c.l.b16 %v2853
    %v4026 = vunpack.c.h.b16 %v2853
    %v4027 = vunpack.c.l.b16 %v2854
    %v4028 = vunpack.c.h.b16 %v2854
    %v4029 = vunpack.c.l.b16 %v2855
    %v4030 = vunpack.c.h.b16 %v2855
    %v4031 = vunpack.c.l.b16 %v2856
    %v4032 = vunpack.c.l.b16 %v2857
    %v4033 = vunpack.c.h.b16 %v2857
    %v4034 = vunpack.c.l.b16 %v2858
    %v4035 = vunpack.c.h.b16 %v2858
    %v4036 = vunpack.c.l.b16 %v2859
    %v4037 = vunpack.c.h.b16 %v2859
    %v4038 = vunpack.c.l.b16 %v2860
    %v4039 = vunpack.c.l.b16 %v2861
    %v4040 = vunpack.c.h.b16 %v2861
    %v4041 = vunpack.c.l.b16 %v2862
    %v4042 = vunpack.c.h.b16 %v2862
    %v4043 = vunpack.c.l.b16 %v2863
    %v4044 = vunpack.c.h.b16 %v2863
    %v4045 = vunpack.c.l.b16 %v2864
    %v4046 = vunpack.c.l.b16 %v2865
    %v4047 = vunpack.c.h.b16 %v2865
    %v4048 = vunpack.c.l.b16 %v2866
    %v4049 = vunpack.c.h.b16 %v2866
    %v4050 = vunpack.c.l.b16 %v2867
    %v4051 = vunpack.c.h.b16 %v2867
    %v4052 = vunpack.c.l.b16 %v2868
    %v4053 = vunpack.c.l.b16 %v2869
    %v4054 = vunpack.c.h.b16 %v2869
    %v4055 = vunpack.c.l.b16 %v2870
    %v4056 = vunpack.c.h.b16 %v2870
    %v4057 = vunpack.c.l.b16 %v2871
    %v4058 = vunpack.c.h.b16 %v2871
    %v4059 = vunpack.c.l.b16 %v2872
    %v4060 = vunpack.c.l.b16 %v2873
    %v4061 = vunpack.c.h.b16 %v2873
    %v4062 = vunpack.c.l.b16 %v2874
    %v4063 = vunpack.c.h.b16 %v2874
    %v4064 = vunpack.c.l.b16 %v2875
    %v4065 = vunpack.c.h.b16 %v2875
    %v4066 = vunpack.c.l.b16 %v2876
    %v4067 = vunpack.c.l.b16 %v2877
    %v4068 = vunpack.c.h.b16 %v2877
    %v4069 = vunpack.c.l.b16 %v2878
    %v4070 = vunpack.c.h.b16 %v2878
    %v4071 = vunpack.c.l.b16 %v2879
    %v4072 = vunpack.c.h.b16 %v2879
    %v4073 = vunpack.c.l.b16 %v2880
    %v4074 = vunpack.c.l.b16 %v2881
    %v4075 = vunpack.c.h.b16 %v2881
    %v4076 = vunpack.c.l.b16 %v2882
    %v4077 = vunpack.c.h.b16 %v2882
    %v4078 = vunpack.c.l.b16 %v2883
    %v4079 = vunpack.c.h.b16 %v2883
    %v4080 = vunpack.c.l.b16 %v2884
    %v4081 = vunpack.c.l.b16 %v2885
    %v4082 = vunpack.c.h.b16 %v2885
    %v4083 = vunpack.c.l.b16 %v2886
    %v4084 = vunpack.c.h.b16 %v2886
    %v4085 = vunpack.c.l.b16 %v2887
    %v4086 = vunpack.c.h.b16 %v2887
    %v4087 = vunpack.c.l.b16 %v2888
    %v4088 = vunpack.c.l.b16 %v2889
    %v4089 = vunpack.c.h.b16 %v2889
    %v4090 = vunpack.c.l.b16 %v2890
    %v4091 = vunpack.c.h.b16 %v2890
    %v4092 = vunpack.c.l.b16 %v2891
    %v4093 = vunpack.c.h.b16 %v2891
    %v4094 = vunpack.c.l.b16 %v2892
    %v4095 = vunpack.c.l.b16 %v2893
    %v4096 = vunpack.c.h.b16 %v2893
    %v4097 = vunpack.c.l.b16 %v2894
    %v4098 = vunpack.c.h.b16 %v2894
    %v4099 = vunpack.c.l.b16 %v2895
    %v4100 = vunpack.c.h.b16 %v2895
    %v4101 = vunpack.c.l.b16 %v2896
    %v4102 = vunpack.c.l.b16 %v2897
    %v4103 = vunpack.c.h.b16 %v2897
    %v4104 = vunpack.c.l.b16 %v2898
    %v4105 = vunpack.c.h.b16 %v2898
    %v4106 = vunpack.c.l.b16 %v2899
    %v4107 = vunpack.c.h.b16 %v2899
    %v4108 = vunpack.c.l.b16 %v2900
    %v4109 = vunpack.c.l.b16 %v2901
    %v4110 = vunpack.c.h.b16 %v2901
    %v4111 = vunpack.c.l.b16 %v2902
    %v4112 = vunpack.c.h.b16 %v2902
    %v4113 = vunpack.c.l.b16 %v2903
    %v4114 = vunpack.c.h.b16 %v2903
    %v4115 = vunpack.c.l.b16 %v2904
    %v4116 = vunpack.c.l.b16 %v2905
    %v4117 = vunpack.c.h.b16 %v2905
    %v4118 = vunpack.c.l.b16 %v2906
    %v4119 = vunpack.c.h.b16 %v2906
    %v4120 = vunpack.c.l.b16 %v2907
    %v4121 = vunpack.c.h.b16 %v2907
    %v4122 = vunpack.c.l.b16 %v2908
    %v4123 = vunpack.c.l.b16 %v2909
    %v4124 = vunpack.c.h.b16 %v2909
    %v4125 = vunpack.c.l.b16 %v2910
    %v4126 = vunpack.c.h.b16 %v2910
    %v4127 = vunpack.c.l.b16 %v2911
    %v4128 = vunpack.c.h.b16 %v2911
    %v4129 = vunpack.c.l.b16 %v2912
    %v4130 = vunpack.c.l.b16 %v2913
    %v4131 = vunpack.c.h.b16 %v2913
    %v4132 = vunpack.c.l.b16 %v2914
    %v4133 = vunpack.c.h.b16 %v2914
    %v4134 = vunpack.c.l.b16 %v2915
    %v4135 = vunpack.c.h.b16 %v2915
    %v4136 = vunpack.c.l.b16 %v2916
    %v4137 = vunpack.c.l.b16 %v2917
    %v4138 = vunpack.c.h.b16 %v2917
    %v4139 = vunpack.c.l.b16 %v2918
    %v4140 = vunpack.c.h.b16 %v2918
    %v4141 = vunpack.c.l.b16 %v2919
    %v4142 = vunpack.c.h.b16 %v2919
    %v4143 = vunpack.c.l.b16 %v2920
    %v4144 = vunpack.c.l.b16 %v2921
    %v4145 = vunpack.c.h.b16 %v2921
    %v4146 = vunpack.c.l.b16 %v2922
    %v4147 = vunpack.c.h.b16 %v2922
    %v4148 = vunpack.c.l.b16 %v2923
    %v4149 = vunpack.c.h.b16 %v2923
    %v4150 = vunpack.c.l.b16 %v2924
    %v4151 = vunpack.c.l.b16 %v2925
    %v4152 = vunpack.c.h.b16 %v2925
    %v4153 = vunpack.c.l.b16 %v2926
    %v4154 = vunpack.c.h.b16 %v2926
    %v4155 = vunpack.c.l.b16 %v2927
    %v4156 = vunpack.c.h.b16 %v2927
    %v4157 = vunpack.c.l.b16 %v2928
    %v4158 = vunpack.c.l.b16 %v2929
    %v4159 = vunpack.c.h.b16 %v2929
    %v4160 = vunpack.c.l.b16 %v2930
    %v4161 = vunpack.c.h.b16 %v2930
    %v4162 = vunpack.c.l.b16 %v2931
    %v4163 = vunpack.c.h.b16 %v2931
    %v4164 = vunpack.c.l.b16 %v2932
    %v4165 = vunpack.c.l.b16 %v2933
    %v4166 = vunpack.c.h.b16 %v2933
    %v4167 = vunpack.c.l.b16 %v2934
    %v4168 = vunpack.c.h.b16 %v2934
    %v4169 = vunpack.c.l.b16 %v2935
    %v4170 = vunpack.c.h.b16 %v2935
    %v4171 = vunpack.c.l.b16 %v2936
    %v4172 = vunpack.c.l.b16 %v2937
    %v4173 = vunpack.c.h.b16 %v2937
    %v4174 = vunpack.c.l.b16 %v2938
    %v4175 = vunpack.c.h.b16 %v2938
    %v4176 = vunpack.c.l.b16 %v2939
    %v4177 = vunpack.c.h.b16 %v2939
    %v4178 = vunpack.c.l.b16 %v2940
    %v4179 = vunpack.c.l.b16 %v2941
    %v4180 = vunpack.c.h.b16 %v2941
    %v4181 = vunpack.c.l.b16 %v2942
    %v4182 = vunpack.c.h.b16 %v2942
    %v4183 = vunpack.c.l.b16 %v2943
    %v4184 = vunpack.c.h.b16 %v2943
    %v4185 = vunpack.c.l.b16 %v2944
    %v4186 = vunpack.c.l.b16 %v2945
    %v4187 = vunpack.c.h.b16 %v2945
    %v4188 = vunpack.c.l.b16 %v2946
    %v4189 = vunpack.c.h.b16 %v2946
    %v4190 = vunpack.c.l.b16 %v2947
    %v4191 = vunpack.c.h.b16 %v2947
    %v4192 = vunpack.c.l.b16 %v2948
    %v4193 = vunpack.c.l.b16 %v2949
    %v4194 = vunpack.c.h.b16 %v2949
    %v4195 = vunpack.c.l.b16 %v2950
    %v4196 = vunpack.c.h.b16 %v2950
    %v4197 = vunpack.c.l.b16 %v2951
    %v4198 = vunpack.c.h.b16 %v2951
    %v4199 = vunpack.c.l.b16 %v2952
    %v4200 = vunpack.c.l.b16 %v2953
    %v4201 = vunpack.c.h.b16 %v2953
    %v4202 = vunpack.c.l.b16 %v2954
    %v4203 = vunpack.c.h.b16 %v2954
    %v4204 = vunpack.c.l.b16 %v2955
    %v4205 = vunpack.c.h.b16 %v2955
    %v4206 = vunpack.c.l.b16 %v2956
    %v4207 = vunpack.c.l.b16 %v2957
    %v4208 = vunpack.c.h.b16 %v2957
    %v4209 = vunpack.c.l.b16 %v2958
    %v4210 = vunpack.c.h.b16 %v2958
    %v4211 = vunpack.c.l.b16 %v2959
    %v4212 = vunpack.c.h.b16 %v2959
    %v4213 = vunpack.c.l.b16 %v2960
    %v4214 = vunpack.c.l.b16 %v2961
    %v4215 = vunpack.c.h.b16 %v2961
    %v4216 = vunpack.c.l.b16 %v2962
    %v4217 = vunpack.c.h.b16 %v2962
    %v4218 = vunpack.c.l.b16 %v2963
    %v4219 = vunpack.c.h.b16 %v2963
    %v4220 = vunpack.c.l.b16 %v2964
    %v4221 = vunpack.c.l.b16 %v2965
    %v4222 = vunpack.c.h.b16 %v2965
    %v4223 = vunpack.c.l.b16 %v2966
    %v4224 = vunpack.c.h.b16 %v2966
    %v4225 = vunpack.c.l.b16 %v2967
    %v4226 = vunpack.c.h.b16 %v2967
    %v4227 = vunpack.c.l.b16 %v2968
    %v4228 = vunpack.c.l.b16 %v2969
    %v4229 = vunpack.c.h.b16 %v2969
    %v4230 = vunpack.c.l.b16 %v2970
    %v4231 = vunpack.c.h.b16 %v2970
    %v4232 = vunpack.c.l.b16 %v2971
    %v4233 = vunpack.c.h.b16 %v2971
    %v4234 = vunpack.c.l.b16 %v2972
    %v4235 = vunpack.c.l.b16 %v2973
    %v4236 = vunpack.c.h.b16 %v2973
    %v4237 = vunpack.c.l.b16 %v2974
    %v4238 = vunpack.c.h.b16 %v2974
    %v4239 = vunpack.c.l.b16 %v2975
    %v4240 = vunpack.c.h.b16 %v2975
    %v4241 = vunpack.c.l.b16 %v2976
    %v4242 = vunpack.c.l.b16 %v2977
    %v4243 = vunpack.c.h.b16 %v2977
    %v4244 = vunpack.c.l.b16 %v2978
    %v4245 = vunpack.c.h.b16 %v2978
    %v4246 = vunpack.c.l.b16 %v2979
    %v4247 = vunpack.c.h.b16 %v2979
    %v4248 = vunpack.c.l.b16 %v2980
    %v4249 = vunpack.c.l.b16 %v2981
    %v4250 = vunpack.c.h.b16 %v2981
    %v4251 = vunpack.c.l.b16 %v2982
    %v4252 = vunpack.c.h.b16 %v2982
    %v4253 = vunpack.c.l.b16 %v2983
    %v4254 = vunpack.c.h.b16 %v2983
    %v4255 = vunpack.c.l.b16 %v2984
    %v4256 = vunpack.c.l.b16 %v2985
    %v4257 = vunpack.c.h.b16 %v2985
    %v4258 = vunpack.c.l.b16 %v2986
    %v4259 = vunpack.c.h.b16 %v2986
    %v4260 = vunpack.c.l.b16 %v2987
    %v4261 = vunpack.c.h.b16 %v2987
    %v4262 = vunpack.c.l.b16 %v2988
    %v4263 = vunpack.c.l.b16 %v2989
    %v4264 = vunpack.c.h.b16 %v2989
    %v4265 = vunpack.c.l.b16 %v2990
    %v4266 = vunpack.c.h.b16 %v2990
    %v4267 = vunpack.c.l.b16 %v2991
    %v4268 = vunpack.c.h.b16 %v2991
    %v4269 = vunpack.c.l.b16 %v2992
    %v4270 = vunpack.c.l.b16 %v2993
    %v4271 = vunpack.c.h.b16 %v2993
    %v4272 = vunpack.c.l.b16 %v2994
    %v4273 = vunpack.c.h.b16 %v2994
    %v4274 = vunpack.c.l.b16 %v2995
    %v4275 = vunpack.c.h.b16 %v2995
    %v4276 = vunpack.c.l.b16 %v2996
    %v4277 = vunpack.c.l.b16 %v2997
    %v4278 = vunpack.c.h.b16 %v2997
    %v4279 = vunpack.c.l.b16 %v2998
    %v4280 = vunpack.c.h.b16 %v2998
    %v4281 = vunpack.c.l.b16 %v2999
    %v4282 = vunpack.c.h.b16 %v2999
    %v4283 = vunpack.c.l.b16 %v3000
    %v4284 = vunpack.c.l.b16 %v3001
    %v4285 = vunpack.c.h.b16 %v3001
    %v4286 = vunpack.c.l.b16 %v3002
    %v4287 = vunpack.c.h.b16 %v3002
    %v4288 = vunpack.c.l.b16 %v3003
    %v4289 = vunpack.c.h.b16 %v3003
    %v4290 = vunpack.c.l.b16 %v3004
    %v4291 = vunpack.c.l.b16 %v3005
    %v4292 = vunpack.c.h.b16 %v3005
    %v4293 = vunpack.c.l.b16 %v3006
    %v4294 = vunpack.c.h.b16 %v3006
    %v4295 = vunpack.c.l.b16 %v3007
    %v4296 = vunpack.c.h.b16 %v3007
    %v4297 = vunpack.c.l.b16 %v3008
    %v4298 = vunpack.c.l.b16 %v3009
    %v4299 = vunpack.c.h.b16 %v3009
    %v4300 = vunpack.c.l.b16 %v3010
    %v4301 = vunpack.c.h.b16 %v3010
    %v4302 = vunpack.c.l.b16 %v3011
    %v4303 = vunpack.c.h.b16 %v3011
    %v4304 = vunpack.c.l.b16 %v3012
    %v4305 = vunpack.c.l.b16 %v3013
    %v4306 = vunpack.c.h.b16 %v3013
    %v4307 = vunpack.c.l.b16 %v3014
    %v4308 = vunpack.c.h.b16 %v3014
    %v4309 = vunpack.c.l.b16 %v3015
    %v4310 = vunpack.c.h.b16 %v3015
    %v4311 = vunpack.c.l.b16 %v3016
    %v4312 = vunpack.c.l.b16 %v3017
    %v4313 = vunpack.c.h.b16 %v3017
    %v4314 = vunpack.c.l.b16 %v3018
    %v4315 = vunpack.c.h.b16 %v3018
    %v4316 = vunpack.c.l.b16 %v3019
    %v4317 = vunpack.c.h.b16 %v3019
    %v4318 = vunpack.c.l.b16 %v3020
    %v4319 = vunpack.c.l.b16 %v3021
    %v4320 = vunpack.c.h.b16 %v3021
    %v4321 = vunpack.c.l.b16 %v3022
    %v4322 = vunpack.c.h.b16 %v3022
    %v4323 = vunpack.c.l.b16 %v3023
    %v4324 = vunpack.c.h.b16 %v3023
    %v4325 = vunpack.c.l.b16 %v3024
    %v4326 = vunpack.c.l.b16 %v3025
    %v4327 = vunpack.c.h.b16 %v3025
    %v4328 = vunpack.c.l.b16 %v3026
    %v4329 = vunpack.c.h.b16 %v3026
    %v4330 = vunpack.c.l.b16 %v3027
    %v4331 = vunpack.c.h.b16 %v3027
    %v4332 = vunpack.c.l.b16 %v3028
    %v4333 = vunpack.c.l.b16 %v3029
    %v4334 = vunpack.c.h.b16 %v3029
    %v4335 = vunpack.c.l.b16 %v3030
    %v4336 = vunpack.c.h.b16 %v3030
    %v4337 = vunpack.c.l.b16 %v3031
    %v4338 = vunpack.c.h.b16 %v3031
    %v4339 = vunpack.c.l.b16 %v3032
    %v4340 = vunpack.c.l.b16 %v3033
    %v4341 = vunpack.c.h.b16 %v3033
    %v4342 = vunpack.c.l.b16 %v3034
    %v4343 = vunpack.c.h.b16 %v3034
    %v4344 = vunpack.c.l.b16 %v3035
    %v4345 = vunpack.c.h.b16 %v3035
    %v4346 = vunpack.c.l.b16 %v3036
    %v4347 = vunpack.c.l.b16 %v3037
    %v4348 = vunpack.c.h.b16 %v3037
    %v4349 = vunpack.c.l.b16 %v3038
    %v4350 = vunpack.c.h.b16 %v3038
    %v4351 = vunpack.c.l.b16 %v3039
    %v4352 = vunpack.c.h.b16 %v3039
    %v4353 = vunpack.c.l.b16 %v3040
    %v4354 = vunpack.c.l.b16 %v3041
    %v4355 = vunpack.c.h.b16 %v3041
    %v4356 = vunpack.c.l.b16 %v3042
    %v4357 = vunpack.c.h.b16 %v3042
    %v4358 = vunpack.c.l.b16 %v3043
    %v4359 = vunpack.c.h.b16 %v3043
    %v4360 = vunpack.c.l.b16 %v3044
    %v4361 = vunpack.c.l.b16 %v3045
    %v4362 = vunpack.c.h.b16 %v3045
    %v4363 = vunpack.c.l.b16 %v3046
    %v4364 = vunpack.c.h.b16 %v3046
    %v4365 = vunpack.c.l.b16 %v3047
    %v4366 = vunpack.c.h.b16 %v3047
    %v4367 = vunpack.c.l.b16 %v3048
    %v4368 = vunpack.c.l.b16 %v3049
    %v4369 = vunpack.c.h.b16 %v3049
    %v4370 = vunpack.c.l.b16 %v3050
    %v4371 = vunpack.c.h.b16 %v3050
    %v4372 = vunpack.c.l.b16 %v3051
    %v4373 = vunpack.c.h.b16 %v3051
    %v4374 = vunpack.c.l.b16 %v3052
    %v4375 = vunpack.c.l.b16 %v3053
    %v4376 = vunpack.c.h.b16 %v3053
    %v4377 = vunpack.c.l.b16 %v3054
    %v4378 = vunpack.c.h.b16 %v3054
    %v4379 = vunpack.c.l.b16 %v3055
    %v4380 = vunpack.c.h.b16 %v3055
    %v4381 = vunpack.c.l.b16 %v3056
    %v4382 = vunpack.c.l.b16 %v3057
    %v4383 = vunpack.c.h.b16 %v3057
    %v4384 = vunpack.c.l.b16 %v3058
    %v4385 = vunpack.c.h.b16 %v3058
    %v4386 = vunpack.c.l.b16 %v3059
    %v4387 = vunpack.c.h.b16 %v3059
    %v4388 = vunpack.c.l.b16 %v3060
    %v4389 = vunpack.c.l.b16 %v3061
    %v4390 = vunpack.c.h.b16 %v3061
    %v4391 = vunpack.c.l.b16 %v3062
    %v4392 = vunpack.c.h.b16 %v3062
    %v4393 = vunpack.c.l.b16 %v3063
    %v4394 = vunpack.c.h.b16 %v3063
    %v4395 = vunpack.c.l.b16 %v3064
    %v4396 = vunpack.c.l.b16 %v3065
    %v4397 = vunpack.c.h.b16 %v3065
    %v4398 = vunpack.c.l.b16 %v3066
    %v4399 = vunpack.c.h.b16 %v3066
    %v4400 = vunpack.c.l.b16 %v3067
    %v4401 = vunpack.c.h.b16 %v3067
    %v4402 = vunpack.c.l.b16 %v3068
    %v4403 = vunpack.c.l.b16 %v3069
    %v4404 = vunpack.c.h.b16 %v3069
    %v4405 = vunpack.c.l.b16 %v3070
    %v4406 = vunpack.c.h.b16 %v3070
    %v4407 = vunpack.c.l.b16 %v3071
    %v4408 = vunpack.c.h.b16 %v3071
    %v4409 = vunpack.c.l.b16 %v3072
    %v4410 = vunpack.c.l.b16 %v3073
    %v4411 = vunpack.c.h.b16 %v3073
    %v4412 = vunpack.c.l.b16 %v3074
    %v4413 = vunpack.c.h.b16 %v3074
    %v4414 = vunpack.c.l.b16 %v3075
    %v4415 = vunpack.c.h.b16 %v3075
    %v4416 = vunpack.c.l.b16 %v3076
    %v4417 = vunpack.c.l.b16 %v3077
    %v4418 = vunpack.c.h.b16 %v3077
    %v4419 = vunpack.c.l.b16 %v3078
    %v4420 = vunpack.c.h.b16 %v3078
    %v4421 = vunpack.c.l.b16 %v3079
    %v4422 = vunpack.c.h.b16 %v3079
    %v4423 = vunpack.c.l.b16 %v3080
    %v4424 = vunpack.c.l.b16 %v3081
    %v4425 = vunpack.c.h.b16 %v3081
    %v4426 = vunpack.c.l.b16 %v3082
    %v4427 = vunpack.c.h.b16 %v3082
    %v4428 = vunpack.c.l.b16 %v3083
    %v4429 = vunpack.c.h.b16 %v3083
    %v4430 = vunpack.c.l.b16 %v3084
    %v4431 = vunpack.c.l.b16 %v3085
    %v4432 = vunpack.c.h.b16 %v3085
    %v4433 = vunpack.c.l.b16 %v3086
    %v4434 = vunpack.c.h.b16 %v3086
    %v4435 = vunpack.c.l.b16 %v3087
    %v4436 = vunpack.c.h.b16 %v3087
    %v4437 = vunpack.c.l.b16 %v3088
    %v4438 = vunpack.c.l.b16 %v3089
    %v4439 = vunpack.c.h.b16 %v3089
    %v4440 = vunpack.c.l.b16 %v3090
    %v4441 = vunpack.c.h.b16 %v3090
    %v4442 = vunpack.c.l.b16 %v3091
    %v4443 = vunpack.c.h.b16 %v3091
    %v4444 = vunpack.c.l.b16 %v3092
    %v4445 = vunpack.c.l.b16 %v3093
    %v4446 = vunpack.c.h.b16 %v3093
    %v4447 = vunpack.c.l.b16 %v3094
    %v4448 = vunpack.c.h.b16 %v3094
    %v4449 = vunpack.c.l.b16 %v3095
    %v4450 = vunpack.c.h.b16 %v3095
    %v4451 = vunpack.c.l.b16 %v3096
    %v4452 = vunpack.c.l.b16 %v3097
    %v4453 = vunpack.c.h.b16 %v3097
    %v4454 = vunpack.c.l.b16 %v3098
    %v4455 = vunpack.c.h.b16 %v3098
    %v4456 = vunpack.c.l.b16 %v3099
    %v4457 = vunpack.c.h.b16 %v3099
    %v4458 = vunpack.c.l.b16 %v3100
    %v4459 = vunpack.c.l.b16 %v3101
    %v4460 = vunpack.c.h.b16 %v3101
    %v4461 = vunpack.c.l.b16 %v3102
    %v4462 = vunpack.c.h.b16 %v3102
    %v4463 = vunpack.c.l.b16 %v3103
    %v4464 = vunpack.c.h.b16 %v3103
    %v4465 = vunpack.c.l.b16 %v3104
    %v4466 = vunpack.c.l.b16 %v3105
    %v4467 = vunpack.c.h.b16 %v3105
    %v4468 = vunpack.c.l.b16 %v3106
    %v4469 = vunpack.c.h.b16 %v3106
    %v4470 = vunpack.c.l.b16 %v3107
    %v4471 = vunpack.c.h.b16 %v3107
    %v4472 = vunpack.c.l.b16 %v3108
    %v4473 = vunpack.c.l.b16 %v3109
    %v4474 = vunpack.c.h.b16 %v3109
    %v4475 = vunpack.c.l.b16 %v3110
    %v4476 = vunpack.c.h.b16 %v3110
    %v4477 = vunpack.c.l.b16 %v3111
    %v4478 = vunpack.c.h.b16 %v3111
    %v4479 = vunpack.c.l.b16 %v3112
    %v4480 = vunpack.c.l.b16 %v3113
    %v4481 = vunpack.c.h.b16 %v3113
    %v4482 = vunpack.c.l.b16 %v3114
    %v4483 = vunpack.c.h.b16 %v3114
    %v4484 = vunpack.c.l.b16 %v3115
    %v4485 = vunpack.c.h.b16 %v3115
    %v4486 = vunpack.c.l.b16 %v3116
    %v4487 = vunpack.c.l.b16 %v3117
    %v4488 = vunpack.c.h.b16 %v3117
    %v4489 = vunpack.c.l.b16 %v3118
    %v4490 = vunpack.c.h.b16 %v3118
    %v4491 = vunpack.c.l.b16 %v3119
    %v4492 = vunpack.c.h.b16 %v3119
    %v4493 = vunpack.c.l.b16 %v3120
    %v4494 = vunpack.c.l.b16 %v3121
    %v4495 = vunpack.c.h.b16 %v3121
    %v4496 = vunpack.c.l.b16 %v3122
    %v4497 = vunpack.c.h.b16 %v3122
    %v4498 = vunpack.c.l.b16 %v3123
    %v4499 = vunpack.c.h.b16 %v3123
    %v4500 = vunpack.c.l.b16 %v3124
    %v4501 = vunpack.c.l.b16 %v3125
    %v4502 = vunpack.c.h.b16 %v3125
    %v4503 = vunpack.c.l.b16 %v3126
    %v4504 = vunpack.c.h.b16 %v3126
    %v4505 = vunpack.c.l.b16 %v3127
    %v4506 = vunpack.c.h.b16 %v3127
    %v4507 = vunpack.c.l.b16 %v3128
    %v4508 = vunpack.c.l.b16 %v3129
    %v4509 = vunpack.c.h.b16 %v3129
    %v4510 = vunpack.c.l.b16 %v3130
    %v4511 = vunpack.c.h.b16 %v3130
    %v4512 = vunpack.c.l.b16 %v3131
    %v4513 = vunpack.c.h.b16 %v3131
    %v4514 = vunpack.c.l.b16 %v3132
    %v4515 = vunpack.c.l.b16 %v3133
    %v4516 = vunpack.c.h.b16 %v3133
    %v4517 = vunpack.c.l.b16 %v3134
    %v4518 = vunpack.c.h.b16 %v3134
    %v4519 = vunpack.c.l.b16 %v3135
    %v4520 = vunpack.c.h.b16 %v3135
    %v4521 = vunpack.c.l.b16 %v3136
    %v4522 = vunpack.c.l.b16 %v3137
    %v4523 = vunpack.c.h.b16 %v3137
    %v4524 = vunpack.c.l.b16 %v3138
    %v4525 = vunpack.c.h.b16 %v3138
    %v4526 = vunpack.c.l.b16 %v3139
    %v4527 = vunpack.c.h.b16 %v3139
    %v4528 = vunpack.c.l.b16 %v3140
    %v4529 = vunpack.c.l.b16 %v3141
    %v4530 = vunpack.c.h.b16 %v3141
    %v4531 = vunpack.c.l.b16 %v3142
    %v4532 = vunpack.c.h.b16 %v3142
    %v4533 = vunpack.c.l.b16 %v3143
    %v4534 = vunpack.c.h.b16 %v3143
    %v4535 = vunpack.c.l.b16 %v3144
    %v4536 = vunpack.c.l.b16 %v3145
    %v4537 = vunpack.c.h.b16 %v3145
    %v4538 = vunpack.c.l.b16 %v3146
    %v4539 = vunpack.c.h.b16 %v3146
    %v4540 = vunpack.c.l.b16 %v3147
    %v4541 = vunpack.c.h.b16 %v3147
    %v4542 = vunpack.c.l.b16 %v3148
    %v4543 = vunpack.c.l.b16 %v3149
    %v4544 = vunpack.c.h.b16 %v3149
    %v4545 = vunpack.c.l.b16 %v3150
    %v4546 = vunpack.c.h.b16 %v3150
    %v4547 = vunpack.c.l.b16 %v3151
    %v4548 = vunpack.c.h.b16 %v3151
    %v4549 = vunpack.c.l.b16 %v3152
    %v4550 = vunpack.c.l.b16 %v3153
    %v4551 = vunpack.c.h.b16 %v3153
    %v4552 = vunpack.c.l.b16 %v3154
    %v4553 = vunpack.c.h.b16 %v3154
    %v4554 = vunpack.c.l.b16 %v3155
    %v4555 = vunpack.c.h.b16 %v3155
    %v4556 = vunpack.c.l.b16 %v3156
    %v4557 = vunpack.c.l.b16 %v3157
    %v4558 = vunpack.c.h.b16 %v3157
    %v4559 = vunpack.c.l.b16 %v3158
    %v4560 = vunpack.c.h.b16 %v3158
    %v4561 = vunpack.c.l.b16 %v3159
    %v4562 = vunpack.c.h.b16 %v3159
    %v4563 = vunpack.c.l.b16 %v3160
    %v4564 = vunpack.c.l.b16 %v3161
    %v4565 = vunpack.c.h.b16 %v3161
    %v4566 = vunpack.c.l.b16 %v3162
    %v4567 = vunpack.c.h.b16 %v3162
    %v4568 = vunpack.c.l.b16 %v3163
    %v4569 = vunpack.c.h.b16 %v3163
    %v4570 = vunpack.c.l.b16 %v3164
    %v4571 = vunpack.c.l.b16 %v3165
    %v4572 = vunpack.c.h.b16 %v3165
    %v4573 = vunpack.c.l.b16 %v3166
    %v4574 = vunpack.c.h.b16 %v3166
    %v4575 = vunpack.c.l.b16 %v3167
    %v4576 = vunpack.c.h.b16 %v3167
    %v4577 = vunpack.c.l.b16 %v3168
    %v4578 = vunpack.c.l.b16 %v3169
    %v4579 = vunpack.c.h.b16 %v3169
    %v4580 = vunpack.c.l.b16 %v3170
    %v4581 = vunpack.c.h.b16 %v3170
    %v4582 = vunpack.c.l.b16 %v3171
    %v4583 = vunpack.c.h.b16 %v3171
    %v4584 = vunpack.c.l.b16 %v3172
    %v4585 = vunpack.c.l.b16 %v3173
    %v4586 = vunpack.c.h.b16 %v3173
    %v4587 = vunpack.c.l.b16 %v3174
    %v4588 = vunpack.c.h.b16 %v3174
    %v4589 = vunpack.c.l.b16 %v3175
    %v4590 = vunpack.c.h.b16 %v3175
    %v4591 = vunpack.c.l.b16 %v3176
    %v4592 = vunpack.c.l.b16 %v3177
    %v4593 = vunpack.c.h.b16 %v3177
    %v4594 = vunpack.c.l.b16 %v3178
    %v4595 = vunpack.c.h.b16 %v3178
    %v4596 = vunpack.c.l.b16 %v3179
    %v4597 = vunpack.c.h.b16 %v3179
    %v4598 = vunpack.c.l.b16 %v3180
    %v4599 = vunpack.c.l.b16 %v3181
    %v4600 = vunpack.c.h.b16 %v3181
    %v4601 = vunpack.c.l.b16 %v3182
    %v4602 = vunpack.c.h.b16 %v3182
    %v4603 = vunpack.c.l.b16 %v3183
    %v4604 = vunpack.c.h.b16 %v3183
    %v4605 = vunpack.c.l.b16 %v3184
    %v4606 = vunpack.c.l.b16 %v3185
    %v4607 = vunpack.c.h.b16 %v3185
    %v4608 = vunpack.c.l.b16 %v3186
    %v4609 = vunpack.c.h.b16 %v3186
    %v4610 = vunpack.c.l.b16 %v3187
    %v4611 = vunpack.c.h.b16 %v3187
    %v4612 = vunpack.c.l.b16 %v3188
    %v4613 = vunpack.c.l.b16 %v3189
    %v4614 = vunpack.c.h.b16 %v3189
    %v4615 = vunpack.c.l.b16 %v3190
    %v4616 = vunpack.c.h.b16 %v3190
    %v4617 = vunpack.c.l.b16 %v3191
    %v4618 = vunpack.c.h.b16 %v3191
    %v4619 = vunpack.c.l.b16 %v3192
    %v4620 = vunpack.c.l.b16 %v3193
    %v4621 = vunpack.c.h.b16 %v3193
    %v4622 = vunpack.c.l.b16 %v3194
    %v4623 = vunpack.c.h.b16 %v3194
    %v4624 = vunpack.c.l.b16 %v3195
    %v4625 = vunpack.c.h.b16 %v3195
    %v4626 = vunpack.c.l.b16 %v3196
    %v4627 = vunpack.c.l.b16 %v3197
    %v4628 = vunpack.c.h.b16 %v3197
    %v4629 = vunpack.c.l.b16 %v3198
    %v4630 = vunpack.c.h.b16 %v3198
    %v4631 = vunpack.c.l.b16 %v3199
    %v4632 = vunpack.c.h.b16 %v3199
    %v4633 = vunpack.c.l.b16 %v3200
    %v4634 = vunpack.c.l.b16 %v3201
    %v4635 = vunpack.c.h.b16 %v3201
    %v4636 = vunpack.c.l.b16 %v3202
    %v4637 = vunpack.c.h.b16 %v3202
    %v4638 = vunpack.c.l.b16 %v3203
    %v4639 = vunpack.c.h.b16 %v3203
    %v4640 = vunpack.c.l.b16 %v3204
    %v4641 = vunpack.c.l.b16 %v3205
    %v4642 = vunpack.c.h.b16 %v3205
    %v4643 = vunpack.c.l.b16 %v3206
    %v4644 = vunpack.c.h.b16 %v3206
    %v4645 = vunpack.c.l.b16 %v3207
    %v4646 = vunpack.c.h.b16 %v3207
    %v4647 = vunpack.c.l.b16 %v3208
    %v4648 = vunpack.c.l.b16 %v3209
    %v4649 = vunpack.c.h.b16 %v3209
    %v4650 = vunpack.c.l.b16 %v3210
    %v4651 = vunpack.c.h.b16 %v3210
    %v4652 = vunpack.c.l.b16 %v3211
    %v4653 = vunpack.c.h.b16 %v3211
    %v4654 = vunpack.c.l.b16 %v3212
    %v4655 = vunpack.c.l.b16 %v3213
    %v4656 = vunpack.c.h.b16 %v3213
    %v4657 = vunpack.c.l.b16 %v3214
    %v4658 = vunpack.c.h.b16 %v3214
    %v4659 = vunpack.c.l.b16 %v3215
    %v4660 = vunpack.c.h.b16 %v3215
    %v4661 = vunpack.c.l.b16 %v3216
    %v4662 = vpack.c.b16 %v3773, %v3766
    %v4663 = vpack.c.b16 %v3774, %v3767
    %v4664 = vpack.c.b16 %v3775, %v3768
    %v4665 = vpack.c.b16 %v3776, %v3769
    %v4666 = vpack.c.b16 %v3777, %v3770
    %v4667 = vpack.c.b16 %v3778, %v3771
    %v4668 = vpack.c.b16 %v3779, %v3772
    %v4669 = vpack.c.b16 %v3787, %v3780
    %v4670 = vpack.c.b16 %v3788, %v3781
    %v4671 = vpack.c.b16 %v3789, %v3782
    %v4672 = vpack.c.b16 %v3790, %v3783
    %v4673 = vpack.c.b16 %v3791, %v3784
    %v4674 = vpack.c.b16 %v3792, %v3785
    %v4675 = vpack.c.b16 %v3793, %v3786
    %v4676 = vpack.c.b16 %v3801, %v3794
    %v4677 = vpack.c.b16 %v3802, %v3795
    %v4678 = vpack.c.b16 %v3803, %v3796
    %v4679 = vpack.c.b16 %v3804, %v3797
    %v4680 = vpack.c.b16 %v3805, %v3798
    %v4681 = vpack.c.b16 %v3806, %v3799
    %v4682 = vpack.c.b16 %v3807, %v3800
    %v4683 = vpack.c.b16 %v3815, %v3808
    %v4684 = vpack.c.b16 %v3816, %v3809
    %v4685 = vpack.c.b16 %v3817, %v3810
    %v4686 = vpack.c.b16 %v3818, %v3811
    %v4687 = vpack.c.b16 %v3819, %v3812
    %v4688 = vpack.c.b16 %v3820, %v3813
    %v4689 = vpack.c.b16 %v3821, %v3814
    %v4690 = vpack.c.b16 %v3829, %v3822
    %v4691 = vpack.c.b16 %v3830, %v3823
    %v4692 = vpack.c.b16 %v3831, %v3824
    %v4693 = vpack.c.b16 %v3832, %v3825
    %v4694 = vpack.c.b16 %v3833, %v3826
    %v4695 = vpack.c.b16 %v3834, %v3827
    %v4696 = vpack.c.b16 %v3835, %v3828
    %v4697 = vpack.c.b16 %v3843, %v3836
    %v4698 = vpack.c.b16 %v3844, %v3837
    %v4699 = vpack.c.b16 %v3845, %v3838
    %v4700 = vpack.c.b16 %v3846, %v3839
    %v4701 = vpack.c.b16 %v3847, %v3840
    %v4702 = vpack.c.b16 %v3848, %v3841
    %v4703 = vpack.c.b16 %v3849, %v3842
    %v4704 = vpack.c.b16 %v3857, %v3850
    %v4705 = vpack.c.b16 %v3858, %v3851
    %v4706 = vpack.c.b16 %v3859, %v3852
    %v4707 = vpack.c.b16 %v3860, %v3853
    %v4708 = vpack.c.b16 %v3861, %v3854
    %v4709 = vpack.c.b16 %v3862, %v3855
    %v4710 = vpack.c.b16 %v3863, %v3856
    %v4711 = vpack.c.b16 %v3871, %v3864
    %v4712 = vpack.c.b16 %v3872, %v3865
    %v4713 = vpack.c.b16 %v3873, %v3866
    %v4714 = vpack.c.b16 %v3874, %v3867
    %v4715 = vpack.c.b16 %v3875, %v3868
    %v4716 = vpack.c.b16 %v3876, %v3869
    %v4717 = vpack.c.b16 %v3877, %v3870
    %v4718 = vpack.c.b16 %v3885, %v3878
    %v4719 = vpack.c.b16 %v3886, %v3879
    %v4720 = vpack.c.b16 %v3887, %v3880
    %v4721 = vpack.c.b16 %v3888, %v3881
    %v4722 = vpack.c.b16 %v3889, %v3882
    %v4723 = vpack.c.b16 %v3890, %v3883
    %v4724 = vpack.c.b16 %v3891, %v3884
    %v4725 = vpack.c.b16 %v3899, %v3892
    %v4726 = vpack.c.b16 %v3900, %v3893
    %v4727 = vpack.c.b16 %v3901, %v3894
    %v4728 = vpack.c.b16 %v3902, %v3895
    %v4729 = vpack.c.b16 %v3903, %v3896
    %v4730 = vpack.c.b16 %v3904, %v3897
    %v4731 = vpack.c.b16 %v3905, %v3898
    %v4732 = vpack.c.b16 %v3913, %v3906
    %v4733 = vpack.c.b16 %v3914, %v3907
    %v4734 = vpack.c.b16 %v3915, %v3908
    %v4735 = vpack.c.b16 %v3916, %v3909
    %v4736 = vpack.c.b16 %v3917, %v3910
    %v4737 = vpack.c.b16 %v3918, %v3911
    %v4738 = vpack.c.b16 %v3919, %v3912
    %v4739 = vpack.c.b16 %v3927, %v3920
    %v4740 = vpack.c.b16 %v3928, %v3921
    %v4741 = vpack.c.b16 %v3929, %v3922
    %v4742 = vpack.c.b16 %v3930, %v3923
    %v4743 = vpack.c.b16 %v3931, %v3924
    %v4744 = vpack.c.b16 %v3932, %v3925
    %v4745 = vpack.c.b16 %v3933, %v3926
    %v4746 = vpack.c.b16 %v3941, %v3934
    %v4747 = vpack.c.b16 %v3942, %v3935
    %v4748 = vpack.c.b16 %v3943, %v3936
    %v4749 = vpack.c.b16 %v3944, %v3937
    %v4750 = vpack.c.b16 %v3945, %v3938
    %v4751 = vpack.c.b16 %v3946, %v3939
    %v4752 = vpack.c.b16 %v3947, %v3940
    %v4753 = vpack.c.b16 %v3955, %v3948
    %v4754 = vpack.c.b16 %v3956, %v3949
    %v4755 = vpack.c.b16 %v3957, %v3950
    %v4756 = vpack.c.b16 %v3958, %v3951
    %v4757 = vpack.c.b16 %v3959, %v3952
    %v4758 = vpack.c.b16 %v3960, %v3953
    %v4759 = vpack.c.b16 %v3961, %v3954
    %v4760 = vpack.c.b16 %v3969, %v3962
    %v4761 = vpack.c.b16 %v3970, %v3963
    %v4762 = vpack.c.b16 %v3971, %v3964
    %v4763 = vpack.c.b16 %v3972, %v3965
    %v4764 = vpack.c.b16 %v3973, %v3966
    %v4765 = vpack.c.b16 %v3974, %v3967
    %v4766 = vpack.c.b16 %v3975, %v3968
    %v4767 = vpack.c.b16 %v3983, %v3976
    %v4768 = vpack.c.b16 %v3984, %v3977
    %v4769 = vpack.c.b16 %v3985, %v3978
    %v4770 = vpack.c.b16 %v3986, %v3979
    %v4771 = vpack.c.b16 %v3987, %v3980
    %v4772 = vpack.c.b16 %v3988, %v3981
    %v4773 = vpack.c.b16 %v3989, %v3982
    %v4774 = vpack.c.b16 %v3997, %v3990
    %v4775 = vpack.c.b16 %v3998, %v3991
    %v4776 = vpack.c.b16 %v3999, %v3992
    %v4777 = vpack.c.b16 %v4000, %v3993
    %v4778 = vpack.c.b16 %v4001, %v3994
    %v4779 = vpack.c.b16 %v4002, %v3995
    %v4780 = vpack.c.b16 %v4003, %v3996
    %v4781 = vpack.c.b16 %v4011, %v4004
    %v4782 = vpack.c.b16 %v4012, %v4005
    %v4783 = vpack.c.b16 %v4013, %v4006
    %v4784 = vpack.c.b16 %v4014, %v4007
    %v4785 = vpack.c.b16 %v4015, %v4008
    %v4786 = vpack.c.b16 %v4016, %v4009
    %v4787 = vpack.c.b16 %v4017, %v4010
    %v4788 = vpack.c.b16 %v4025, %v4018
    %v4789 = vpack.c.b16 %v4026, %v4019
    %v4790 = vpack.c.b16 %v4027, %v4020
    %v4791 = vpack.c.b16 %v4028, %v4021
    %v4792 = vpack.c.b16 %v4029, %v4022
    %v4793 = vpack.c.b16 %v4030, %v4023
    %v4794 = vpack.c.b16 %v4031, %v4024
    %v4795 = vpack.c.b16 %v4039, %v4032
    %v4796 = vpack.c.b16 %v4040, %v4033
    %v4797 = vpack.c.b16 %v4041, %v4034
    %v4798 = vpack.c.b16 %v4042, %v4035
    %v4799 = vpack.c.b16 %v4043, %v4036
    %v4800 = vpack.c.b16 %v4044, %v4037
    %v4801 = vpack.c.b16 %v4045, %v4038
    %v4802 = vpack.c.b16 %v4053, %v4046
    %v4803 = vpack.c.b16 %v4054, %v4047
    %v4804 = vpack.c.b16 %v4055, %v4048
    %v4805 = vpack.c.b16 %v4056, %v4049
    %v4806 = vpack.c.b16 %v4057, %v4050
    %v4807 = vpack.c.b16 %v4058, %v4051
    %v4808 = vpack.c.b16 %v4059, %v4052
    %v4809 = vpack.c.b16 %v4067, %v4060
    %v4810 = vpack.c.b16 %v4068, %v4061
    %v4811 = vpack.c.b16 %v4069, %v4062
    %v4812 = vpack.c.b16 %v4070, %v4063
    %v4813 = vpack.c.b16 %v4071, %v4064
    %v4814 = vpack.c.b16 %v4072, %v4065
    %v4815 = vpack.c.b16 %v4073, %v4066
    %v4816 = vpack.c.b16 %v4081, %v4074
    %v4817 = vpack.c.b16 %v4082, %v4075
    %v4818 = vpack.c.b16 %v4083, %v4076
    %v4819 = vpack.c.b16 %v4084, %v4077
    %v4820 = vpack.c.b16 %v4085, %v4078
    %v4821 = vpack.c.b16 %v4086, %v4079
    %v4822 = vpack.c.b16 %v4087, %v4080
    %v4823 = vpack.c.b16 %v4095, %v4088
    %v4824 = vpack.c.b16 %v4096, %v4089
    %v4825 = vpack.c.b16 %v4097, %v4090
    %v4826 = vpack.c.b16 %v4098, %v4091
    %v4827 = vpack.c.b16 %v4099, %v4092
    %v4828 = vpack.c.b16 %v4100, %v4093
    %v4829 = vpack.c.b16 %v4101, %v4094
    %v4830 = vpack.c.b16 %v4109, %v4102
    %v4831 = vpack.c.b16 %v4110, %v4103
    %v4832 = vpack.c.b16 %v4111, %v4104
    %v4833 = vpack.c.b16 %v4112, %v4105
    %v4834 = vpack.c.b16 %v4113, %v4106
    %v4835 = vpack.c.b16 %v4114, %v4107
    %v4836 = vpack.c.b16 %v4115, %v4108
    %v4837 = vpack.c.b16 %v4123, %v4116
    %v4838 = vpack.c.b16 %v4124, %v4117
    %v4839 = vpack.c.b16 %v4125, %v4118
    %v4840 = vpack.c.b16 %v4126, %v4119
    %v4841 = vpack.c.b16 %v4127, %v4120
    %v4842 = vpack.c.b16 %v4128, %v4121
    %v4843 = vpack.c.b16 %v4129, %v4122
    %v4844 = vpack.c.b16 %v4137, %v4130
    %v4845 = vpack.c.b16 %v4138, %v4131
    %v4846 = vpack.c.b16 %v4139, %v4132
    %v4847 = vpack.c.b16 %v4140, %v4133
    %v4848 = vpack.c.b16 %v4141, %v4134
    %v4849 = vpack.c.b16 %v4142, %v4135
    %v4850 = vpack.c.b16 %v4143, %v4136
    %v4851 = vpack.c.b16 %v4151, %v4144
    %v4852 = vpack.c.b16 %v4152, %v4145
    %v4853 = vpack.c.b16 %v4153, %v4146
    %v4854 = vpack.c.b16 %v4154, %v4147
    %v4855 = vpack.c.b16 %v4155, %v4148
    %v4856 = vpack.c.b16 %v4156, %v4149
    %v4857 = vpack.c.b16 %v4157, %v4150
    %v4858 = vpack.c.b16 %v4165, %v4158
    %v4859 = vpack.c.b16 %v4166, %v4159
    %v4860 = vpack.c.b16 %v4167, %v4160
    %v4861 = vpack.c.b16 %v4168, %v4161
    %v4862 = vpack.c.b16 %v4169, %v4162
    %v4863 = vpack.c.b16 %v4170, %v4163
    %v4864 = vpack.c.b16 %v4171, %v4164
    %v4865 = vpack.c.b16 %v4179, %v4172
    %v4866 = vpack.c.b16 %v4180, %v4173
    %v4867 = vpack.c.b16 %v4181, %v4174
    %v4868 = vpack.c.b16 %v4182, %v4175
    %v4869 = vpack.c.b16 %v4183, %v4176
    %v4870 = vpack.c.b16 %v4184, %v4177
    %v4871 = vpack.c.b16 %v4185, %v4178
    %v4872 = vpack.c.b16 %v4193, %v4186
    %v4873 = vpack.c.b16 %v4194, %v4187
    %v4874 = vpack.c.b16 %v4195, %v4188
    %v4875 = vpack.c.b16 %v4196, %v4189
    %v4876 = vpack.c.b16 %v4197, %v4190
    %v4877 = vpack.c.b16 %v4198, %v4191
    %v4878 = vpack.c.b16 %v4199, %v4192
    %v4879 = vpack.c.b16 %v4207, %v4200
    %v4880 = vpack.c.b16 %v4208, %v4201
    %v4881 = vpack.c.b16 %v4209, %v4202
    %v4882 = vpack.c.b16 %v4210, %v4203
    %v4883 = vpack.c.b16 %v4211, %v4204
    %v4884 = vpack.c.b16 %v4212, %v4205
    %v4885 = vpack.c.b16 %v4213, %v4206
    %v4886 = vpack.c.b16 %v4221, %v4214
    %v4887 = vpack.c.b16 %v4222, %v4215
    %v4888 = vpack.c.b16 %v4223, %v4216
    %v4889 = vpack.c.b16 %v4224, %v4217
    %v4890 = vpack.c.b16 %v4225, %v4218
    %v4891 = vpack.c.b16 %v4226, %v4219
    %v4892 = vpack.c.b16 %v4227, %v4220
    %v4893 = vpack.c.b16 %v4235, %v4228
    %v4894 = vpack.c.b16 %v4236, %v4229
    %v4895 = vpack.c.b16 %v4237, %v4230
    %v4896 = vpack.c.b16 %v4238, %v4231
    %v4897 = vpack.c.b16 %v4239, %v4232
    %v4898 = vpack.c.b16 %v4240, %v4233
    %v4899 = vpack.c.b16 %v4241, %v4234
    %v4900 = vpack.c.b16 %v4249, %v4242
    %v4901 = vpack.c.b16 %v4250, %v4243
    %v4902 = vpack.c.b16 %v4251, %v4244
    %v4903 = vpack.c.b16 %v4252, %v4245
    %v4904 = vpack.c.b16 %v4253, %v4246
    %v4905 = vpack.c.b16 %v4254, %v4247
    %v4906 = vpack.c.b16 %v4255, %v4248
    %v4907 = vpack.c.b16 %v4263, %v4256
    %v4908 = vpack.c.b16 %v4264, %v4257
    %v4909 = vpack.c.b16 %v4265, %v4258
    %v4910 = vpack.c.b16 %v4266, %v4259
    %v4911 = vpack.c.b16 %v4267, %v4260
    %v4912 = vpack.c.b16 %v4268, %v4261
    %v4913 = vpack.c.b16 %v4269, %v4262
    %v4914 = vpack.c.b16 %v4277, %v4270
    %v4915 = vpack.c.b16 %v4278, %v4271
    %v4916 = vpack.c.b16 %v4279, %v4272
    %v4917 = vpack.c.b16 %v4280, %v4273
    %v4918 = vpack.c.b16 %v4281, %v4274
    %v4919 = vpack.c.b16 %v4282, %v4275
    %v4920 = vpack.c.b16 %v4283, %v4276
    %v4921 = vpack.c.b16 %v4291, %v4284
    %v4922 = vpack.c.b16 %v4292, %v4285
    %v4923 = vpack.c.b16 %v4293, %v4286
    %v4924 = vpack.c.b16 %v4294, %v4287
    %v4925 = vpack.c.b16 %v4295, %v4288
    %v4926 = vpack.c.b16 %v4296, %v4289
    %v4927 = vpack.c.b16 %v4297, %v4290
    %v4928 = vpack.c.b16 %v4305, %v4298
    %v4929 = vpack.c.b16 %v4306, %v4299
    %v4930 = vpack.c.b16 %v4307, %v4300
    %v4931 = vpack.c.b16 %v4308, %v4301
    %v4932 = vpack.c.b16 %v4309, %v4302
    %v4933 = vpack.c.b16 %v4310, %v4303
    %v4934 = vpack.c.b16 %v4311, %v4304
    %v4935 = vpack.c.b16 %v4319, %v4312
    %v4936 = vpack.c.b16 %v4320, %v4313
    %v4937 = vpack.c.b16 %v4321, %v4314
    %v4938 = vpack.c.b16 %v4322, %v4315
    %v4939 = vpack.c.b16 %v4323, %v4316
    %v4940 = vpack.c.b16 %v4324, %v4317
    %v4941 = vpack.c.b16 %v4325, %v4318
    %v4942 = vpack.c.b16 %v4333, %v4326
    %v4943 = vpack.c.b16 %v4334, %v4327
    %v4944 = vpack.c.b16 %v4335, %v4328
    %v4945 = vpack.c.b16 %v4336, %v4329
    %v4946 = vpack.c.b16 %v4337, %v4330
    %v4947 = vpack.c.b16 %v4338, %v4331
    %v4948 = vpack.c.b16 %v4339, %v4332
    %v4949 = vpack.c.b16 %v4347, %v4340
    %v4950 = vpack.c.b16 %v4348, %v4341
    %v4951 = vpack.c.b16 %v4349, %v4342
    %v4952 = vpack.c.b16 %v4350, %v4343
    %v4953 = vpack.c.b16 %v4351, %v4344
    %v4954 = vpack.c.b16 %v4352, %v4345
    %v4955 = vpack.c.b16 %v4353, %v4346
    %v4956 = vpack.c.b16 %v4361, %v4354
    %v4957 = vpack.c.b16 %v4362, %v4355
    %v4958 = vpack.c.b16 %v4363, %v4356
    %v4959 = vpack.c.b16 %v4364, %v4357
    %v4960 = vpack.c.b16 %v4365, %v4358
    %v4961 = vpack.c.b16 %v4366, %v4359
    %v4962 = vpack.c.b16 %v4367, %v4360
    %v4963 = vpack.c.b16 %v4375, %v4368
    %v4964 = vpack.c.b16 %v4376, %v4369
    %v4965 = vpack.c.b16 %v4377, %v4370
    %v4966 = vpack.c.b16 %v4378, %v4371
    %v4967 = vpack.c.b16 %v4379, %v4372
    %v4968 = vpack.c.b16 %v4380, %v4373
    %v4969 = vpack.c.b16 %v4381, %v4374
    %v4970 = vpack.c.b16 %v4389, %v4382
    %v4971 = vpack.c.b16 %v4390, %v4383
    %v4972 = vpack.c.b16 %v4391, %v4384
    %v4973 = vpack.c.b16 %v4392, %v4385
    %v4974 = vpack.c.b16 %v4393, %v4386
    %v4975 = vpack.c.b16 %v4394, %v4387
    %v4976 = vpack.c.b16 %v4395, %v4388
    %v4977 = vpack.c.b16 %v4403, %v4396
    %v4978 = vpack.c.b16 %v4404, %v4397
    %v4979 = vpack.c.b16 %v4405, %v4398
    %v4980 = vpack.c.b16 %v4406, %v4399
    %v4981 = vpack.c.b16 %v4407, %v4400
    %v4982 = vpack.c.b16 %v4408, %v4401
    %v4983 = vpack.c.b16 %v4409, %v4402
    %v4984 = vpack.c.b16 %v4417, %v4410
    %v4985 = vpack.c.b16 %v4418, %v4411
    %v4986 = vpack.c.b16 %v4419, %v4412
    %v4987 = vpack.c.b16 %v4420, %v4413
    %v4988 = vpack.c.b16 %v4421, %v4414
    %v4989 = vpack.c.b16 %v4422, %v4415
    %v4990 = vpack.c.b16 %v4423, %v4416
    %v4991 = vpack.c.b16 %v4431, %v4424
    %v4992 = vpack.c.b16 %v4432, %v4425
    %v4993 = vpack.c.b16 %v4433, %v4426
    %v4994 = vpack.c.b16 %v4434, %v4427
    %v4995 = vpack.c.b16 %v4435, %v4428
    %v4996 = vpack.c.b16 %v4436, %v4429
    %v4997 = vpack.c.b16 %v4437, %v4430
    %v4998 = vpack.c.b16 %v4445, %v4438
    %v4999 = vpack.c.b16 %v4446, %v4439
    %v5000 = vpack.c.b16 %v4447, %v4440
    %v5001 = vpack.c.b16 %v4448, %v4441
    %v5002 = vpack.c.b16 %v4449, %v4442
    %v5003 = vpack.c.b16 %v4450, %v4443
    %v5004 = vpack.c.b16 %v4451, %v4444
    %v5005 = vpack.c.b16 %v4459, %v4452
    %v5006 = vpack.c.b16 %v4460, %v4453
    %v5007 = vpack.c.b16 %v4461, %v4454
    %v5008 = vpack.c.b16 %v4462, %v4455
    %v5009 = vpack.c.b16 %v4463, %v4456
    %v5010 = vpack.c.b16 %v4464, %v4457
    %v5011 = vpack.c.b16 %v4465, %v4458
    %v5012 = vpack.c.b16 %v4473, %v4466
    %v5013 = vpack.c.b16 %v4474, %v4467
    %v5014 = vpack.c.b16 %v4475, %v4468
    %v5015 = vpack.c.b16 %v4476, %v4469
    %v5016 = vpack.c.b16 %v4477, %v4470
    %v5017 = vpack.c.b16 %v4478, %v4471
    %v5018 = vpack.c.b16 %v4479, %v4472
    %v5019 = vpack.c.b16 %v4487, %v4480
    %v5020 = vpack.c.b16 %v4488, %v4481
    %v5021 = vpack.c.b16 %v4489, %v4482
    %v5022 = vpack.c.b16 %v4490, %v4483
    %v5023 = vpack.c.b16 %v4491, %v4484
    %v5024 = vpack.c.b16 %v4492, %v4485
    %v5025 = vpack.c.b16 %v4493, %v4486
    %v5026 = vpack.c.b16 %v4501, %v4494
    %v5027 = vpack.c.b16 %v4502, %v4495
    %v5028 = vpack.c.b16 %v4503, %v4496
    %v5029 = vpack.c.b16 %v4504, %v4497
    %v5030 = vpack.c.b16 %v4505, %v4498
    %v5031 = vpack.c.b16 %v4506, %v4499
    %v5032 = vpack.c.b16 %v4507, %v4500
    %v5033 = vpack.c.b16 %v4515, %v4508
    %v5034 = vpack.c.b16 %v4516, %v4509
    %v5035 = vpack.c.b16 %v4517, %v4510
    %v5036 = vpack.c.b16 %v4518, %v4511
    %v5037 = vpack.c.b16 %v4519, %v4512
    %v5038 = vpack.c.b16 %v4520, %v4513
    %v5039 = vpack.c.b16 %v4521, %v4514
    %v5040 = vpack.c.b16 %v4529, %v4522
    %v5041 = vpack.c.b16 %v4530, %v4523
    %v5042 = vpack.c.b16 %v4531, %v4524
    %v5043 = vpack.c.b16 %v4532, %v4525
    %v5044 = vpack.c.b16 %v4533, %v4526
    %v5045 = vpack.c.b16 %v4534, %v4527
    %v5046 = vpack.c.b16 %v4535, %v4528
    %v5047 = vpack.c.b16 %v4543, %v4536
    %v5048 = vpack.c.b16 %v4544, %v4537
    %v5049 = vpack.c.b16 %v4545, %v4538
    %v5050 = vpack.c.b16 %v4546, %v4539
    %v5051 = vpack.c.b16 %v4547, %v4540
    %v5052 = vpack.c.b16 %v4548, %v4541
    %v5053 = vpack.c.b16 %v4549, %v4542
    %v5054 = vpack.c.b16 %v4557, %v4550
    %v5055 = vpack.c.b16 %v4558, %v4551
    %v5056 = vpack.c.b16 %v4559, %v4552
    %v5057 = vpack.c.b16 %v4560, %v4553
    %v5058 = vpack.c.b16 %v4561, %v4554
    %v5059 = vpack.c.b16 %v4562, %v4555
    %v5060 = vpack.c.b16 %v4563, %v4556
    %v5061 = vpack.c.b16 %v4571, %v4564
    %v5062 = vpack.c.b16 %v4572, %v4565
    %v5063 = vpack.c.b16 %v4573, %v4566
    %v5064 = vpack.c.b16 %v4574, %v4567
    %v5065 = vpack.c.b16 %v4575, %v4568
    %v5066 = vpack.c.b16 %v4576, %v4569
    %v5067 = vpack.c.b16 %v4577, %v4570
    %v5068 = vpack.c.b16 %v4585, %v4578
    %v5069 = vpack.c.b16 %v4586, %v4579
    %v5070 = vpack.c.b16 %v4587, %v4580
    %v5071 = vpack.c.b16 %v4588, %v4581
    %v5072 = vpack.c.b16 %v4589, %v4582
    %v5073 = vpack.c.b16 %v4590, %v4583
    %v5074 = vpack.c.b16 %v4591, %v4584
    %v5075 = vpack.c.b16 %v4599, %v4592
    %v5076 = vpack.c.b16 %v4600, %v4593
    %v5077 = vpack.c.b16 %v4601, %v4594
    %v5078 = vpack.c.b16 %v4602, %v4595
    %v5079 = vpack.c.b16 %v4603, %v4596
    %v5080 = vpack.c.b16 %v4604, %v4597
    %v5081 = vpack.c.b16 %v4605, %v4598
    %v5082 = vpack.c.b16 %v4613, %v4606
    %v5083 = vpack.c.b16 %v4614, %v4607
    %v5084 = vpack.c.b16 %v4615, %v4608
    %v5085 = vpack.c.b16 %v4616, %v4609
    %v5086 = vpack.c.b16 %v4617, %v4610
    %v5087 = vpack.c.b16 %v4618, %v4611
    %v5088 = vpack.c.b16 %v4619, %v4612
    %v5089 = vpack.c.b16 %v4627, %v4620
    %v5090 = vpack.c.b16 %v4628, %v4621
    %v5091 = vpack.c.b16 %v4629, %v4622
    %v5092 = vpack.c.b16 %v4630, %v4623
    %v5093 = vpack.c.b16 %v4631, %v4624
    %v5094 = vpack.c.b16 %v4632, %v4625
    %v5095 = vpack.c.b16 %v4633, %v4626
    %v5096 = vpack.c.b16 %v4641, %v4634
    %v5097 = vpack.c.b16 %v4642, %v4635
    %v5098 = vpack.c.b16 %v4643, %v4636
    %v5099 = vpack.c.b16 %v4644, %v4637
    %v5100 = vpack.c.b16 %v4645, %v4638
    %v5101 = vpack.c.b16 %v4646, %v4639
    %v5102 = vpack.c.b16 %v4647, %v4640
    %v5103 = vpack.c.b16 %v4655, %v4648
    %v5104 = vpack.c.b16 %v4656, %v4649
    %v5105 = vpack.c.b16 %v4657, %v4650
    %v5106 = vpack.c.b16 %v4658, %v4651
    %v5107 = vpack.c.b16 %v4659, %v4652
    %v5108 = vpack.c.b16 %v4660, %v4653
    %v5109 = vpack.c.b16 %v4661, %v4654
    %5558 = vmatprep.subr.bf16.mxu0 %v4712
    %5559 = vmatpush1.bf16.msra.mxu0 %v4711
    %5560 = vmatprep.subr.bf16.mxu0 %v4705
    %5561 = vmatpush1.bf16.msra.mxu0 %v4704
    %5562 = vmatprep.subr.bf16.mxu0 %v4698
    %5563 = vmatpush1.bf16.msra.mxu0 %v4697
    %5564 = vmatprep.subr.bf16.mxu0 %v4691
    %5565 = vmatpush1.bf16.msra.mxu0 %v4690
    %5566 = vmatprep.subr.bf16.mxu0 %v4684
    %5567 = vmatpush1.bf16.msra.mxu0 %v4683
    %5568 = vmatprep.subr.bf16.mxu0 %v4677
    %5569 = vmatpush1.bf16.msra.mxu0 %v4676
    %5570 = vmatprep.subr.bf16.mxu0 %v4670
    %5571 = vmatpush1.bf16.msra.mxu0 %v4669
    %5572 = vmatprep.subr.bf16.mxu0 %v4663
    %5573 = vmatpush1.bf16.msra.mxu0 %v4662
    %5574 = vmatprep.subr.bf16.mxu0 %v4768
    %5575 = vmatpush2.bf16.msra.mxu0 %v4767
    %5576 = vmatprep.subr.bf16.mxu0 %v4761
    %5577 = vmatpush2.bf16.msra.mxu0 %v4760
    %5578 = vmatprep.subr.bf16.mxu0 %v4754
    %5579 = vmatpush2.bf16.msra.mxu0 %v4753
    %5580 = vmatprep.subr.bf16.mxu0 %v4747
    %5581 = vmatpush2.bf16.msra.mxu0 %v4746
    %5582 = vmatprep.subr.bf16.mxu0 %v4740
    %5583 = vmatpush2.bf16.msra.mxu0 %v4739
    %5584 = vmatprep.subr.bf16.mxu0 %v4733
    %5585 = vmatpush2.bf16.msra.mxu0 %v4732
    %5586 = vmatprep.subr.bf16.mxu0 %v4726
    %5587 = vmatpush2.bf16.msra.mxu0 %v4725
    %5588 = vmatprep.subr.bf16.mxu0 %v4719
    %5589 = vmatpush2.bf16.msra.mxu0 %v4718
    %5590 = vmatprep.mubr.bf16.mxu0 %v2698
    %5591 = vmatmul.mubr.bf16.gmra.mxu0 %v2697
    %v5592 = vpop.f32.mrf.mxu0
    %v5593 = vadd.f32 %v3222, %v5592
    %v5594 = vpop.f32.mrf.mxu0
    %v5595 = vadd.f32 %v3226, %v5594
    %v5596 = vpop.f32.mrf.mxu0
    %v5597 = vadd.f32 %v3222, %v5596
    %v5598 = vpop.f32.mrf.mxu0
    %v5599 = vadd.f32 %v3226, %v5598
    %5600 = vdwg.mxu0
    %5601 = vmatprep.subr.bf16.mxu0 %v4824
    %5602 = vmatpush1.bf16.msra.mxu0 %v4823
    %5603 = vmatprep.subr.bf16.mxu0 %v4817
    %5604 = vmatpush1.bf16.msra.mxu0 %v4816
    %5605 = vmatprep.subr.bf16.mxu0 %v4810
    %5606 = vmatpush1.bf16.msra.mxu0 %v4809
    %5607 = vmatprep.subr.bf16.mxu0 %v4803
    %5608 = vmatpush1.bf16.msra.mxu0 %v4802
    %5609 = vmatprep.subr.bf16.mxu0 %v4796
    %5610 = vmatpush1.bf16.msra.mxu0 %v4795
    %5611 = vmatprep.subr.bf16.mxu0 %v4789
    %5612 = vmatpush1.bf16.msra.mxu0 %v4788
    %5613 = vmatprep.subr.bf16.mxu0 %v4782
    %5614 = vmatpush1.bf16.msra.mxu0 %v4781
    %5615 = vmatprep.subr.bf16.mxu0 %v4775
    %5616 = vmatpush1.bf16.msra.mxu0 %v4774
    %5617 = vmatprep.subr.bf16.mxu0 %v4880
    %5618 = vmatpush2.bf16.msra.mxu0 %v4879
    %5619 = vmatprep.subr.bf16.mxu0 %v4873
    %5620 = vmatpush2.bf16.msra.mxu0 %v4872
    %5621 = vmatprep.subr.bf16.mxu0 %v4866
    %5622 = vmatpush2.bf16.msra.mxu0 %v4865
    %5623 = vmatprep.subr.bf16.mxu0 %v4859
    %5624 = vmatpush2.bf16.msra.mxu0 %v4858
    %5625 = vmatprep.subr.bf16.mxu0 %v4852
    %5626 = vmatpush2.bf16.msra.mxu0 %v4851
    %5627 = vmatprep.subr.bf16.mxu0 %v4845
    %5628 = vmatpush2.bf16.msra.mxu0 %v4844
    %5629 = vmatprep.subr.bf16.mxu0 %v4838
    %5630 = vmatpush2.bf16.msra.mxu0 %v4837
    %5631 = vmatprep.subr.bf16.mxu0 %v4831
    %5632 = vmatpush2.bf16.msra.mxu0 %v4830
    %5633 = vmatprep.mubr.bf16.mxu0 %v2700
    %5634 = vmatmul.mubr.bf16.gmra.mxu0 %v2699
    %v5635 = vpop.f32.mrf.mxu0
    %v5636 = vadd.f32 %v5593, %v5635
    %v5637 = vpop.f32.mrf.mxu0
    %v5638 = vadd.f32 %v5595, %v5637
    %v5639 = vpop.f32.mrf.mxu0
    %v5640 = vadd.f32 %v5597, %v5639
    %v5641 = vpop.f32.mrf.mxu0
    %v5642 = vadd.f32 %v5599, %v5641
    %5643 = vdwg.mxu0
    %5644 = vmatprep.subr.bf16.mxu0 %v4936
    %5645 = vmatpush1.bf16.msra.mxu0 %v4935
    %5646 = vmatprep.subr.bf16.mxu0 %v4929
    %5647 = vmatpush1.bf16.msra.mxu0 %v4928
    %5648 = vmatprep.subr.bf16.mxu0 %v4922
    %5649 = vmatpush1.bf16.msra.mxu0 %v4921
    %5650 = vmatprep.subr.bf16.mxu0 %v4915
    %5651 = vmatpush1.bf16.msra.mxu0 %v4914
    %5652 = vmatprep.subr.bf16.mxu0 %v4908
    %5653 = vmatpush1.bf16.msra.mxu0 %v4907
    %5654 = vmatprep.subr.bf16.mxu0 %v4901
    %5655 = vmatpush1.bf16.msra.mxu0 %v4900
    %5656 = vmatprep.subr.bf16.mxu0 %v4894
    %5657 = vmatpush1.bf16.msra.mxu0 %v4893
    %5658 = vmatprep.subr.bf16.mxu0 %v4887
    %5659 = vmatpush1.bf16.msra.mxu0 %v4886
    %5660 = vmatprep.subr.bf16.mxu0 %v4992
    %5661 = vmatpush2.bf16.msra.mxu0 %v4991
    %5662 = vmatprep.subr.bf16.mxu0 %v4985
    %5663 = vmatpush2.bf16.msra.mxu0 %v4984
    %5664 = vmatprep.subr.bf16.mxu0 %v4978
    %5665 = vmatpush2.bf16.msra.mxu0 %v4977
    %5666 = vmatprep.subr.bf16.mxu0 %v4971
    %5667 = vmatpush2.bf16.msra.mxu0 %v4970
    %5668 = vmatprep.subr.bf16.mxu0 %v4964
    %5669 = vmatpush2.bf16.msra.mxu0 %v4963
    %5670 = vmatprep.subr.bf16.mxu0 %v4957
    %5671 = vmatpush2.bf16.msra.mxu0 %v4956
    %5672 = vmatprep.subr.bf16.mxu0 %v4950
    %5673 = vmatpush2.bf16.msra.mxu0 %v4949
    %5674 = vmatprep.subr.bf16.mxu0 %v4943
    %5675 = vmatpush2.bf16.msra.mxu0 %v4942
    %5676 = vmatprep.mubr.bf16.mxu0 %v2702
    %5677 = vmatmul.mubr.bf16.gmra.mxu0 %v2701
    %v5678 = vpop.f32.mrf.mxu0
    %v5679 = vadd.f32 %v5636, %v5678
    %v5680 = vpop.f32.mrf.mxu0
    %v5681 = vadd.f32 %v5638, %v5680
    %v5682 = vpop.f32.mrf.mxu0
    %v5683 = vadd.f32 %v5640, %v5682
    %v5684 = vpop.f32.mrf.mxu0
    %v5685 = vadd.f32 %v5642, %v5684
    %5686 = vdwg.mxu0
    %5687 = vmatprep.subr.bf16.mxu0 %v5048
    %5688 = vmatpush1.bf16.msra.mxu0 %v5047
    %5689 = vmatprep.subr.bf16.mxu0 %v5041
    %5690 = vmatpush1.bf16.msra.mxu0 %v5040
    %5691 = vmatprep.subr.bf16.mxu0 %v5034
    %5692 = vmatpush1.bf16.msra.mxu0 %v5033
    %5693 = vmatprep.subr.bf16.mxu0 %v5027
    %5694 = vmatpush1.bf16.msra.mxu0 %v5026
    %5695 = vmatprep.subr.bf16.mxu0 %v5020
    %5696 = vmatpush1.bf16.msra.mxu0 %v5019
    %5697 = vmatprep.subr.bf16.mxu0 %v5013
    %5698 = vmatpush1.bf16.msra.mxu0 %v5012
    %5699 = vmatprep.subr.bf16.mxu0 %v5006
    %5700 = vmatpush1.bf16.msra.mxu0 %v5005
    %5701 = vmatprep.subr.bf16.mxu0 %v4999
    %5702 = vmatpush1.bf16.msra.mxu0 %v4998
    %5703 = vmatprep.subr.bf16.mxu0 %v5104
    %5704 = vmatpush2.bf16.msra.mxu0 %v5103
    %5705 = vmatprep.subr.bf16.mxu0 %v5097
    %5706 = vmatpush2.bf16.msra.mxu0 %v5096
    %5707 = vmatprep.subr.bf16.mxu0 %v5090
    %5708 = vmatpush2.bf16.msra.mxu0 %v5089
    %5709 = vmatprep.subr.bf16.mxu0 %v5083
    %5710 = vmatpush2.bf16.msra.mxu0 %v5082
    %5711 = vmatprep.subr.bf16.mxu0 %v5076
    %5712 = vmatpush2.bf16.msra.mxu0 %v5075
    %5713 = vmatprep.subr.bf16.mxu0 %v5069
    %5714 = vmatpush2.bf16.msra.mxu0 %v5068
    %5715 = vmatprep.subr.bf16.mxu0 %v5062
    %5716 = vmatpush2.bf16.msra.mxu0 %v5061
    %5717 = vmatprep.subr.bf16.mxu0 %v5055
    %5718 = vmatpush2.bf16.msra.mxu0 %v5054
    %5719 = vmatprep.mubr.bf16.mxu0 %v2704
    %5720 = vmatmul.mubr.bf16.gmra.mxu0 %v2703
    %v5721 = vpop.f32.mrf.mxu0
    %v5722 = vadd.f32 %v5679, %v5721
    %v5723 = vpop.f32.mrf.mxu0
    %v5724 = vadd.f32 %v5681, %v5723
    %v5725 = vpop.f32.mrf.mxu0
    %v5726 = vadd.f32 %v5683, %v5725
    %v5727 = vpop.f32.mrf.mxu0
    %v5728 = vadd.f32 %v5685, %v5727
    %5729 = vdwg.mxu0
    %5730 = vmatprep.subr.bf16.mxu0 %v4714
    %5731 = vmatpush1.bf16.msra.mxu0 %v4713
    %5732 = vmatprep.subr.bf16.mxu0 %v4707
    %5733 = vmatpush1.bf16.msra.mxu0 %v4706
    %5734 = vmatprep.subr.bf16.mxu0 %v4700
    %5735 = vmatpush1.bf16.msra.mxu0 %v4699
    %5736 = vmatprep.subr.bf16.mxu0 %v4693
    %5737 = vmatpush1.bf16.msra.mxu0 %v4692
    %5738 = vmatprep.subr.bf16.mxu0 %v4686
    %5739 = vmatpush1.bf16.msra.mxu0 %v4685
    %5740 = vmatprep.subr.bf16.mxu0 %v4679
    %5741 = vmatpush1.bf16.msra.mxu0 %v4678
    %5742 = vmatprep.subr.bf16.mxu0 %v4672
    %5743 = vmatpush1.bf16.msra.mxu0 %v4671
    %5744 = vmatprep.subr.bf16.mxu0 %v4665
    %5745 = vmatpush1.bf16.msra.mxu0 %v4664
    %5746 = vmatprep.subr.bf16.mxu0 %v4770
    %5747 = vmatpush2.bf16.msra.mxu0 %v4769
    %5748 = vmatprep.subr.bf16.mxu0 %v4763
    %5749 = vmatpush2.bf16.msra.mxu0 %v4762
    %5750 = vmatprep.subr.bf16.mxu0 %v4756
    %5751 = vmatpush2.bf16.msra.mxu0 %v4755
    %5752 = vmatprep.subr.bf16.mxu0 %v4749
    %5753 = vmatpush2.bf16.msra.mxu0 %v4748
    %5754 = vmatprep.subr.bf16.mxu0 %v4742
    %5755 = vmatpush2.bf16.msra.mxu0 %v4741
    %5756 = vmatprep.subr.bf16.mxu0 %v4735
    %5757 = vmatpush2.bf16.msra.mxu0 %v4734
    %5758 = vmatprep.subr.bf16.mxu0 %v4728
    %5759 = vmatpush2.bf16.msra.mxu0 %v4727
    %5760 = vmatprep.subr.bf16.mxu0 %v4721
    %5761 = vmatpush2.bf16.msra.mxu0 %v4720
    %5762 = vmatprep.mubr.bf16.mxu0 %v2698
    %5763 = vmatmul.mubr.bf16.gmra.mxu0 %v2697
    %v5764 = vpop.f32.mrf.mxu0
    %v5765 = vadd.f32 %v3230, %v5764
    %v5766 = vpop.f32.mrf.mxu0
    %v5767 = vadd.f32 %v3234, %v5766
    %v5768 = vpop.f32.mrf.mxu0
    %v5769 = vadd.f32 %v3230, %v5768
    %v5770 = vpop.f32.mrf.mxu0
    %v5771 = vadd.f32 %v3234, %v5770
    %5772 = vdwg.mxu0
    %5773 = vmatprep.subr.bf16.mxu0 %v4826
    %5774 = vmatpush1.bf16.msra.mxu0 %v4825
    %5775 = vmatprep.subr.bf16.mxu0 %v4819
    %5776 = vmatpush1.bf16.msra.mxu0 %v4818
    %5777 = vmatprep.subr.bf16.mxu0 %v4812
    %5778 = vmatpush1.bf16.msra.mxu0 %v4811
    %5779 = vmatprep.subr.bf16.mxu0 %v4805
    %5780 = vmatpush1.bf16.msra.mxu0 %v4804
    %5781 = vmatprep.subr.bf16.mxu0 %v4798
    %5782 = vmatpush1.bf16.msra.mxu0 %v4797
    %5783 = vmatprep.subr.bf16.mxu0 %v4791
    %5784 = vmatpush1.bf16.msra.mxu0 %v4790
    %5785 = vmatprep.subr.bf16.mxu0 %v4784
    %5786 = vmatpush1.bf16.msra.mxu0 %v4783
    %5787 = vmatprep.subr.bf16.mxu0 %v4777
    %5788 = vmatpush1.bf16.msra.mxu0 %v4776
    %5789 = vmatprep.subr.bf16.mxu0 %v4882
    %5790 = vmatpush2.bf16.msra.mxu0 %v4881
    %5791 = vmatprep.subr.bf16.mxu0 %v4875
    %5792 = vmatpush2.bf16.msra.mxu0 %v4874
    %5793 = vmatprep.subr.bf16.mxu0 %v4868
    %5794 = vmatpush2.bf16.msra.mxu0 %v4867
    %5795 = vmatprep.subr.bf16.mxu0 %v4861
    %5796 = vmatpush2.bf16.msra.mxu0 %v4860
    %5797 = vmatprep.subr.bf16.mxu0 %v4854
    %5798 = vmatpush2.bf16.msra.mxu0 %v4853
    %5799 = vmatprep.subr.bf16.mxu0 %v4847
    %5800 = vmatpush2.bf16.msra.mxu0 %v4846
    %5801 = vmatprep.subr.bf16.mxu0 %v4840
    %5802 = vmatpush2.bf16.msra.mxu0 %v4839
    %5803 = vmatprep.subr.bf16.mxu0 %v4833
    %5804 = vmatpush2.bf16.msra.mxu0 %v4832
    %5805 = vmatprep.mubr.bf16.mxu0 %v2700
    %5806 = vmatmul.mubr.bf16.gmra.mxu0 %v2699
    %v5807 = vpop.f32.mrf.mxu0
    %v5808 = vadd.f32 %v5765, %v5807
    %v5809 = vpop.f32.mrf.mxu0
    %v5810 = vadd.f32 %v5767, %v5809
    %v5811 = vpop.f32.mrf.mxu0
    %v5812 = vadd.f32 %v5769, %v5811
    %v5813 = vpop.f32.mrf.mxu0
    %v5814 = vadd.f32 %v5771, %v5813
    %5815 = vdwg.mxu0
    %5816 = vmatprep.subr.bf16.mxu0 %v4938
    %5817 = vmatpush1.bf16.msra.mxu0 %v4937
    %5818 = vmatprep.subr.bf16.mxu0 %v4931
    %5819 = vmatpush1.bf16.msra.mxu0 %v4930
    %5820 = vmatprep.subr.bf16.mxu0 %v4924
    %5821 = vmatpush1.bf16.msra.mxu0 %v4923
    %5822 = vmatprep.subr.bf16.mxu0 %v4917
    %5823 = vmatpush1.bf16.msra.mxu0 %v4916
    %5824 = vmatprep.subr.bf16.mxu0 %v4910
    %5825 = vmatpush1.bf16.msra.mxu0 %v4909
    %5826 = vmatprep.subr.bf16.mxu0 %v4903
    %5827 = vmatpush1.bf16.msra.mxu0 %v4902
    %5828 = vmatprep.subr.bf16.mxu0 %v4896
    %5829 = vmatpush1.bf16.msra.mxu0 %v4895
    %5830 = vmatprep.subr.bf16.mxu0 %v4889
    %5831 = vmatpush1.bf16.msra.mxu0 %v4888
    %5832 = vmatprep.subr.bf16.mxu0 %v4994
    %5833 = vmatpush2.bf16.msra.mxu0 %v4993
    %5834 = vmatprep.subr.bf16.mxu0 %v4987
    %5835 = vmatpush2.bf16.msra.mxu0 %v4986
    %5836 = vmatprep.subr.bf16.mxu0 %v4980
    %5837 = vmatpush2.bf16.msra.mxu0 %v4979
    %5838 = vmatprep.subr.bf16.mxu0 %v4973
    %5839 = vmatpush2.bf16.msra.mxu0 %v4972
    %5840 = vmatprep.subr.bf16.mxu0 %v4966
    %5841 = vmatpush2.bf16.msra.mxu0 %v4965
    %5842 = vmatprep.subr.bf16.mxu0 %v4959
    %5843 = vmatpush2.bf16.msra.mxu0 %v4958
    %5844 = vmatprep.subr.bf16.mxu0 %v4952
    %5845 = vmatpush2.bf16.msra.mxu0 %v4951
    %5846 = vmatprep.subr.bf16.mxu0 %v4945
    %5847 = vmatpush2.bf16.msra.mxu0 %v4944
    %5848 = vmatprep.mubr.bf16.mxu0 %v2702
    %5849 = vmatmul.mubr.bf16.gmra.mxu0 %v2701
    %v5850 = vpop.f32.mrf.mxu0
    %v5851 = vadd.f32 %v5808, %v5850
    %v5852 = vpop.f32.mrf.mxu0
    %v5853 = vadd.f32 %v5810, %v5852
    %v5854 = vpop.f32.mrf.mxu0
    %v5855 = vadd.f32 %v5812, %v5854
    %v5856 = vpop.f32.mrf.mxu0
    %v5857 = vadd.f32 %v5814, %v5856
    %5858 = vdwg.mxu0
    %5859 = vmatprep.subr.bf16.mxu0 %v5050
    %5860 = vmatpush1.bf16.msra.mxu0 %v5049
    %5861 = vmatprep.subr.bf16.mxu0 %v5043
    %5862 = vmatpush1.bf16.msra.mxu0 %v5042
    %5863 = vmatprep.subr.bf16.mxu0 %v5036
    %5864 = vmatpush1.bf16.msra.mxu0 %v5035
    %5865 = vmatprep.subr.bf16.mxu0 %v5029
    %5866 = vmatpush1.bf16.msra.mxu0 %v5028
    %5867 = vmatprep.subr.bf16.mxu0 %v5022
    %5868 = vmatpush1.bf16.msra.mxu0 %v5021
    %5869 = vmatprep.subr.bf16.mxu0 %v5015
    %5870 = vmatpush1.bf16.msra.mxu0 %v5014
    %5871 = vmatprep.subr.bf16.mxu0 %v5008
    %5872 = vmatpush1.bf16.msra.mxu0 %v5007
    %5873 = vmatprep.subr.bf16.mxu0 %v5001
    %5874 = vmatpush1.bf16.msra.mxu0 %v5000
    %5875 = vmatprep.subr.bf16.mxu0 %v5106
    %5876 = vmatpush2.bf16.msra.mxu0 %v5105
    %5877 = vmatprep.subr.bf16.mxu0 %v5099
    %5878 = vmatpush2.bf16.msra.mxu0 %v5098
    %5879 = vmatprep.subr.bf16.mxu0 %v5092
    %5880 = vmatpush2.bf16.msra.mxu0 %v5091
    %5881 = vmatprep.subr.bf16.mxu0 %v5085
    %5882 = vmatpush2.bf16.msra.mxu0 %v5084
    %5883 = vmatprep.subr.bf16.mxu0 %v5078
    %5884 = vmatpush2.bf16.msra.mxu0 %v5077
    %5885 = vmatprep.subr.bf16.mxu0 %v5071
    %5886 = vmatpush2.bf16.msra.mxu0 %v5070
    %5887 = vmatprep.subr.bf16.mxu0 %v5064
    %5888 = vmatpush2.bf16.msra.mxu0 %v5063
    %5889 = vmatprep.subr.bf16.mxu0 %v5057
    %5890 = vmatpush2.bf16.msra.mxu0 %v5056
    %5891 = vmatprep.mubr.bf16.mxu0 %v2704
    %5892 = vmatmul.mubr.bf16.gmra.mxu0 %v2703
    %v5893 = vpop.f32.mrf.mxu0
    %v5894 = vadd.f32 %v5851, %v5893
    %v5895 = vpop.f32.mrf.mxu0
    %v5896 = vadd.f32 %v5853, %v5895
    %v5897 = vpop.f32.mrf.mxu0
    %v5898 = vadd.f32 %v5855, %v5897
    %v5899 = vpop.f32.mrf.mxu0
    %v5900 = vadd.f32 %v5857, %v5899
    %5901 = vdwg.mxu0
    %5902 = vmatprep.subr.bf16.mxu0 %v4716
    %5903 = vmatpush1.bf16.msra.mxu0 %v4715
    %5904 = vmatprep.subr.bf16.mxu0 %v4709
    %5905 = vmatpush1.bf16.msra.mxu0 %v4708
    %5906 = vmatprep.subr.bf16.mxu0 %v4702
    %5907 = vmatpush1.bf16.msra.mxu0 %v4701
    %5908 = vmatprep.subr.bf16.mxu0 %v4695
    %5909 = vmatpush1.bf16.msra.mxu0 %v4694
    %5910 = vmatprep.subr.bf16.mxu0 %v4688
    %5911 = vmatpush1.bf16.msra.mxu0 %v4687
    %5912 = vmatprep.subr.bf16.mxu0 %v4681
    %5913 = vmatpush1.bf16.msra.mxu0 %v4680
    %5914 = vmatprep.subr.bf16.mxu0 %v4674
    %5915 = vmatpush1.bf16.msra.mxu0 %v4673
    %5916 = vmatprep.subr.bf16.mxu0 %v4667
    %5917 = vmatpush1.bf16.msra.mxu0 %v4666
    %5918 = vmatprep.subr.bf16.mxu0 %v4772
    %5919 = vmatpush2.bf16.msra.mxu0 %v4771
    %5920 = vmatprep.subr.bf16.mxu0 %v4765
    %5921 = vmatpush2.bf16.msra.mxu0 %v4764
    %5922 = vmatprep.subr.bf16.mxu0 %v4758
    %5923 = vmatpush2.bf16.msra.mxu0 %v4757
    %5924 = vmatprep.subr.bf16.mxu0 %v4751
    %5925 = vmatpush2.bf16.msra.mxu0 %v4750
    %5926 = vmatprep.subr.bf16.mxu0 %v4744
    %5927 = vmatpush2.bf16.msra.mxu0 %v4743
    %5928 = vmatprep.subr.bf16.mxu0 %v4737
    %5929 = vmatpush2.bf16.msra.mxu0 %v4736
    %5930 = vmatprep.subr.bf16.mxu0 %v4730
    %5931 = vmatpush2.bf16.msra.mxu0 %v4729
    %5932 = vmatprep.subr.bf16.mxu0 %v4723
    %5933 = vmatpush2.bf16.msra.mxu0 %v4722
    %5934 = vmatprep.mubr.bf16.mxu0 %v2698
    %5935 = vmatmul.mubr.bf16.gmra.mxu0 %v2697
    %v5936 = vpop.f32.mrf.mxu0
    %v5937 = vadd.f32 %v3238, %v5936
    %v5938 = vpop.f32.mrf.mxu0
    %v5939 = vadd.f32 %v3242, %v5938
    %v5940 = vpop.f32.mrf.mxu0
    %v5941 = vadd.f32 %v3238, %v5940
    %v5942 = vpop.f32.mrf.mxu0
    %v5943 = vadd.f32 %v3242, %v5942
    %5944 = vdwg.mxu0
    %5945 = vmatprep.subr.bf16.mxu0 %v4828
    %5946 = vmatpush1.bf16.msra.mxu0 %v4827
    %5947 = vmatprep.subr.bf16.mxu0 %v4821
    %5948 = vmatpush1.bf16.msra.mxu0 %v4820
    %5949 = vmatprep.subr.bf16.mxu0 %v4814
    %5950 = vmatpush1.bf16.msra.mxu0 %v4813
    %5951 = vmatprep.subr.bf16.mxu0 %v4807
    %5952 = vmatpush1.bf16.msra.mxu0 %v4806
    %5953 = vmatprep.subr.bf16.mxu0 %v4800
    %5954 = vmatpush1.bf16.msra.mxu0 %v4799
    %5955 = vmatprep.subr.bf16.mxu0 %v4793
    %5956 = vmatpush1.bf16.msra.mxu0 %v4792
    %5957 = vmatprep.subr.bf16.mxu0 %v4786
    %5958 = vmatpush1.bf16.msra.mxu0 %v4785
    %5959 = vmatprep.subr.bf16.mxu0 %v4779
    %5960 = vmatpush1.bf16.msra.mxu0 %v4778
    %5961 = vmatprep.subr.bf16.mxu0 %v4884
    %5962 = vmatpush2.bf16.msra.mxu0 %v4883
    %5963 = vmatprep.subr.bf16.mxu0 %v4877
    %5964 = vmatpush2.bf16.msra.mxu0 %v4876
    %5965 = vmatprep.subr.bf16.mxu0 %v4870
    %5966 = vmatpush2.bf16.msra.mxu0 %v4869
    %5967 = vmatprep.subr.bf16.mxu0 %v4863
    %5968 = vmatpush2.bf16.msra.mxu0 %v4862
    %5969 = vmatprep.subr.bf16.mxu0 %v4856
    %5970 = vmatpush2.bf16.msra.mxu0 %v4855
    %5971 = vmatprep.subr.bf16.mxu0 %v4849
    %5972 = vmatpush2.bf16.msra.mxu0 %v4848
    %5973 = vmatprep.subr.bf16.mxu0 %v4842
    %5974 = vmatpush2.bf16.msra.mxu0 %v4841
    %5975 = vmatprep.subr.bf16.mxu0 %v4835
    %5976 = vmatpush2.bf16.msra.mxu0 %v4834
    %5977 = vmatprep.mubr.bf16.mxu0 %v2700
    %5978 = vmatmul.mubr.bf16.gmra.mxu0 %v2699
    %v5979 = vpop.f32.mrf.mxu0
    %v5980 = vadd.f32 %v5937, %v5979
    %v5981 = vpop.f32.mrf.mxu0
    %v5982 = vadd.f32 %v5939, %v5981
    %v5983 = vpop.f32.mrf.mxu0
    %v5984 = vadd.f32 %v5941, %v5983
    %v5985 = vpop.f32.mrf.mxu0
    %v5986 = vadd.f32 %v5943, %v5985
    %5987 = vdwg.mxu0
    %5988 = vmatprep.subr.bf16.mxu0 %v4940
    %5989 = vmatpush1.bf16.msra.mxu0 %v4939
    %5990 = vmatprep.subr.bf16.mxu0 %v4933
    %5991 = vmatpush1.bf16.msra.mxu0 %v4932
    %5992 = vmatprep.subr.bf16.mxu0 %v4926
    %5993 = vmatpush1.bf16.msra.mxu0 %v4925
    %5994 = vmatprep.subr.bf16.mxu0 %v4919
    %5995 = vmatpush1.bf16.msra.mxu0 %v4918
    %5996 = vmatprep.subr.bf16.mxu0 %v4912
    %5997 = vmatpush1.bf16.msra.mxu0 %v4911
    %5998 = vmatprep.subr.bf16.mxu0 %v4905
    %5999 = vmatpush1.bf16.msra.mxu0 %v4904
    %6000 = vmatprep.subr.bf16.mxu0 %v4898
    %6001 = vmatpush1.bf16.msra.mxu0 %v4897
    %6002 = vmatprep.subr.bf16.mxu0 %v4891
    %6003 = vmatpush1.bf16.msra.mxu0 %v4890
    %6004 = vmatprep.subr.bf16.mxu0 %v4996
    %6005 = vmatpush2.bf16.msra.mxu0 %v4995
    %6006 = vmatprep.subr.bf16.mxu0 %v4989
    %6007 = vmatpush2.bf16.msra.mxu0 %v4988
    %6008 = vmatprep.subr.bf16.mxu0 %v4982
    %6009 = vmatpush2.bf16.msra.mxu0 %v4981
    %6010 = vmatprep.subr.bf16.mxu0 %v4975
    %6011 = vmatpush2.bf16.msra.mxu0 %v4974
    %6012 = vmatprep.subr.bf16.mxu0 %v4968
    %6013 = vmatpush2.bf16.msra.mxu0 %v4967
    %6014 = vmatprep.subr.bf16.mxu0 %v4961
    %6015 = vmatpush2.bf16.msra.mxu0 %v4960
    %6016 = vmatprep.subr.bf16.mxu0 %v4954
    %6017 = vmatpush2.bf16.msra.mxu0 %v4953
    %6018 = vmatprep.subr.bf16.mxu0 %v4947
    %6019 = vmatpush2.bf16.msra.mxu0 %v4946
    %6020 = vmatprep.mubr.bf16.mxu0 %v2702
    %6021 = vmatmul.mubr.bf16.gmra.mxu0 %v2701
    %v6022 = vpop.f32.mrf.mxu0
    %v6023 = vadd.f32 %v5980, %v6022
    %v6024 = vpop.f32.mrf.mxu0
    %v6025 = vadd.f32 %v5982, %v6024
    %v6026 = vpop.f32.mrf.mxu0
    %v6027 = vadd.f32 %v5984, %v6026
    %v6028 = vpop.f32.mrf.mxu0
    %v6029 = vadd.f32 %v5986, %v6028
    %6030 = vdwg.mxu0
    %6031 = vmatprep.subr.bf16.mxu0 %v5052
    %6032 = vmatpush1.bf16.msra.mxu0 %v5051
    %6033 = vmatprep.subr.bf16.mxu0 %v5045
    %6034 = vmatpush1.bf16.msra.mxu0 %v5044
    %6035 = vmatprep.subr.bf16.mxu0 %v5038
    %6036 = vmatpush1.bf16.msra.mxu0 %v5037
    %6037 = vmatprep.subr.bf16.mxu0 %v5031
    %6038 = vmatpush1.bf16.msra.mxu0 %v5030
    %6039 = vmatprep.subr.bf16.mxu0 %v5024
    %6040 = vmatpush1.bf16.msra.mxu0 %v5023
    %6041 = vmatprep.subr.bf16.mxu0 %v5017
    %6042 = vmatpush1.bf16.msra.mxu0 %v5016
    %6043 = vmatprep.subr.bf16.mxu0 %v5010
    %6044 = vmatpush1.bf16.msra.mxu0 %v5009
    %6045 = vmatprep.subr.bf16.mxu0 %v5003
    %6046 = vmatpush1.bf16.msra.mxu0 %v5002
    %6047 = vmatprep.subr.bf16.mxu0 %v5108
    %6048 = vmatpush2.bf16.msra.mxu0 %v5107
    %6049 = vmatprep.subr.bf16.mxu0 %v5101
    %6050 = vmatpush2.bf16.msra.mxu0 %v5100
    %6051 = vmatprep.subr.bf16.mxu0 %v5094
    %6052 = vmatpush2.bf16.msra.mxu0 %v5093
    %6053 = vmatprep.subr.bf16.mxu0 %v5087
    %6054 = vmatpush2.bf16.msra.mxu0 %v5086
    %6055 = vmatprep.subr.bf16.mxu0 %v5080
    %6056 = vmatpush2.bf16.msra.mxu0 %v5079
    %6057 = vmatprep.subr.bf16.mxu0 %v5073
    %6058 = vmatpush2.bf16.msra.mxu0 %v5072
    %6059 = vmatprep.subr.bf16.mxu0 %v5066
    %6060 = vmatpush2.bf16.msra.mxu0 %v5065
    %6061 = vmatprep.subr.bf16.mxu0 %v5059
    %6062 = vmatpush2.bf16.msra.mxu0 %v5058
    %6063 = vmatprep.mubr.bf16.mxu0 %v2704
    %6064 = vmatmul.mubr.bf16.gmra.mxu0 %v2703
    %v6065 = vpop.f32.mrf.mxu0
    %v6066 = vadd.f32 %v6023, %v6065
    %v6067 = vpop.f32.mrf.mxu0
    %v6068 = vadd.f32 %v6025, %v6067
    %v6069 = vpop.f32.mrf.mxu0
    %v6070 = vadd.f32 %v6027, %v6069
    %v6071 = vpop.f32.mrf.mxu0
    %v6072 = vadd.f32 %v6029, %v6071
    %6073 = vdwg.mxu0
    %6074 = vmatprep.subr.bf16.mxu0 0
    %6075 = vmatpush1.bf16.msra.mxu0 %v4717
    %6076 = vmatprep.subr.bf16.mxu0 0
    %6077 = vmatpush1.bf16.msra.mxu0 %v4710
    %6078 = vmatprep.subr.bf16.mxu0 0
    %6079 = vmatpush1.bf16.msra.mxu0 %v4703
    %6080 = vmatprep.subr.bf16.mxu0 0
    %6081 = vmatpush1.bf16.msra.mxu0 %v4696
    %6082 = vmatprep.subr.bf16.mxu0 0
    %6083 = vmatpush1.bf16.msra.mxu0 %v4689
    %6084 = vmatprep.subr.bf16.mxu0 0
    %6085 = vmatpush1.bf16.msra.mxu0 %v4682
    %6086 = vmatprep.subr.bf16.mxu0 0
    %6087 = vmatpush1.bf16.msra.mxu0 %v4675
    %6088 = vmatprep.subr.bf16.mxu0 0
    %6089 = vmatpush1.bf16.msra.mxu0 %v4668
    %6090 = vmatprep.subr.bf16.mxu0 0
    %6091 = vmatpush2.bf16.msra.mxu0 %v4773
    %6092 = vmatprep.subr.bf16.mxu0 0
    %6093 = vmatpush2.bf16.msra.mxu0 %v4766
    %6094 = vmatprep.subr.bf16.mxu0 0
    %6095 = vmatpush2.bf16.msra.mxu0 %v4759
    %6096 = vmatprep.subr.bf16.mxu0 0
    %6097 = vmatpush2.bf16.msra.mxu0 %v4752
    %6098 = vmatprep.subr.bf16.mxu0 0
    %6099 = vmatpush2.bf16.msra.mxu0 %v4745
    %6100 = vmatprep.subr.bf16.mxu0 0
    %6101 = vmatpush2.bf16.msra.mxu0 %v4738
    %6102 = vmatprep.subr.bf16.mxu0 0
    %6103 = vmatpush2.bf16.msra.mxu0 %v4731
    %6104 = vmatprep.subr.bf16.mxu0 0
    %6105 = vmatpush2.bf16.msra.mxu0 %v4724
    %6106 = vmatprep.mubr.bf16.mxu0 %v2698
    %6107 = vmatmul.mubr.bf16.gmra.mxu0 %v2697
    %v6108 = vpop.f32.mrf.mxu0
    %v6109 = vadd.f32 %v3246, %v6108
    %v6110 = vpop.f32.mrf.mxu0
    %v6111 = vpop.f32.mrf.mxu0
    %v6112 = vadd.f32 %v3246, %v6111
    %v6113 = vpop.f32.mrf.mxu0
    %6114 = vdwg.mxu0
    %6115 = vmatprep.subr.bf16.mxu0 0
    %6116 = vmatpush1.bf16.msra.mxu0 %v4829
    %6117 = vmatprep.subr.bf16.mxu0 0
    %6118 = vmatpush1.bf16.msra.mxu0 %v4822
    %6119 = vmatprep.subr.bf16.mxu0 0
    %6120 = vmatpush1.bf16.msra.mxu0 %v4815
    %6121 = vmatprep.subr.bf16.mxu0 0
    %6122 = vmatpush1.bf16.msra.mxu0 %v4808
    %6123 = vmatprep.subr.bf16.mxu0 0
    %6124 = vmatpush1.bf16.msra.mxu0 %v4801
    %6125 = vmatprep.subr.bf16.mxu0 0
    %6126 = vmatpush1.bf16.msra.mxu0 %v4794
    %6127 = vmatprep.subr.bf16.mxu0 0
    %6128 = vmatpush1.bf16.msra.mxu0 %v4787
    %6129 = vmatprep.subr.bf16.mxu0 0
    %6130 = vmatpush1.bf16.msra.mxu0 %v4780
    %6131 = vmatprep.subr.bf16.mxu0 0
    %6132 = vmatpush2.bf16.msra.mxu0 %v4885
    %6133 = vmatprep.subr.bf16.mxu0 0
    %6134 = vmatpush2.bf16.msra.mxu0 %v4878
    %6135 = vmatprep.subr.bf16.mxu0 0
    %6136 = vmatpush2.bf16.msra.mxu0 %v4871
    %6137 = vmatprep.subr.bf16.mxu0 0
    %6138 = vmatpush2.bf16.msra.mxu0 %v4864
    %6139 = vmatprep.subr.bf16.mxu0 0
    %6140 = vmatpush2.bf16.msra.mxu0 %v4857
    %6141 = vmatprep.subr.bf16.mxu0 0
    %6142 = vmatpush2.bf16.msra.mxu0 %v4850
    %6143 = vmatprep.subr.bf16.mxu0 0
    %6144 = vmatpush2.bf16.msra.mxu0 %v4843
    %6145 = vmatprep.subr.bf16.mxu0 0
    %6146 = vmatpush2.bf16.msra.mxu0 %v4836
    %6147 = vmatprep.mubr.bf16.mxu0 %v2700
    %6148 = vmatmul.mubr.bf16.gmra.mxu0 %v2699
    %v6149 = vpop.f32.mrf.mxu0
    %v6150 = vadd.f32 %v6109, %v6149
    %v6151 = vpop.f32.mrf.mxu0
    %v6152 = vpop.f32.mrf.mxu0
    %v6153 = vadd.f32 %v6112, %v6152
    %v6154 = vpop.f32.mrf.mxu0
    %6155 = vdwg.mxu0
    %6156 = vmatprep.subr.bf16.mxu0 0
    %6157 = vmatpush1.bf16.msra.mxu0 %v4941
    %6158 = vmatprep.subr.bf16.mxu0 0
    %6159 = vmatpush1.bf16.msra.mxu0 %v4934
    %6160 = vmatprep.subr.bf16.mxu0 0
    %6161 = vmatpush1.bf16.msra.mxu0 %v4927
    %6162 = vmatprep.subr.bf16.mxu0 0
    %6163 = vmatpush1.bf16.msra.mxu0 %v4920
    %6164 = vmatprep.subr.bf16.mxu0 0
    %6165 = vmatpush1.bf16.msra.mxu0 %v4913
    %6166 = vmatprep.subr.bf16.mxu0 0
    %6167 = vmatpush1.bf16.msra.mxu0 %v4906
    %6168 = vmatprep.subr.bf16.mxu0 0
    %6169 = vmatpush1.bf16.msra.mxu0 %v4899
    %6170 = vmatprep.subr.bf16.mxu0 0
    %6171 = vmatpush1.bf16.msra.mxu0 %v4892
    %6172 = vmatprep.subr.bf16.mxu0 0
    %6173 = vmatpush2.bf16.msra.mxu0 %v4997
    %6174 = vmatprep.subr.bf16.mxu0 0
    %6175 = vmatpush2.bf16.msra.mxu0 %v4990
    %6176 = vmatprep.subr.bf16.mxu0 0
    %6177 = vmatpush2.bf16.msra.mxu0 %v4983
    %6178 = vmatprep.subr.bf16.mxu0 0
    %6179 = vmatpush2.bf16.msra.mxu0 %v4976
    %6180 = vmatprep.subr.bf16.mxu0 0
    %6181 = vmatpush2.bf16.msra.mxu0 %v4969
    %6182 = vmatprep.subr.bf16.mxu0 0
    %6183 = vmatpush2.bf16.msra.mxu0 %v4962
    %6184 = vmatprep.subr.bf16.mxu0 0
    %6185 = vmatpush2.bf16.msra.mxu0 %v4955
    %6186 = vmatprep.subr.bf16.mxu0 0
    %6187 = vmatpush2.bf16.msra.mxu0 %v4948
    %6188 = vmatprep.mubr.bf16.mxu0 %v2702
    %6189 = vmatmul.mubr.bf16.gmra.mxu0 %v2701
    %v6190 = vpop.f32.mrf.mxu0
    %v6191 = vadd.f32 %v6150, %v6190
    %v6192 = vpop.f32.mrf.mxu0
    %v6193 = vpop.f32.mrf.mxu0
    %v6194 = vadd.f32 %v6153, %v6193
    %v6195 = vpop.f32.mrf.mxu0
    %6196 = vdwg.mxu0
    %6197 = vmatprep.subr.bf16.mxu0 0
    %6198 = vmatpush1.bf16.msra.mxu0 %v5053
    %6199 = vmatprep.subr.bf16.mxu0 0
    %6200 = vmatpush1.bf16.msra.mxu0 %v5046
    %6201 = vmatprep.subr.bf16.mxu0 0
    %6202 = vmatpush1.bf16.msra.mxu0 %v5039
    %6203 = vmatprep.subr.bf16.mxu0 0
    %6204 = vmatpush1.bf16.msra.mxu0 %v5032
    %6205 = vmatprep.subr.bf16.mxu0 0
    %6206 = vmatpush1.bf16.msra.mxu0 %v5025
    %6207 = vmatprep.subr.bf16.mxu0 0
    %6208 = vmatpush1.bf16.msra.mxu0 %v5018
    %6209 = vmatprep.subr.bf16.mxu0 0
    %6210 = vmatpush1.bf16.msra.mxu0 %v5011
    %6211 = vmatprep.subr.bf16.mxu0 0
    %6212 = vmatpush1.bf16.msra.mxu0 %v5004
    %6213 = vmatprep.subr.bf16.mxu0 0
    %6214 = vmatpush2.bf16.msra.mxu0 %v5109
    %6215 = vmatprep.subr.bf16.mxu0 0
    %6216 = vmatpush2.bf16.msra.mxu0 %v5102
    %6217 = vmatprep.subr.bf16.mxu0 0
    %6218 = vmatpush2.bf16.msra.mxu0 %v5095
    %6219 = vmatprep.subr.bf16.mxu0 0
    %6220 = vmatpush2.bf16.msra.mxu0 %v5088
    %6221 = vmatprep.subr.bf16.mxu0 0
    %6222 = vmatpush2.bf16.msra.mxu0 %v5081
    %6223 = vmatprep.subr.bf16.mxu0 0
    %6224 = vmatpush2.bf16.msra.mxu0 %v5074
    %6225 = vmatprep.subr.bf16.mxu0 0
    %6226 = vmatpush2.bf16.msra.mxu0 %v5067
    %6227 = vmatprep.subr.bf16.mxu0 0
    %6228 = vmatpush2.bf16.msra.mxu0 %v5060
    %6229 = vmatprep.mubr.bf16.mxu0 %v2704
    %6230 = vmatmul.mubr.bf16.gmra.mxu0 %v2703
    %v6231 = vpop.f32.mrf.mxu0
    %v6232 = vadd.f32 %v6191, %v6231
    %v6233 = vpop.f32.mrf.mxu0
    %v6234 = vpop.f32.mrf.mxu0
    %v6235 = vadd.f32 %v6194, %v6234
    %v6236 = vpop.f32.mrf.mxu0
    %6237 = vdwg.mxu0
    %v6238 = vtanh.pop %v5722
    %v6239 = vtanh.pop %v5724
    %v6240 = vtanh.pop %v5894
    %v6241 = vtanh.pop %v5896
    %v6242 = vtanh.pop %v6066
    %v6243 = vtanh.pop %v6068
    %v6244 = vtanh.pop %v6232
    %v6245 = vtanh.pop %v5726
    %v6246 = vtanh.pop %v5728
    %v6247 = vtanh.pop %v5898
    %v6248 = vtanh.pop %v5900
    %v6249 = vtanh.pop %v6070
    %v6250 = vtanh.pop %v6072
    %v6251 = vtanh.pop %v6235
    %6252 = vst [vmem:[#allocation2] sm:$0xff] %v6238
    %6253 = vst [vmem:[#allocation2 + $0x8] sm:$0xff] %v6239
    %6254 = vst [vmem:[#allocation2 + $0x10] sm:$0xff] %v6240
    %6255 = vst [vmem:[#allocation2 + $0x18] sm:$0xff] %v6241
    %6256 = vst [vmem:[#allocation2 + $0x20] sm:$0xff] %v6242
    %6257 = vst [vmem:[#allocation2 + $0x28] sm:$0xff] %v6243
    %vm6258 = vcmask 130048
    %6259 = vst.msk [vmem:[#allocation2 + $0x30] sm:$0xff] %vm6258, %v6244
    %6260 = vst [vmem:[#allocation2 + $0x38] sm:$0xff] %v6245
    %6261 = vst [vmem:[#allocation2 + $0x40] sm:$0xff] %v6246
    %6262 = vst [vmem:[#allocation2 + $0x48] sm:$0xff] %v6247
    %6263 = vst [vmem:[#allocation2 + $0x50] sm:$0xff] %v6248
    %6264 = vst [vmem:[#allocation2 + $0x58] sm:$0xff] %v6249
    %6265 = vst [vmem:[#allocation2 + $0x60] sm:$0xff] %v6250
    %6266 = vst.msk [vmem:[#allocation2 + $0x68] sm:$0xff] %vm6258, %v6251
    // Predicated region
    $region38: #{tpu_custom_call.1} parent=1 // pred_check
      _
    $region39: #{tpu_custom_call.1} parent=1 // pred_check_branch
      %6268 = sbr.rel (0) target = $region41
    $region40: #{tpu_custom_call.1} parent=1 // pred_region
      %s6270 = ssub.s32 1792, 1792
      %6271 = vsyncadd [#allocation3], %s6270
      %s6272 = sshll.u32 [#allocation2], 4
      %s6273 = int_to_ptr.vmem [resolvable:$true] %s6272
      %6278 = dma.vmem_to_hbm [thread:$0]  %s6273, 1792, %s9, [#allocation3], 896, 896, 56
    $region41: #{tpu_custom_call.1} parent=1 // pred_fallthru
      _
    // Predicated region
    $region42: #{tpu_custom_call.1} parent=1 // pred_check
      _
    $region43: #{tpu_custom_call.1} parent=1 // pred_check_branch
      %6280 = sbr.rel (0) target = $region45
    $region44: #{tpu_custom_call.1} parent=1 // pred_region
      %6281 = dma.done [#allocation3], 1792
    $region45: #{tpu_custom_call.1} parent=1 // pred_fallthru
      _
    %6282 = vsyncpa [#allocation3], 1

</llo_original>
